<compile_context>
chip_gen: v7x
topology: tpu7x:2x2x1
jax: 0.10.0
libtpu: 0.0.40
codegen_flags: <defaults>
</compile_context>

<pallas_src>
import jax
import jax.numpy as jnp
from jax.experimental import pallas as pl
from jax.experimental.pallas import tpu as pltpu


def decomp_attn_kernel(p_ref, d_ref,
                       wg1a_ref, wg1b_ref, bg1_ref, bns_ref, bnb_ref,
                       wg2_ref, bg2_ref,
                       wh1a_ref, wh1b_ref, bh1_ref, wh2_ref, bh2_ref,
                       out_ref):
    f32 = jnp.float32
    pb = p_ref[...]                            # (BB, L_a, H)
    db = d_ref[...]                            # (BB, L_b, H)
    BB, L_a, H = pb.shape
    L_b = db.shape[1]

    # e[b,i,j] = <p[b,i,:], d[b,j,:]>  -- batched matmul on the MXU.
    e = jax.lax.dot_general(pb, db, (((2,), (2,)), ((0,), (0,))),
                            preferred_element_type=f32)          # (BB, L_a, L_b)

    # Row softmax (over j) and column softmax (over i), both computed directly
    # on e -- no transpose materialized. Denominator reciprocal goes to the EUP.
    m_r = jnp.max(e, axis=2, keepdims=True)
    u_r = jnp.exp(e - m_r)
    sm_row = u_r * pl.reciprocal(jnp.sum(u_r, axis=2, keepdims=True), approx=True)

    m_c = jnp.max(e, axis=1, keepdims=True)
    u_c = jnp.exp(e - m_c)
    sm_col = u_c * pl.reciprocal(jnp.sum(u_c, axis=1, keepdims=True), approx=True)

    # beta[b,i,h]  = sum_j sm_row[b,i,j] * d[b,j,h]
    beta = jax.lax.dot_general(sm_row, db, (((2,), (1,)), ((0,), (0,))),
                               preferred_element_type=f32)       # (BB, L_a, H)
    # alpha[b,j,h] = sum_i sm_col[b,i,j] * p[b,i,h]   (column softmax of e)
    alpha = jax.lax.dot_general(sm_col, pb, (((1,), (1,)), ((0,), (0,))),
                                preferred_element_type=f32)      # (BB, L_b, H)

    # ---- G MLP: single merged pass over all BB*(L_a+L_b) rows ---------------
    L_tot = L_a + L_b
    left = jnp.concatenate([pb, db], axis=1).reshape(BB * L_tot, H)
    right = jnp.concatenate([beta, alpha], axis=1).reshape(BB * L_tot, H)

    g = (jnp.dot(left, wg1a_ref[...], preferred_element_type=f32)
         + jnp.dot(right, wg1b_ref[...], preferred_element_type=f32)
         + bg1_ref[...])
    g = g * bns_ref[...] + bnb_ref[...]        # BatchNorm1d (eval, folded)
    g = jnp.maximum(g, 0.0)                    # ReLU; Dropout is identity
    g = jnp.dot(g, wg2_ref[...], preferred_element_type=f32) + bg2_ref[...]
    g = jnp.maximum(g, 0.0)                    # ReLU

    g = g.reshape(BB, L_tot, H)
    v1 = jnp.sum(g[:, :L_a, :], axis=1)        # (BB, H)
    v2 = jnp.sum(g[:, L_a:, :], axis=1)        # (BB, H)

    # ---- H MLP on cat(v1, v2): Linear(2H->H), ReLU, Linear(H->H), ReLU ------
    h = (jnp.dot(v1, wh1a_ref[...], preferred_element_type=f32)
         + jnp.dot(v2, wh1b_ref[...], preferred_element_type=f32)
         + bh1_ref[...])
    h = jnp.maximum(h, 0.0)
    h = jnp.dot(h, wh2_ref[...], preferred_element_type=f32) + bh2_ref[...]
    h = jnp.maximum(h, 0.0)                    # MLP ReLU; outer ReLU idempotent
    out_ref[...] = h                           # (BB, H) sublane-dense store


def decomposable_attention(p, d, params, *, block_b=8):
    B, L_a, H = p.shape
    Bd, L_b, Hd = d.shape
    assert Bd == B and Hd == H
    (wg1a, wg1b, bg1, bns, bnb, wg2, bg2,
     wh1a, wh1b, bh1, wh2, bh2) = params

    BB = block_b
    n_blocks = -(-B // BB)
    Bp = n_blocks * BB
    if Bp != B:                                # pad batch to a multiple of BB
        p = jnp.pad(p, ((0, Bp - B), (0, 0), (0, 0)))
        d = jnp.pad(d, ((0, Bp - B), (0, 0), (0, 0)))

    def full2d(shp):
        return pl.BlockSpec(shp, lambda b: (0, 0))

    in_specs = [
        pl.BlockSpec((BB, L_a, H), lambda b: (b, 0, 0)),   # p: BB batches/step
        pl.BlockSpec((BB, L_b, H), lambda b: (b, 0, 0)),   # d: BB batches/step
        full2d((H, H)), full2d((H, H)), full2d((1, H)),    # G first Linear (split) + bias
        full2d((1, H)), full2d((1, H)),                    # BN scale / shift
        full2d((H, H)), full2d((1, H)),                    # G second Linear
        full2d((H, H)), full2d((H, H)), full2d((1, H)),    # H first Linear (split) + bias
        full2d((H, H)), full2d((1, H)),                    # H second Linear
    ]

    out = pl.pallas_call(
        decomp_attn_kernel,
        out_shape=jax.ShapeDtypeStruct((Bp, H), jnp.float32),
        grid_spec=pltpu.PrefetchScalarGridSpec(
            num_scalar_prefetch=0,
            grid=(n_blocks,),
            in_specs=in_specs,
            out_specs=pl.BlockSpec((BB, H), lambda b: (b, 0)),
        ),
        compiler_params=pltpu.CompilerParams(
            dimension_semantics=("parallel",)),
    )(p, d, wg1a, wg1b, bg1, bns, bnb, wg2, bg2,
      wh1a, wh1b, bh1, wh2, bh2)
    return out[:B]


def reference(p, d, params):
    """Pure-JAX reference of the PyTorch forward (eval mode, f32)."""
    (wg1a, wg1b, bg1, bns, bnb, wg2, bg2,
     wh1a, wh1b, bh1, wh2, bh2) = params
    e = jnp.einsum('bih,bjh->bij', p, d)                       # (B, L_a, L_b)
    beta = jnp.einsum('bij,bjh->bih', jax.nn.softmax(e, axis=2), d)
    eT = jnp.swapaxes(e, 1, 2)                                 # (B, L_b, L_a)
    alpha = jnp.einsum('bja,bah->bjh', jax.nn.softmax(eT, axis=2), p)

    wg1 = jnp.concatenate([wg1a, wg1b], axis=0)                # (2H, H)
    wh1 = jnp.concatenate([wh1a, wh1b], axis=0)

    def G(x):
        h = x @ wg1 + bg1
        h = h * bns + bnb
        h = jax.nn.relu(h)
        h = h @ wg2 + bg2
        return jax.nn.relu(h)

    v1 = jnp.sum(G(jnp.concatenate([p, beta], axis=2)), axis=1)
    v2 = jnp.sum(G(jnp.concatenate([d, alpha], axis=2)), axis=1)

    h = jnp.concatenate([v1, v2], axis=1) @ wh1 + bh1
    h = jax.nn.relu(h)
    h = h @ wh2 + bh2
    return jax.nn.relu(jax.nn.relu(h))


if __name__ == "__main__":
    B, L_a, L_b, H = 16, 8, 16, 32   # BB=8 -> 2 grid steps (both v7x TCs busy)

    key = jax.random.PRNGKey(0)
    keys = jax.random.split(key, 16)

    def w(k, shape, scale=0.1):
        return (scale * jax.random.normal(k, shape)).astype(jnp.float32)

    p = w(keys[0], (B, L_a, H), 1.0)
    d = w(keys[1], (B, L_b, H), 1.0)

    # G MLP: Linear(2H->H) split into two (H,H) halves, BN (folded), Linear(H->H)
    wg1a = w(keys[2], (H, H)); wg1b = w(keys[3], (H, H)); bg1 = w(keys[4], (1, H))
    gamma = 1.0 + w(keys[5], (1, H))
    beta_bn = w(keys[6], (1, H))
    rmean = w(keys[7], (1, H))
    rvar = 1.0 + 0.1 * jnp.abs(jax.random.normal(keys[8], (1, H)))
    eps = 1e-5
    bns = (gamma / jnp.sqrt(rvar + eps)).astype(jnp.float32)
    bnb = (beta_bn - rmean * bns).astype(jnp.float32)
    wg2 = w(keys[9], (H, H)); bg2 = w(keys[10], (1, H))

    # H MLP: Linear(2H->H) split, Linear(H->H) (no BN)
    wh1a = w(keys[11], (H, H)); wh1b = w(keys[12], (H, H)); bh1 = w(keys[13], (1, H))
    wh2 = w(keys[14], (H, H)); bh2 = w(keys[15], (1, H))

    params = (wg1a, wg1b, bg1, bns, bnb, wg2, bg2,
              wh1a, wh1b, bh1, wh2, bh2)

    out = decomposable_attention(p, d, params, block_b=8)
    out = jax.block_until_ready(out)

    ref = reference(p, d, params)
    assert out.shape == (B, H), out.shape
    # Tolerance covers f32 (vs. PyTorch .double()) and the EUP approx-reciprocal
    # used for the softmax denominators.
    assert jnp.allclose(out, ref, rtol=5e-3, atol=5e-3), (
        jnp.max(jnp.abs(out - ref)))
    print("KERNEL_OK")
</pallas_src>

<mosaic_0001>
module attributes {stable_mosaic.version = 11 : i64} {
  func.func @decomp_attn_kernel(%arg0: i32, %arg1: memref<8x8x32xf32, #tpu.memory_space<vmem>>, %arg2: memref<8x16x32xf32, #tpu.memory_space<vmem>>, %arg3: memref<32x32xf32, #tpu.memory_space<vmem>>, %arg4: memref<32x32xf32, #tpu.memory_space<vmem>>, %arg5: memref<1x32xf32, #tpu.memory_space<vmem>>, %arg6: memref<1x32xf32, #tpu.memory_space<vmem>>, %arg7: memref<1x32xf32, #tpu.memory_space<vmem>>, %arg8: memref<32x32xf32, #tpu.memory_space<vmem>>, %arg9: memref<1x32xf32, #tpu.memory_space<vmem>>, %arg10: memref<32x32xf32, #tpu.memory_space<vmem>>, %arg11: memref<32x32xf32, #tpu.memory_space<vmem>>, %arg12: memref<1x32xf32, #tpu.memory_space<vmem>>, %arg13: memref<32x32xf32, #tpu.memory_space<vmem>>, %arg14: memref<1x32xf32, #tpu.memory_space<vmem>>, %arg15: memref<8x32xf32, #tpu.memory_space<vmem>>) attributes {dimension_semantics = [#tpu.dimension_semantics<parallel>], iteration_bounds = array<i64: 2>, scalar_prefetch = 0 : i64, scratch_operands = 0 : i64, tpu.core_type = #tpu.core_type<tc>, window_params = [{transform_indices = @transform_0, window_bounds = array<i64: 8, 8, 32>}, {transform_indices = @transform_1, window_bounds = array<i64: 8, 16, 32>}, {pipeline_mode = #tpu.pipeline_mode<synchronous>, transform_indices = @transform_2, window_bounds = array<i64: 32, 32>}, {pipeline_mode = #tpu.pipeline_mode<synchronous>, transform_indices = @transform_3, window_bounds = array<i64: 32, 32>}, {pipeline_mode = #tpu.pipeline_mode<synchronous>, transform_indices = @transform_4, window_bounds = array<i64: 1, 32>}, {pipeline_mode = #tpu.pipeline_mode<synchronous>, transform_indices = @transform_5, window_bounds = array<i64: 1, 32>}, {pipeline_mode = #tpu.pipeline_mode<synchronous>, transform_indices = @transform_6, window_bounds = array<i64: 1, 32>}, {pipeline_mode = #tpu.pipeline_mode<synchronous>, transform_indices = @transform_7, window_bounds = array<i64: 32, 32>}, {pipeline_mode = #tpu.pipeline_mode<synchronous>, transform_indices = @transform_8, window_bounds = array<i64: 1, 32>}, {pipeline_mode = #tpu.pipeline_mode<synchronous>, transform_indices = @transform_9, window_bounds = array<i64: 32, 32>}, {pipeline_mode = #tpu.pipeline_mode<synchronous>, transform_indices = @transform_10, window_bounds = array<i64: 32, 32>}, {pipeline_mode = #tpu.pipeline_mode<synchronous>, transform_indices = @transform_11, window_bounds = array<i64: 1, 32>}, {pipeline_mode = #tpu.pipeline_mode<synchronous>, transform_indices = @transform_12, window_bounds = array<i64: 32, 32>}, {pipeline_mode = #tpu.pipeline_mode<synchronous>, transform_indices = @transform_13, window_bounds = array<i64: 1, 32>}, {transform_indices = @transform_14, window_bounds = array<i64: 8, 32>}]} {
    %c0 = arith.constant 0 : index
    %c0_0 = arith.constant 0 : index
    %c0_1 = arith.constant 0 : index
    %0 = vector.load %arg1[%c0, %c0_0, %c0_1] : memref<8x8x32xf32, #tpu.memory_space<vmem>>, vector<8x8x32xf32>
    %c0_2 = arith.constant 0 : index
    %c0_3 = arith.constant 0 : index
    %c0_4 = arith.constant 0 : index
    %1 = vector.load %arg2[%c0_2, %c0_3, %c0_4] : memref<8x16x32xf32, #tpu.memory_space<vmem>>, vector<8x16x32xf32>
    %cst = arith.constant dense<0.000000e+00> : vector<8x8x16xf32>
    %2 = tpu.matmul %0, %1, %cst {dimension_numbers = #tpu.dot_dimension_numbers<[2], [2], [1], [1], [0, 0, 0, 1, 1, 1], [0], [0]>} : vector<8x8x32xf32>, vector<8x16x32xf32>, vector<8x8x16xf32> -> vector<8x8x16xf32>
    %cst_5 = arith.constant dense<0xFF800000> : vector<8x8xf32>
    %3 = vector.multi_reduction <maximumf>, %2, %cst_5 [2] : vector<8x8x16xf32> to vector<8x8xf32>
    %4 = vector.shape_cast %3 : vector<8x8xf32> to vector<8x8x1xf32>
    %5 = vector.broadcast %4 : vector<8x8x1xf32> to vector<8x8x16xf32>
    %6 = arith.subf %2, %5 : vector<8x8x16xf32>
    %7 = math.exp %6 : vector<8x8x16xf32>
    %cst_6 = arith.constant dense<0.000000e+00> : vector<8x8xf32>
    %8 = vector.multi_reduction <add>, %7, %cst_6 [2] : vector<8x8x16xf32> to vector<8x8xf32>
    %9 = vector.shape_cast %8 : vector<8x8xf32> to vector<8x8x1xf32>
    %10 = tpu.reciprocal %9 {approx = true} : vector<8x8x1xf32> -> vector<8x8x1xf32>
    %11 = vector.broadcast %10 : vector<8x8x1xf32> to vector<8x8x16xf32>
    %12 = arith.mulf %7, %11 : vector<8x8x16xf32>
    %cst_7 = arith.constant dense<0xFF800000> : vector<8x16xf32>
    %13 = vector.multi_reduction <maximumf>, %2, %cst_7 [1] : vector<8x8x16xf32> to vector<8x16xf32>
    %14 = vector.shape_cast %13 : vector<8x16xf32> to vector<8x1x16xf32>
    %15 = vector.broadcast %14 : vector<8x1x16xf32> to vector<8x8x16xf32>
    %16 = arith.subf %2, %15 : vector<8x8x16xf32>
    %17 = math.exp %16 : vector<8x8x16xf32>
    %cst_8 = arith.constant dense<0.000000e+00> : vector<8x16xf32>
    %18 = vector.multi_reduction <add>, %17, %cst_8 [1] : vector<8x8x16xf32> to vector<8x16xf32>
    %19 = vector.shape_cast %18 : vector<8x16xf32> to vector<8x1x16xf32>
    %20 = tpu.reciprocal %19 {approx = true} : vector<8x1x16xf32> -> vector<8x1x16xf32>
    %21 = vector.broadcast %20 : vector<8x1x16xf32> to vector<8x8x16xf32>
    %22 = arith.mulf %17, %21 : vector<8x8x16xf32>
    %cst_9 = arith.constant dense<0.000000e+00> : vector<8x8x32xf32>
    %23 = tpu.matmul %12, %1, %cst_9 {dimension_numbers = #tpu.dot_dimension_numbers<[2], [1], [1], [2], [0, 0, 0, 1, 1, 2], [0], [0]>} : vector<8x8x16xf32>, vector<8x16x32xf32>, vector<8x8x32xf32> -> vector<8x8x32xf32>
    %cst_10 = arith.constant dense<0.000000e+00> : vector<8x16x32xf32>
    %24 = tpu.matmul %22, %0, %cst_10 {dimension_numbers = #tpu.dot_dimension_numbers<[1], [1], [2], [2], [0, 0, 0, 2, 1, 2], [0], [0]>} : vector<8x8x16xf32>, vector<8x8x32xf32>, vector<8x16x32xf32> -> vector<8x16x32xf32>
    %25 = tpu.concatenate %0, %1 in 1 : vector<8x8x32xf32>, vector<8x16x32xf32> -> vector<8x24x32xf32>
    %26 = vector.shape_cast %25 : vector<8x24x32xf32> to vector<192x32xf32>
    %27 = tpu.concatenate %23, %24 in 1 : vector<8x8x32xf32>, vector<8x16x32xf32> -> vector<8x24x32xf32>
    %28 = vector.shape_cast %27 : vector<8x24x32xf32> to vector<192x32xf32>
    %c0_11 = arith.constant 0 : index
    %c0_12 = arith.constant 0 : index
    %29 = vector.load %arg3[%c0_11, %c0_12] : memref<32x32xf32, #tpu.memory_space<vmem>>, vector<32x32xf32>
    %cst_13 = arith.constant dense<0.000000e+00> : vector<192x32xf32>
    %30 = tpu.matmul %26, %29, %cst_13 {dimension_numbers = #tpu.dot_dimension_numbers<[1], [0], [0], [1], [0, 0, 1, 1], [], []>} : vector<192x32xf32>, vector<32x32xf32>, vector<192x32xf32> -> vector<192x32xf32>
    %c0_14 = arith.constant 0 : index
    %c0_15 = arith.constant 0 : index
    %31 = vector.load %arg4[%c0_14, %c0_15] : memref<32x32xf32, #tpu.memory_space<vmem>>, vector<32x32xf32>
    %cst_16 = arith.constant dense<0.000000e+00> : vector<192x32xf32>
    %32 = tpu.matmul %28, %31, %cst_16 {dimension_numbers = #tpu.dot_dimension_numbers<[1], [0], [0], [1], [0, 0, 1, 1], [], []>} : vector<192x32xf32>, vector<32x32xf32>, vector<192x32xf32> -> vector<192x32xf32>
    %33 = arith.addf %30, %32 : vector<192x32xf32>
    %c0_17 = arith.constant 0 : index
    %c0_18 = arith.constant 0 : index
    %34 = vector.load %arg5[%c0_17, %c0_18] : memref<1x32xf32, #tpu.memory_space<vmem>>, vector<1x32xf32>
    %35 = vector.broadcast %34 : vector<1x32xf32> to vector<192x32xf32>
    %36 = arith.addf %33, %35 : vector<192x32xf32>
    %c0_19 = arith.constant 0 : index
    %c0_20 = arith.constant 0 : index
    %37 = vector.load %arg6[%c0_19, %c0_20] : memref<1x32xf32, #tpu.memory_space<vmem>>, vector<1x32xf32>
    %38 = vector.broadcast %37 : vector<1x32xf32> to vector<192x32xf32>
    %39 = arith.mulf %36, %38 : vector<192x32xf32>
    %c0_21 = arith.constant 0 : index
    %c0_22 = arith.constant 0 : index
    %40 = vector.load %arg7[%c0_21, %c0_22] : memref<1x32xf32, #tpu.memory_space<vmem>>, vector<1x32xf32>
    %41 = vector.broadcast %40 : vector<1x32xf32> to vector<192x32xf32>
    %42 = arith.addf %39, %41 : vector<192x32xf32>
    %cst_23 = arith.constant 0.000000e+00 : f32
    %43 = vector.broadcast %cst_23 : f32 to vector<192x32xf32>
    %44 = arith.maximumf %42, %43 : vector<192x32xf32>
    %c0_24 = arith.constant 0 : index
    %c0_25 = arith.constant 0 : index
    %45 = vector.load %arg8[%c0_24, %c0_25] : memref<32x32xf32, #tpu.memory_space<vmem>>, vector<32x32xf32>
    %cst_26 = arith.constant dense<0.000000e+00> : vector<192x32xf32>
    %46 = tpu.matmul %44, %45, %cst_26 {dimension_numbers = #tpu.dot_dimension_numbers<[1], [0], [0], [1], [0, 0, 1, 1], [], []>} : vector<192x32xf32>, vector<32x32xf32>, vector<192x32xf32> -> vector<192x32xf32>
    %c0_27 = arith.constant 0 : index
    %c0_28 = arith.constant 0 : index
    %47 = vector.load %arg9[%c0_27, %c0_28] : memref<1x32xf32, #tpu.memory_space<vmem>>, vector<1x32xf32>
    %48 = vector.broadcast %47 : vector<1x32xf32> to vector<192x32xf32>
    %49 = arith.addf %46, %48 : vector<192x32xf32>
    %cst_29 = arith.constant 0.000000e+00 : f32
    %50 = vector.broadcast %cst_29 : f32 to vector<192x32xf32>
    %51 = arith.maximumf %49, %50 : vector<192x32xf32>
    %52 = vector.shape_cast %51 : vector<192x32xf32> to vector<8x24x32xf32>
    %53 = vector.extract_strided_slice %52 {offsets = [0, 0, 0], sizes = [8, 8, 32], strides = [1, 1, 1]} : vector<8x24x32xf32> to vector<8x8x32xf32>
    %cst_30 = arith.constant dense<0.000000e+00> : vector<8x32xf32>
    %54 = vector.multi_reduction <add>, %53, %cst_30 [1] : vector<8x8x32xf32> to vector<8x32xf32>
    %55 = vector.extract_strided_slice %52 {offsets = [0, 8, 0], sizes = [8, 16, 32], strides = [1, 1, 1]} : vector<8x24x32xf32> to vector<8x16x32xf32>
    %cst_31 = arith.constant dense<0.000000e+00> : vector<8x32xf32>
    %56 = vector.multi_reduction <add>, %55, %cst_31 [1] : vector<8x16x32xf32> to vector<8x32xf32>
    %c0_32 = arith.constant 0 : index
    %c0_33 = arith.constant 0 : index
    %57 = vector.load %arg10[%c0_32, %c0_33] : memref<32x32xf32, #tpu.memory_space<vmem>>, vector<32x32xf32>
    %cst_34 = arith.constant dense<0.000000e+00> : vector<8x32xf32>
    %58 = tpu.matmul %54, %57, %cst_34 {dimension_numbers = #tpu.dot_dimension_numbers<[1], [0], [0], [1], [0, 0, 1, 1], [], []>} : vector<8x32xf32>, vector<32x32xf32>, vector<8x32xf32> -> vector<8x32xf32>
    %c0_35 = arith.constant 0 : index
    %c0_36 = arith.constant 0 : index
    %59 = vector.load %arg11[%c0_35, %c0_36] : memref<32x32xf32, #tpu.memory_space<vmem>>, vector<32x32xf32>
    %cst_37 = arith.constant dense<0.000000e+00> : vector<8x32xf32>
    %60 = tpu.matmul %56, %59, %cst_37 {dimension_numbers = #tpu.dot_dimension_numbers<[1], [0], [0], [1], [0, 0, 1, 1], [], []>} : vector<8x32xf32>, vector<32x32xf32>, vector<8x32xf32> -> vector<8x32xf32>
    %61 = arith.addf %58, %60 : vector<8x32xf32>
    %c0_38 = arith.constant 0 : index
    %c0_39 = arith.constant 0 : index
    %62 = vector.load %arg12[%c0_38, %c0_39] : memref<1x32xf32, #tpu.memory_space<vmem>>, vector<1x32xf32>
    %63 = vector.broadcast %62 : vector<1x32xf32> to vector<8x32xf32>
    %64 = arith.addf %61, %63 : vector<8x32xf32>
    %cst_40 = arith.constant 0.000000e+00 : f32
    %65 = vector.broadcast %cst_40 : f32 to vector<8x32xf32>
    %66 = arith.maximumf %64, %65 : vector<8x32xf32>
    %c0_41 = arith.constant 0 : index
    %c0_42 = arith.constant 0 : index
    %67 = vector.load %arg13[%c0_41, %c0_42] : memref<32x32xf32, #tpu.memory_space<vmem>>, vector<32x32xf32>
    %cst_43 = arith.constant dense<0.000000e+00> : vector<8x32xf32>
    %68 = tpu.matmul %66, %67, %cst_43 {dimension_numbers = #tpu.dot_dimension_numbers<[1], [0], [0], [1], [0, 0, 1, 1], [], []>} : vector<8x32xf32>, vector<32x32xf32>, vector<8x32xf32> -> vector<8x32xf32>
    %c0_44 = arith.constant 0 : index
    %c0_45 = arith.constant 0 : index
    %69 = vector.load %arg14[%c0_44, %c0_45] : memref<1x32xf32, #tpu.memory_space<vmem>>, vector<1x32xf32>
    %70 = vector.broadcast %69 : vector<1x32xf32> to vector<8x32xf32>
    %71 = arith.addf %68, %70 : vector<8x32xf32>
    %cst_46 = arith.constant 0.000000e+00 : f32
    %72 = vector.broadcast %cst_46 : f32 to vector<8x32xf32>
    %73 = arith.maximumf %71, %72 : vector<8x32xf32>
    %c0_47 = arith.constant 0 : index
    %c0_48 = arith.constant 0 : index
    %74 = vector.load %arg15[%c0_47, %c0_48] : memref<8x32xf32, #tpu.memory_space<vmem>>, vector<8x32xf32>
    tpu.vector_store %arg15[%c0_47, %c0_48], %73 {strides = array<i32>} : memref<8x32xf32, #tpu.memory_space<vmem>>, vector<8x32xf32>,
    return
  }
  func.func @transform_0(%arg0: i32) -> (i32, i32, i32) {
    %c0_i32 = arith.constant 0 : i32
    %c0_i32_0 = arith.constant 0 : i32
    %c0_i32_1 = arith.constant 0 : i32
    return %arg0, %c0_i32, %c0_i32_0 : i32, i32, i32
  }
  func.func @transform_1(%arg0: i32) -> (i32, i32, i32) {
    %c0_i32 = arith.constant 0 : i32
    %c0_i32_0 = arith.constant 0 : i32
    %c0_i32_1 = arith.constant 0 : i32
    return %arg0, %c0_i32, %c0_i32_0 : i32, i32, i32
  }
  func.func @transform_2(%arg0: i32) -> (i32, i32) {
    %c0_i32 = arith.constant 0 : i32
    %c0_i32_0 = arith.constant 0 : i32
    %c0_i32_1 = arith.constant 0 : i32
    return %c0_i32, %c0_i32_0 : i32, i32
  }
  func.func @transform_3(%arg0: i32) -> (i32, i32) {
    %c0_i32 = arith.constant 0 : i32
    %c0_i32_0 = arith.constant 0 : i32
    %c0_i32_1 = arith.constant 0 : i32
    return %c0_i32, %c0_i32_0 : i32, i32
  }
  func.func @transform_4(%arg0: i32) -> (i32, i32) {
    %c0_i32 = arith.constant 0 : i32
    %c0_i32_0 = arith.constant 0 : i32
    %c0_i32_1 = arith.constant 0 : i32
    return %c0_i32, %c0_i32_0 : i32, i32
  }
  func.func @transform_5(%arg0: i32) -> (i32, i32) {
    %c0_i32 = arith.constant 0 : i32
    %c0_i32_0 = arith.constant 0 : i32
    %c0_i32_1 = arith.constant 0 : i32
    return %c0_i32, %c0_i32_0 : i32, i32
  }
  func.func @transform_6(%arg0: i32) -> (i32, i32) {
    %c0_i32 = arith.constant 0 : i32
    %c0_i32_0 = arith.constant 0 : i32
    %c0_i32_1 = arith.constant 0 : i32
    return %c0_i32, %c0_i32_0 : i32, i32
  }
  func.func @transform_7(%arg0: i32) -> (i32, i32) {
    %c0_i32 = arith.constant 0 : i32
    %c0_i32_0 = arith.constant 0 : i32
    %c0_i32_1 = arith.constant 0 : i32
    return %c0_i32, %c0_i32_0 : i32, i32
  }
  func.func @transform_8(%arg0: i32) -> (i32, i32) {
    %c0_i32 = arith.constant 0 : i32
    %c0_i32_0 = arith.constant 0 : i32
    %c0_i32_1 = arith.constant 0 : i32
    return %c0_i32, %c0_i32_0 : i32, i32
  }
  func.func @transform_9(%arg0: i32) -> (i32, i32) {
    %c0_i32 = arith.constant 0 : i32
    %c0_i32_0 = arith.constant 0 : i32
    %c0_i32_1 = arith.constant 0 : i32
    return %c0_i32, %c0_i32_0 : i32, i32
  }
  func.func @transform_10(%arg0: i32) -> (i32, i32) {
    %c0_i32 = arith.constant 0 : i32
    %c0_i32_0 = arith.constant 0 : i32
    %c0_i32_1 = arith.constant 0 : i32
    return %c0_i32, %c0_i32_0 : i32, i32
  }
  func.func @transform_11(%arg0: i32) -> (i32, i32) {
    %c0_i32 = arith.constant 0 : i32
    %c0_i32_0 = arith.constant 0 : i32
    %c0_i32_1 = arith.constant 0 : i32
    return %c0_i32, %c0_i32_0 : i32, i32
  }
  func.func @transform_12(%arg0: i32) -> (i32, i32) {
    %c0_i32 = arith.constant 0 : i32
    %c0_i32_0 = arith.constant 0 : i32
    %c0_i32_1 = arith.constant 0 : i32
    return %c0_i32, %c0_i32_0 : i32, i32
  }
  func.func @transform_13(%arg0: i32) -> (i32, i32) {
    %c0_i32 = arith.constant 0 : i32
    %c0_i32_0 = arith.constant 0 : i32
    %c0_i32_1 = arith.constant 0 : i32
    return %c0_i32, %c0_i32_0 : i32, i32
  }
  func.func @transform_14(%arg0: i32) -> (i32, i32) {
    %c0_i32 = arith.constant 0 : i32
    %c0_i32_0 = arith.constant 0 : i32
    return %arg0, %c0_i32 : i32, i32
  }
}

</mosaic_0001>

<llo_original>
// kernel: tpu_custom_call.1
$region0: #{tpu_custom_call.1}
  #allocation0 [shape = 'u32[]', space=smem, size = 0x4, offset = 0x4, fixed_abs, tag = 'smem constant byte address 0x4 - core index']
  #allocation1 [shape = 'u32[144,128]{1,0:T(1,128)}', space=vmem, size = 0x12000, scoped, tag = 'internal scratch']
  %s0 = inlined_call_operand.hbm [shape: f32[16,8,32], index: 0, kind: input, shape index: {}]
  %s1 = inlined_call_operand.hbm [shape: f32[16,16,32], index: 1, kind: input, shape index: {}]
  %s2 = inlined_call_operand.hbm [shape: f32[32,32], index: 2, kind: input, shape index: {}]
  %s3 = inlined_call_operand.hbm [shape: f32[32,32], index: 3, kind: input, shape index: {}]
  %s4 = inlined_call_operand.vmem [shape: f32[1,32], index: 4, kind: input, shape index: {}]
  %s5 = inlined_call_operand.vmem [shape: f32[1,32], index: 5, kind: input, shape index: {}]
  %s6 = inlined_call_operand.hbm [shape: f32[1,32], index: 6, kind: input, shape index: {}]
  %s7 = inlined_call_operand.hbm [shape: f32[32,32], index: 7, kind: input, shape index: {}]
  %s8 = inlined_call_operand.hbm [shape: f32[1,32], index: 8, kind: input, shape index: {}]
  %s9 = inlined_call_operand.vmem [shape: f32[32,32], index: 9, kind: input, shape index: {}]
  %s10 = inlined_call_operand.hbm [shape: f32[32,32], index: 10, kind: input, shape index: {}]
  %s11 = inlined_call_operand.vmem [shape: f32[1,32], index: 11, kind: input, shape index: {}]
  %s12 = inlined_call_operand.hbm [shape: f32[32,32], index: 12, kind: input, shape index: {}]
  %s13 = inlined_call_operand.vmem [shape: f32[1,32], index: 13, kind: input, shape index: {}]
  %s14 = inlined_call_operand.hbm [shape: f32[16,32], index: 14, kind: output, shape index: {}]
  %s15 = sld [smem:[#allocation0]]
  $region125: #{tpu_custom_call.1} parent=0
    _
  %s17 = ssub.s32 1, %s15
  %s18 = scalar_select 0, %s17, %s15
  $region1: #{tpu_custom_call.1} parent=0
    #allocation2 [shape = 'u8[65536]{0}', space=vmem, size = 0x10000, scoped, tag = 'input window, operand 0']
    #allocation3 [shape = 's32[2]{0}', space=sflag, size = 0x8, scoped, tag = 'scoped memory for tpu_custom_call.1']
    #allocation4 [shape = 's32[2]{0}', space=sflag, size = 0x8, scoped, tag = 'scoped memory for tpu_custom_call.1']
    #allocation5 [shape = 'u8[131072]{0}', space=vmem, size = 0x20000, scoped, tag = 'input window, operand 1']
    #allocation6 [shape = 's32[2]{0}', space=sflag, size = 0x8, scoped, tag = 'scoped memory for tpu_custom_call.1']
    #allocation7 [shape = 'u8[16384]{0}', space=vmem, size = 0x4000, scoped, tag = 'input window, operand 2, single buffered']
    #allocation8 [shape = 'u8[16384]{0}', space=vmem, size = 0x4000, scoped, tag = 'input window, operand 3, single buffered']
    #allocation9 [shape = 's32[1]{0}', space=sflag, size = 0x4, scoped, tag = 'scoped memory for tpu_custom_call.1']
    #allocation10 [shape = 'u8[512]{0}', space=vmem, size = 0x400, scoped, tag = 'input window, operand 6, single buffered']
    #allocation11 [shape = 'u8[16384]{0}', space=vmem, size = 0x4000, scoped, tag = 'input window, operand 7, single buffered']
    #allocation12 [shape = 's32[1]{0}', space=sflag, size = 0x4, scoped, tag = 'scoped memory for tpu_custom_call.1']
    #allocation13 [shape = 'u8[512]{0}', space=vmem, size = 0x400, scoped, tag = 'input window, operand 8, single buffered']
    #allocation14 [shape = 'u8[16384]{0}', space=vmem, size = 0x4000, scoped, tag = 'input window, operand 10, single buffered']
    #allocation15 [shape = 's32[1]{0}', space=sflag, size = 0x4, scoped, tag = 'scoped memory for tpu_custom_call.1']
    #allocation16 [shape = 'u8[16384]{0}', space=vmem, size = 0x4000, scoped, tag = 'input window, operand 12, single buffered']
    #allocation17 [shape = 'u8[8192]{0}', space=vmem, size = 0x2000, scoped, tag = 'output window, operand 0']
    %19 = vsyncpa [#allocation3], 0
    %s20 = scalar_lea.sflag [#allocation3], 1
    %21 = vsyncpa %s20, 0
    %22 = vsyncpa [#allocation6], 0
    %s23 = scalar_lea.sflag [#allocation6], 1
    %24 = vsyncpa %s23, 0
    %25 = vsyncpa [#allocation9], 0
    %26 = vsyncpa [#allocation12], 0
    %27 = vsyncpa [#allocation15], 0
    %28 = vsyncpa [#allocation4], 0
    %s29 = scalar_lea.sflag [#allocation4], 1
    %30 = vsyncpa %s29, 0
    loop: start=0, step=1, limit=4
    $region2: #{tpu_custom_call.1} parent=1 // loop_pre_header
      _
    $region3: #{tpu_custom_call.1} parent=1 // loop_header
      %s32 = sphi 0, %s36
      %p33 = scmp.ge.s32.totalorder %s32, 4
      %s42 = sphi 0, %s44
      %s45 = sphi 0, %s42
      %s46 = sphi 0, %s45
      %s62 = sphi 0, %s46
      %s68 = sphi 0, %s70
      %s71 = sphi 0, %s68
      %s72 = sphi 0, %s71
      %s88 = sphi 0, %s72
      %s92 = sphi 0, %s92
      %s94 = sphi 0, %s92
      %s95 = sphi 0, %s94
      %s109 = sphi 0, %s95
      %s113 = sphi 0, %s113
      %s115 = sphi 0, %s113
      %s116 = sphi 0, %s115
      %s130 = sphi 0, %s116
      %s134 = sphi 0, %s134
      %s136 = sphi 0, %s134
      %s137 = sphi 0, %s136
      %s151 = sphi 0, %s137
      %s155 = sphi 0, %s155
      %s157 = sphi 0, %s155
      %s158 = sphi 0, %s157
      %s172 = sphi 0, %s158
      %s176 = sphi 0, %s176
      %s178 = sphi 0, %s176
      %s179 = sphi 0, %s178
      %s193 = sphi 0, %s179
      %s197 = sphi 0, %s197
      %s199 = sphi 0, %s197
      %s200 = sphi 0, %s199
      %s214 = sphi 0, %s200
      %s218 = sphi 0, %s218
      %s220 = sphi 0, %s218
      %s221 = sphi 0, %s220
      %s235 = sphi 0, %s221
      %s239 = sphi 0, %s239
      %s241 = sphi 0, %s239
      %s242 = sphi 0, %s241
      %s256 = sphi 0, %s242
      %s260 = sphi 0, %s260
      %s262 = sphi 0, %s260
      %s263 = sphi 0, %s262
      %s277 = sphi 0, %s263
      %s281 = sphi 0, %s281
      %s283 = sphi 0, %s281
      %s284 = sphi 0, %s283
      %s298 = sphi 0, %s284
      %s302 = sphi 0, %s302
      %s304 = sphi 0, %s302
      %s305 = sphi 0, %s304
      %s319 = sphi 0, %s305
      %s323 = sphi 0, %s323
      %s325 = sphi 0, %s323
      %s326 = sphi 0, %s325
      %s340 = sphi 0, %s326
      %s346 = sphi 0, %s348
      %s349 = sphi 0, %s346
      %s350 = sphi 0, %s349
      %s366 = sphi 0, %s350
    $region4: #{tpu_custom_call.1} parent=1 // loop_header_branch
      %35 = sbr.rel (%p33) target = $region8
    $region5: #{tpu_custom_call.1} parent=1 // loop_body
      %s37 = ssub.s32 %s32, 1
      %s38 = ssub.s32 %s32, 2
      %s39 = sadd.s32 %s32, 1
      %s40 = ssub.s32 %s32, %s39
      %p41 = scmp.eq.s32.totalorder %s40, 0
      %s43 = sadd.s32 %s42, 1
      %s44 = scalar_select %p41, %s42, %s43
      %p47 = pneg %p41
      %p48 = scmp.eq.s32.totalorder %s32, 1
      %p49 = por %p47, %p48
      %p50 = scmp.ne.s32.totalorder %s42, %s45
      %p51 = scmp.eq.s32.totalorder %s32, 0
      %p52 = por %p50, %p51
      %p53 = scmp.ne.s32.totalorder %s42, %s45
      %p54 = scmp.eq.s32.totalorder %s37, 1
      %p55 = por %p53, %p54
      %p56 = scmp.ne.s32.totalorder %s45, %s46
      %p57 = scmp.eq.s32.totalorder %s37, 0
      %p58 = por %p56, %p57
      %p59 = scmp.ne.s32.totalorder %s45, %s46
      %p60 = scmp.eq.s32.totalorder %s38, 1
      %p61 = por %p59, %p60
      %p63 = scmp.ne.s32.totalorder %s46, %s62
      %p64 = scmp.eq.s32.totalorder %s38, 0
      %p65 = por %p63, %p64
      %s66 = ssub.s32 %s32, %s39
      %p67 = scmp.eq.s32.totalorder %s66, 0
      %s69 = sadd.s32 %s68, 1
      %s70 = scalar_select %p67, %s68, %s69
      %p73 = pneg %p67
      %p74 = scmp.eq.s32.totalorder %s32, 1
      %p75 = por %p73, %p74
      %p76 = scmp.ne.s32.totalorder %s68, %s71
      %p77 = scmp.eq.s32.totalorder %s32, 0
      %p78 = por %p76, %p77
      %p79 = scmp.ne.s32.totalorder %s68, %s71
      %p80 = scmp.eq.s32.totalorder %s37, 1
      %p81 = por %p79, %p80
      %p82 = scmp.ne.s32.totalorder %s71, %s72
      %p83 = scmp.eq.s32.totalorder %s37, 0
      %p84 = por %p82, %p83
      %p85 = scmp.ne.s32.totalorder %s71, %s72
      %p86 = scmp.eq.s32.totalorder %s38, 1
      %p87 = por %p85, %p86
      %p89 = scmp.ne.s32.totalorder %s72, %s88
      %p90 = scmp.eq.s32.totalorder %s38, 0
      %p91 = por %p89, %p90
      %s93 = sadd.s32 %s92, 1
      %p96 = scmp.eq.s32.totalorder %s32, 1
      %p97 = scmp.ne.s32.totalorder %s92, %s94
      %p98 = scmp.eq.s32.totalorder %s32, 0
      %p99 = por %p97, %p98
      %p100 = scmp.ne.s32.totalorder %s92, %s94
      %p101 = scmp.eq.s32.totalorder %s37, 1
      %p102 = por %p100, %p101
      %p103 = scmp.ne.s32.totalorder %s94, %s95
      %p104 = scmp.eq.s32.totalorder %s37, 0
      %p105 = por %p103, %p104
      %p106 = scmp.ne.s32.totalorder %s94, %s95
      %p107 = scmp.eq.s32.totalorder %s38, 1
      %p108 = por %p106, %p107
      %p110 = scmp.ne.s32.totalorder %s95, %s109
      %p111 = scmp.eq.s32.totalorder %s38, 0
      %p112 = por %p110, %p111
      %s114 = sadd.s32 %s113, 1
      %p117 = scmp.eq.s32.totalorder %s32, 1
      %p118 = scmp.ne.s32.totalorder %s113, %s115
      %p119 = scmp.eq.s32.totalorder %s32, 0
      %p120 = por %p118, %p119
      %p121 = scmp.ne.s32.totalorder %s113, %s115
      %p122 = scmp.eq.s32.totalorder %s37, 1
      %p123 = por %p121, %p122
      %p124 = scmp.ne.s32.totalorder %s115, %s116
      %p125 = scmp.eq.s32.totalorder %s37, 0
      %p126 = por %p124, %p125
      %p127 = scmp.ne.s32.totalorder %s115, %s116
      %p128 = scmp.eq.s32.totalorder %s38, 1
      %p129 = por %p127, %p128
      %p131 = scmp.ne.s32.totalorder %s116, %s130
      %p132 = scmp.eq.s32.totalorder %s38, 0
      %p133 = por %p131, %p132
      %s135 = sadd.s32 %s134, 1
      %p138 = scmp.eq.s32.totalorder %s32, 1
      %p139 = scmp.ne.s32.totalorder %s134, %s136
      %p140 = scmp.eq.s32.totalorder %s32, 0
      %p141 = por %p139, %p140
      %p142 = scmp.ne.s32.totalorder %s134, %s136
      %p143 = scmp.eq.s32.totalorder %s37, 1
      %p144 = por %p142, %p143
      %p145 = scmp.ne.s32.totalorder %s136, %s137
      %p146 = scmp.eq.s32.totalorder %s37, 0
      %p147 = por %p145, %p146
      %p148 = scmp.ne.s32.totalorder %s136, %s137
      %p149 = scmp.eq.s32.totalorder %s38, 1
      %p150 = por %p148, %p149
      %p152 = scmp.ne.s32.totalorder %s137, %s151
      %p153 = scmp.eq.s32.totalorder %s38, 0
      %p154 = por %p152, %p153
      %s156 = sadd.s32 %s155, 1
      %p159 = scmp.eq.s32.totalorder %s32, 1
      %p160 = scmp.ne.s32.totalorder %s155, %s157
      %p161 = scmp.eq.s32.totalorder %s32, 0
      %p162 = por %p160, %p161
      %p163 = scmp.ne.s32.totalorder %s155, %s157
      %p164 = scmp.eq.s32.totalorder %s37, 1
      %p165 = por %p163, %p164
      %p166 = scmp.ne.s32.totalorder %s157, %s158
      %p167 = scmp.eq.s32.totalorder %s37, 0
      %p168 = por %p166, %p167
      %p169 = scmp.ne.s32.totalorder %s157, %s158
      %p170 = scmp.eq.s32.totalorder %s38, 1
      %p171 = por %p169, %p170
      %p173 = scmp.ne.s32.totalorder %s158, %s172
      %p174 = scmp.eq.s32.totalorder %s38, 0
      %p175 = por %p173, %p174
      %s177 = sadd.s32 %s176, 1
      %p180 = scmp.eq.s32.totalorder %s32, 1
      %p181 = scmp.ne.s32.totalorder %s176, %s178
      %p182 = scmp.eq.s32.totalorder %s32, 0
      %p183 = por %p181, %p182
      %p184 = scmp.ne.s32.totalorder %s176, %s178
      %p185 = scmp.eq.s32.totalorder %s37, 1
      %p186 = por %p184, %p185
      %p187 = scmp.ne.s32.totalorder %s178, %s179
      %p188 = scmp.eq.s32.totalorder %s37, 0
      %p189 = por %p187, %p188
      %p190 = scmp.ne.s32.totalorder %s178, %s179
      %p191 = scmp.eq.s32.totalorder %s38, 1
      %p192 = por %p190, %p191
      %p194 = scmp.ne.s32.totalorder %s179, %s193
      %p195 = scmp.eq.s32.totalorder %s38, 0
      %p196 = por %p194, %p195
      %s198 = sadd.s32 %s197, 1
      %p201 = scmp.eq.s32.totalorder %s32, 1
      %p202 = scmp.ne.s32.totalorder %s197, %s199
      %p203 = scmp.eq.s32.totalorder %s32, 0
      %p204 = por %p202, %p203
      %p205 = scmp.ne.s32.totalorder %s197, %s199
      %p206 = scmp.eq.s32.totalorder %s37, 1
      %p207 = por %p205, %p206
      %p208 = scmp.ne.s32.totalorder %s199, %s200
      %p209 = scmp.eq.s32.totalorder %s37, 0
      %p210 = por %p208, %p209
      %p211 = scmp.ne.s32.totalorder %s199, %s200
      %p212 = scmp.eq.s32.totalorder %s38, 1
      %p213 = por %p211, %p212
      %p215 = scmp.ne.s32.totalorder %s200, %s214
      %p216 = scmp.eq.s32.totalorder %s38, 0
      %p217 = por %p215, %p216
      %s219 = sadd.s32 %s218, 1
      %p222 = scmp.eq.s32.totalorder %s32, 1
      %p223 = scmp.ne.s32.totalorder %s218, %s220
      %p224 = scmp.eq.s32.totalorder %s32, 0
      %p225 = por %p223, %p224
      %p226 = scmp.ne.s32.totalorder %s218, %s220
      %p227 = scmp.eq.s32.totalorder %s37, 1
      %p228 = por %p226, %p227
      %p229 = scmp.ne.s32.totalorder %s220, %s221
      %p230 = scmp.eq.s32.totalorder %s37, 0
      %p231 = por %p229, %p230
      %p232 = scmp.ne.s32.totalorder %s220, %s221
      %p233 = scmp.eq.s32.totalorder %s38, 1
      %p234 = por %p232, %p233
      %p236 = scmp.ne.s32.totalorder %s221, %s235
      %p237 = scmp.eq.s32.totalorder %s38, 0
      %p238 = por %p236, %p237
      %s240 = sadd.s32 %s239, 1
      %p243 = scmp.eq.s32.totalorder %s32, 1
      %p244 = scmp.ne.s32.totalorder %s239, %s241
      %p245 = scmp.eq.s32.totalorder %s32, 0
      %p246 = por %p244, %p245
      %p247 = scmp.ne.s32.totalorder %s239, %s241
      %p248 = scmp.eq.s32.totalorder %s37, 1
      %p249 = por %p247, %p248
      %p250 = scmp.ne.s32.totalorder %s241, %s242
      %p251 = scmp.eq.s32.totalorder %s37, 0
      %p252 = por %p250, %p251
      %p253 = scmp.ne.s32.totalorder %s241, %s242
      %p254 = scmp.eq.s32.totalorder %s38, 1
      %p255 = por %p253, %p254
      %p257 = scmp.ne.s32.totalorder %s242, %s256
      %p258 = scmp.eq.s32.totalorder %s38, 0
      %p259 = por %p257, %p258
      %s261 = sadd.s32 %s260, 1
      %p264 = scmp.eq.s32.totalorder %s32, 1
      %p265 = scmp.ne.s32.totalorder %s260, %s262
      %p266 = scmp.eq.s32.totalorder %s32, 0
      %p267 = por %p265, %p266
      %p268 = scmp.ne.s32.totalorder %s260, %s262
      %p269 = scmp.eq.s32.totalorder %s37, 1
      %p270 = por %p268, %p269
      %p271 = scmp.ne.s32.totalorder %s262, %s263
      %p272 = scmp.eq.s32.totalorder %s37, 0
      %p273 = por %p271, %p272
      %p274 = scmp.ne.s32.totalorder %s262, %s263
      %p275 = scmp.eq.s32.totalorder %s38, 1
      %p276 = por %p274, %p275
      %p278 = scmp.ne.s32.totalorder %s263, %s277
      %p279 = scmp.eq.s32.totalorder %s38, 0
      %p280 = por %p278, %p279
      %s282 = sadd.s32 %s281, 1
      %p285 = scmp.eq.s32.totalorder %s32, 1
      %p286 = scmp.ne.s32.totalorder %s281, %s283
      %p287 = scmp.eq.s32.totalorder %s32, 0
      %p288 = por %p286, %p287
      %p289 = scmp.ne.s32.totalorder %s281, %s283
      %p290 = scmp.eq.s32.totalorder %s37, 1
      %p291 = por %p289, %p290
      %p292 = scmp.ne.s32.totalorder %s283, %s284
      %p293 = scmp.eq.s32.totalorder %s37, 0
      %p294 = por %p292, %p293
      %p295 = scmp.ne.s32.totalorder %s283, %s284
      %p296 = scmp.eq.s32.totalorder %s38, 1
      %p297 = por %p295, %p296
      %p299 = scmp.ne.s32.totalorder %s284, %s298
      %p300 = scmp.eq.s32.totalorder %s38, 0
      %p301 = por %p299, %p300
      %s303 = sadd.s32 %s302, 1
      %p306 = scmp.eq.s32.totalorder %s32, 1
      %p307 = scmp.ne.s32.totalorder %s302, %s304
      %p308 = scmp.eq.s32.totalorder %s32, 0
      %p309 = por %p307, %p308
      %p310 = scmp.ne.s32.totalorder %s302, %s304
      %p311 = scmp.eq.s32.totalorder %s37, 1
      %p312 = por %p310, %p311
      %p313 = scmp.ne.s32.totalorder %s304, %s305
      %p314 = scmp.eq.s32.totalorder %s37, 0
      %p315 = por %p313, %p314
      %p316 = scmp.ne.s32.totalorder %s304, %s305
      %p317 = scmp.eq.s32.totalorder %s38, 1
      %p318 = por %p316, %p317
      %p320 = scmp.ne.s32.totalorder %s305, %s319
      %p321 = scmp.eq.s32.totalorder %s38, 0
      %p322 = por %p320, %p321
      %s324 = sadd.s32 %s323, 1
      %p327 = scmp.eq.s32.totalorder %s32, 1
      %p328 = scmp.ne.s32.totalorder %s323, %s325
      %p329 = scmp.eq.s32.totalorder %s32, 0
      %p330 = por %p328, %p329
      %p331 = scmp.ne.s32.totalorder %s323, %s325
      %p332 = scmp.eq.s32.totalorder %s37, 1
      %p333 = por %p331, %p332
      %p334 = scmp.ne.s32.totalorder %s325, %s326
      %p335 = scmp.eq.s32.totalorder %s37, 0
      %p336 = por %p334, %p335
      %p337 = scmp.ne.s32.totalorder %s325, %s326
      %p338 = scmp.eq.s32.totalorder %s38, 1
      %p339 = por %p337, %p338
      %p341 = scmp.ne.s32.totalorder %s326, %s340
      %p342 = scmp.eq.s32.totalorder %s38, 0
      %p343 = por %p341, %p342
      %s344 = ssub.s32 %s32, %s39
      %p345 = scmp.eq.s32.totalorder %s344, 0
      %s347 = sadd.s32 %s346, 1
      %s348 = scalar_select %p345, %s346, %s347
      %p351 = pneg %p345
      %p352 = scmp.eq.s32.totalorder %s32, 1
      %p353 = por %p351, %p352
      %p354 = scmp.ne.s32.totalorder %s346, %s349
      %p355 = scmp.eq.s32.totalorder %s32, 0
      %p356 = por %p354, %p355
      %p357 = scmp.ne.s32.totalorder %s346, %s349
      %p358 = scmp.eq.s32.totalorder %s37, 1
      %p359 = por %p357, %p358
      %p360 = scmp.ne.s32.totalorder %s349, %s350
      %p361 = scmp.eq.s32.totalorder %s37, 0
      %p362 = por %p360, %p361
      %p363 = scmp.ne.s32.totalorder %s349, %s350
      %p364 = scmp.eq.s32.totalorder %s38, 1
      %p365 = por %p363, %p364
      %p367 = scmp.ne.s32.totalorder %s350, %s366
      %p368 = scmp.eq.s32.totalorder %s38, 0
      %p369 = por %p367, %p368
      %p370 = scmp.le.s32.totalorder 1, %s32
      %p371 = scmp.lt.s32.totalorder %s32, 3
      %p372 = pnand %p370, %p371
      %p373 = pneg %p372
      // Predicated region
      $region9: #{tpu_custom_call.1} parent=5 // pred_check
        _
      $region10: #{tpu_custom_call.1} parent=5 // pred_check_branch
        %375 = sbr.rel (%p372) target = $region12
      $region11: #{tpu_custom_call.1} parent=5 // pred_region
        %s376 = ssub.s32 %s32, 1
        // Predicated region
        $region13: #{tpu_custom_call.1} parent=11 // pred_check
          %p377 = pneg %p105
        $region14: #{tpu_custom_call.1} parent=11 // pred_check_branch
          %379 = sbr.rel (%p377) target = $region16
        $region15: #{tpu_custom_call.1} parent=11 // pred_region
          %s381 = ssub.s32 512, 512
          %382 = vsyncadd [#allocation6], %s381
          %s383 = sshll.u32 [#allocation7], 4
          %s384 = int_to_ptr.vmem [resolvable:$true] %s383
          %389 = dma.hbm_to_vmem [thread:$0]  %s2, 512, %s384, [#allocation6], 128, 128, 8
        $region16: #{tpu_custom_call.1} parent=11 // pred_fallthru
          _
        // Predicated region
        $region17: #{tpu_custom_call.1} parent=11 // pred_check
          %p390 = pneg %p126
        $region18: #{tpu_custom_call.1} parent=11 // pred_check_branch
          %392 = sbr.rel (%p390) target = $region20
        $region19: #{tpu_custom_call.1} parent=11 // pred_region
          %s394 = ssub.s32 512, 512
          %395 = vsyncadd [#allocation9], %s394
          %s396 = sshll.u32 [#allocation8], 4
          %s397 = int_to_ptr.vmem [resolvable:$true] %s396
          %402 = dma.hbm_to_vmem [thread:$0]  %s3, 512, %s397, [#allocation9], 128, 128, 8
        $region20: #{tpu_custom_call.1} parent=11 // pred_fallthru
          _
        // Predicated region
        $region21: #{tpu_custom_call.1} parent=11 // pred_check
          %p403 = pneg %p147
        $region22: #{tpu_custom_call.1} parent=11 // pred_check_branch
          %405 = sbr.rel (%p403) target = $region24
        $region23: #{tpu_custom_call.1} parent=11 // pred_region
          _
        $region24: #{tpu_custom_call.1} parent=11 // pred_fallthru
          _
        // Predicated region
        $region25: #{tpu_custom_call.1} parent=11 // pred_check
          %p406 = pneg %p168
        $region26: #{tpu_custom_call.1} parent=11 // pred_check_branch
          %408 = sbr.rel (%p406) target = $region28
        $region27: #{tpu_custom_call.1} parent=11 // pred_region
          _
        $region28: #{tpu_custom_call.1} parent=11 // pred_fallthru
          _
        // Predicated region
        $region29: #{tpu_custom_call.1} parent=11 // pred_check
          %p409 = pneg %p189
        $region30: #{tpu_custom_call.1} parent=11 // pred_check_branch
          %411 = sbr.rel (%p409) target = $region32
        $region31: #{tpu_custom_call.1} parent=11 // pred_region
          %s413 = ssub.s32 16, 16
          %414 = vsyncadd [#allocation9], %s413
          %s416 = sshll.u32 [#allocation10], 4
          %s417 = int_to_ptr.vmem [resolvable:$true] %s416
          %419 = dma.hbm_to_vmem [thread:$0]  %s6, 16, %s417, [#allocation9]
        $region32: #{tpu_custom_call.1} parent=11 // pred_fallthru
          _
        // Predicated region
        $region33: #{tpu_custom_call.1} parent=11 // pred_check
          %p420 = pneg %p210
        $region34: #{tpu_custom_call.1} parent=11 // pred_check_branch
          %422 = sbr.rel (%p420) target = $region36
        $region35: #{tpu_custom_call.1} parent=11 // pred_region
          %s424 = ssub.s32 512, 512
          %425 = vsyncadd [#allocation12], %s424
          %s426 = sshll.u32 [#allocation11], 4
          %s427 = int_to_ptr.vmem [resolvable:$true] %s426
          %432 = dma.hbm_to_vmem [thread:$0]  %s7, 512, %s427, [#allocation12], 128, 128, 8
        $region36: #{tpu_custom_call.1} parent=11 // pred_fallthru
          _
        // Predicated region
        $region37: #{tpu_custom_call.1} parent=11 // pred_check
          %p433 = pneg %p231
        $region38: #{tpu_custom_call.1} parent=11 // pred_check_branch
          %435 = sbr.rel (%p433) target = $region40
        $region39: #{tpu_custom_call.1} parent=11 // pred_region
          %s437 = ssub.s32 16, 16
          %438 = vsyncadd [#allocation12], %s437
          %s440 = sshll.u32 [#allocation13], 4
          %s441 = int_to_ptr.vmem [resolvable:$true] %s440
          %443 = dma.hbm_to_vmem [thread:$0]  %s8, 16, %s441, [#allocation12]
        $region40: #{tpu_custom_call.1} parent=11 // pred_fallthru
          _
        // Predicated region
        $region41: #{tpu_custom_call.1} parent=11 // pred_check
          %p444 = pneg %p252
        $region42: #{tpu_custom_call.1} parent=11 // pred_check_branch
          %446 = sbr.rel (%p444) target = $region44
        $region43: #{tpu_custom_call.1} parent=11 // pred_region
          _
        $region44: #{tpu_custom_call.1} parent=11 // pred_fallthru
          _
        // Predicated region
        $region45: #{tpu_custom_call.1} parent=11 // pred_check
          %p447 = pneg %p273
        $region46: #{tpu_custom_call.1} parent=11 // pred_check_branch
          %449 = sbr.rel (%p447) target = $region48
        $region47: #{tpu_custom_call.1} parent=11 // pred_region
          %s451 = ssub.s32 512, 512
          %452 = vsyncadd [#allocation15], %s451
          %s453 = sshll.u32 [#allocation14], 4
          %s454 = int_to_ptr.vmem [resolvable:$true] %s453
          %459 = dma.hbm_to_vmem [thread:$0]  %s10, 512, %s454, [#allocation15], 128, 128, 8
        $region48: #{tpu_custom_call.1} parent=11 // pred_fallthru
          _
        // Predicated region
        $region49: #{tpu_custom_call.1} parent=11 // pred_check
          %p460 = pneg %p294
        $region50: #{tpu_custom_call.1} parent=11 // pred_check_branch
          %462 = sbr.rel (%p460) target = $region52
        $region51: #{tpu_custom_call.1} parent=11 // pred_region
          _
        $region52: #{tpu_custom_call.1} parent=11 // pred_fallthru
          _
        // Predicated region
        $region53: #{tpu_custom_call.1} parent=11 // pred_check
          %p463 = pneg %p315
        $region54: #{tpu_custom_call.1} parent=11 // pred_check_branch
          %465 = sbr.rel (%p463) target = $region56
        $region55: #{tpu_custom_call.1} parent=11 // pred_region
          %s467 = ssub.s32 512, 512
          %468 = vsyncadd [#allocation15], %s467
          %s469 = sshll.u32 [#allocation16], 4
          %s470 = int_to_ptr.vmem [resolvable:$true] %s469
          %475 = dma.hbm_to_vmem [thread:$0]  %s12, 512, %s470, [#allocation15], 128, 128, 8
        $region56: #{tpu_custom_call.1} parent=11 // pred_fallthru
          _
        // Predicated region
        $region57: #{tpu_custom_call.1} parent=11 // pred_check
          %p476 = pneg %p336
        $region58: #{tpu_custom_call.1} parent=11 // pred_check_branch
          %478 = sbr.rel (%p476) target = $region60
        $region59: #{tpu_custom_call.1} parent=11 // pred_region
          _
        $region60: #{tpu_custom_call.1} parent=11 // pred_fallthru
          _
      $region12: #{tpu_custom_call.1} parent=5 // pred_fallthru
        _
      %p479 = scmp.lt.s32.totalorder %s32, 2
      // Predicated region
      $region61: #{tpu_custom_call.1} parent=5 // pred_check
        %p480 = pneg %p479
      $region62: #{tpu_custom_call.1} parent=5 // pred_check_branch
        %482 = sbr.rel (%p480) target = $region64
      $region63: #{tpu_custom_call.1} parent=5 // pred_region
        // Predicated region
        $region65: #{tpu_custom_call.1} parent=63 // pred_check
          %p483 = pneg %p52
        $region66: #{tpu_custom_call.1} parent=63 // pred_check_branch
          %485 = sbr.rel (%p483) target = $region68
        $region67: #{tpu_custom_call.1} parent=63 // pred_region
          %s486 = sand.u32 %s42, 1
          %s487 = scalar_lea.sflag [#allocation3], %s486
          %s488 = sand.u32 %s42, 1
          %s489 = smul.addr %s488, 64
          %s490 = scalar_lea.vmem [#allocation2], %s489
          %s491 = smul.u32 8, %s32
          %s493 = ssub.s32 1024, 1024
          %494 = vsyncadd %s487, %s493
          %s495 = smul.addr %s491, 128
          %s496 = scalar_lea.hbm %s0, %s495
          %s497 = sshll.u32 %s490, 4
          %s498 = int_to_ptr.vmem [resolvable:$true] %s497
          %503 = dma.hbm_to_vmem [thread:$0]  %s496, 1024, %s498, %s487, 128, 128, 8
        $region68: #{tpu_custom_call.1} parent=63 // pred_fallthru
          _
        // Predicated region
        $region69: #{tpu_custom_call.1} parent=63 // pred_check
          %p504 = pneg %p78
        $region70: #{tpu_custom_call.1} parent=63 // pred_check_branch
          %506 = sbr.rel (%p504) target = $region72
        $region71: #{tpu_custom_call.1} parent=63 // pred_region
          %s507 = sand.u32 %s32, 1
          %s508 = scalar_lea.sflag [#allocation6], %s507
          %s509 = sand.u32 %s68, 1
          %s510 = smul.addr %s509, 128
          %s511 = scalar_lea.vmem [#allocation5], %s510
          %s512 = smul.u32 8, %s32
          %s514 = ssub.s32 2048, 2048
          %515 = vsyncadd %s508, %s514
          %s516 = smul.addr %s512, 2
          %s517 = smul.addr %s516, 128
          %s518 = scalar_lea.hbm %s1, %s517
          %s519 = sshll.u32 %s511, 4
          %s520 = int_to_ptr.vmem [resolvable:$true] %s519
          %525 = dma.hbm_to_vmem [thread:$0]  %s518, 2048, %s520, %s508, 128, 128, 8
        $region72: #{tpu_custom_call.1} parent=63 // pred_fallthru
          _
      $region64: #{tpu_custom_call.1} parent=5 // pred_fallthru
        _
      %p526 = scmp.le.s32.totalorder 1, %s32
      %p527 = scmp.lt.s32.totalorder %s32, 3
      %p528 = pnand %p526, %p527
      %p529 = pneg %p528
      // Predicated region
      $region73: #{tpu_custom_call.1} parent=5 // pred_check
        _
      $region74: #{tpu_custom_call.1} parent=5 // pred_check_branch
        %531 = sbr.rel (%p528) target = $region76
      $region75: #{tpu_custom_call.1} parent=5 // pred_region
        %s532 = ssub.s32 %s32, 1
        %s533 = sand.u32 %s45, 1
        %s534 = scalar_lea.sflag [#allocation3], %s533
        %s535 = sand.u32 %s45, 1
        %s536 = smul.addr %s535, 64
        %s537 = scalar_lea.vmem [#allocation2], %s536
        // Predicated region
        $region77: #{tpu_custom_call.1} parent=75 // pred_check
          %p538 = pneg %p58
        $region78: #{tpu_custom_call.1} parent=75 // pred_check_branch
          %540 = sbr.rel (%p538) target = $region80
        $region79: #{tpu_custom_call.1} parent=75 // pred_region
          %541 = dma.done %s534, 1024
        $region80: #{tpu_custom_call.1} parent=75 // pred_fallthru
          _
        %s542 = sand.u32 %s37, 1
        %s543 = scalar_lea.sflag [#allocation6], %s542
        %s544 = sand.u32 %s71, 1
        %s545 = smul.addr %s544, 128
        %s546 = scalar_lea.vmem [#allocation5], %s545
        // Predicated region
        $region81: #{tpu_custom_call.1} parent=75 // pred_check
          %p547 = pneg %p84
        $region82: #{tpu_custom_call.1} parent=75 // pred_check_branch
          %549 = sbr.rel (%p547) target = $region84
        $region83: #{tpu_custom_call.1} parent=75 // pred_region
          %550 = dma.done %s543, 2048
        $region84: #{tpu_custom_call.1} parent=75 // pred_fallthru
          _
        // Predicated region
        $region85: #{tpu_custom_call.1} parent=75 // pred_check
          %p551 = pneg %p105
        $region86: #{tpu_custom_call.1} parent=75 // pred_check_branch
          %553 = sbr.rel (%p551) target = $region88
        $region87: #{tpu_custom_call.1} parent=75 // pred_region
          %554 = dma.done [#allocation6], 512
        $region88: #{tpu_custom_call.1} parent=75 // pred_fallthru
          _
        // Predicated region
        $region89: #{tpu_custom_call.1} parent=75 // pred_check
          %p555 = pneg %p126
        $region90: #{tpu_custom_call.1} parent=75 // pred_check_branch
          %557 = sbr.rel (%p555) target = $region92
        $region91: #{tpu_custom_call.1} parent=75 // pred_region
          %558 = dma.done [#allocation9], 512
        $region92: #{tpu_custom_call.1} parent=75 // pred_fallthru
          _
        // Predicated region
        $region93: #{tpu_custom_call.1} parent=75 // pred_check
          %p559 = pneg %p189
        $region94: #{tpu_custom_call.1} parent=75 // pred_check_branch
          %561 = sbr.rel (%p559) target = $region96
        $region95: #{tpu_custom_call.1} parent=75 // pred_region
          %562 = dma.done [#allocation9], 16
        $region96: #{tpu_custom_call.1} parent=75 // pred_fallthru
          _
        // Predicated region
        $region97: #{tpu_custom_call.1} parent=75 // pred_check
          %p563 = pneg %p210
        $region98: #{tpu_custom_call.1} parent=75 // pred_check_branch
          %565 = sbr.rel (%p563) target = $region100
        $region99: #{tpu_custom_call.1} parent=75 // pred_region
          %566 = dma.done [#allocation12], 512
        $region100: #{tpu_custom_call.1} parent=75 // pred_fallthru
          _
        // Predicated region
        $region101: #{tpu_custom_call.1} parent=75 // pred_check
          %p567 = pneg %p231
        $region102: #{tpu_custom_call.1} parent=75 // pred_check_branch
          %569 = sbr.rel (%p567) target = $region104
        $region103: #{tpu_custom_call.1} parent=75 // pred_region
          %570 = dma.done [#allocation12], 16
        $region104: #{tpu_custom_call.1} parent=75 // pred_fallthru
          _
        // Predicated region
        $region105: #{tpu_custom_call.1} parent=75 // pred_check
          %p571 = pneg %p273
        $region106: #{tpu_custom_call.1} parent=75 // pred_check_branch
          %573 = sbr.rel (%p571) target = $region108
        $region107: #{tpu_custom_call.1} parent=75 // pred_region
          %574 = dma.done [#allocation15], 512
        $region108: #{tpu_custom_call.1} parent=75 // pred_fallthru
          _
        // Predicated region
        $region109: #{tpu_custom_call.1} parent=75 // pred_check
          %p575 = pneg %p315
        $region110: #{tpu_custom_call.1} parent=75 // pred_check_branch
          %577 = sbr.rel (%p575) target = $region112
        $region111: #{tpu_custom_call.1} parent=75 // pred_region
          %578 = dma.done [#allocation15], 512
        $region112: #{tpu_custom_call.1} parent=75 // pred_fallthru
          _
        %s579 = sand.u32 %s45, 1
        %s580 = scalar_lea.sflag [#allocation3], %s579
        %s581 = sand.u32 %s45, 1
        %s582 = smul.addr %s581, 64
        %s583 = scalar_lea.vmem [#allocation2], %s582
        %p584 = pneg %p58
        %p585 = pneg %p55
        %s586 = sand.u32 %s37, 1
        %s587 = scalar_lea.sflag [#allocation6], %s586
        %s588 = sand.u32 %s71, 1
        %s589 = smul.addr %s588, 128
        %s590 = scalar_lea.vmem [#allocation5], %s589
        %p591 = pneg %p84
        %p592 = pneg %p81
        %p593 = pneg %p105
        %p594 = pneg %p102
        %p595 = pneg %p126
        %p596 = pneg %p123
        %p597 = pneg %p147
        %p598 = pneg %p144
        %p599 = pneg %p168
        %p600 = pneg %p165
        %p601 = pneg %p189
        %p602 = pneg %p186
        %p603 = pneg %p210
        %p604 = pneg %p207
        %p605 = pneg %p231
        %p606 = pneg %p228
        %p607 = pneg %p252
        %p608 = pneg %p249
        %p609 = pneg %p273
        %p610 = pneg %p270
        %p611 = pneg %p294
        %p612 = pneg %p291
        %p613 = pneg %p315
        %p614 = pneg %p312
        %p615 = pneg %p336
        %p616 = pneg %p333
        %p617 = pneg %p362
        %p618 = pneg %p359
        %s619 = sand.u32 %s349, 1
        %s620 = scalar_lea.sflag [#allocation4], %s619
        %s621 = sand.u32 %s349, 1
        %s622 = smul.addr %s621, 8
        %s623 = scalar_lea.vmem [#allocation17], %s622
        %s624 = smul.u32 8, %s37
        %s625 = smul.u32 8, %s37
        %v626 = vld [vmem:[%s537] sm:$0xff]
        %v627 = vld [vmem:[%s537 + $0x8] sm:$0xff]
        %v628 = vld [vmem:[%s537 + $0x10] sm:$0xff]
        %v629 = vld [vmem:[%s537 + $0x18] sm:$0xff]
        %v630 = vld [vmem:[%s537 + $0x20] sm:$0xff]
        %v631 = vld [vmem:[%s537 + $0x28] sm:$0xff]
        %v632 = vld [vmem:[%s537 + $0x30] sm:$0xff]
        %v633 = vld [vmem:[%s537 + $0x38] sm:$0xff]
        %v634 = vld [vmem:[%s546] sm:$0xff]
        %v635 = vld [vmem:[%s546 + $0x8] sm:$0xff]
        %v636 = vld [vmem:[%s546 + $0x10] sm:$0xff]
        %v637 = vld [vmem:[%s546 + $0x18] sm:$0xff]
        %v638 = vld [vmem:[%s546 + $0x20] sm:$0xff]
        %v639 = vld [vmem:[%s546 + $0x28] sm:$0xff]
        %v640 = vld [vmem:[%s546 + $0x30] sm:$0xff]
        %v641 = vld [vmem:[%s546 + $0x38] sm:$0xff]
        %v642 = vld [vmem:[%s546 + $0x40] sm:$0xff]
        %v643 = vld [vmem:[%s546 + $0x48] sm:$0xff]
        %v644 = vld [vmem:[%s546 + $0x50] sm:$0xff]
        %v645 = vld [vmem:[%s546 + $0x58] sm:$0xff]
        %v646 = vld [vmem:[%s546 + $0x60] sm:$0xff]
        %v647 = vld [vmem:[%s546 + $0x68] sm:$0xff]
        %v648 = vld [vmem:[%s546 + $0x70] sm:$0xff]
        %v649 = vld [vmem:[%s546 + $0x78] sm:$0xff]
        %vm650 = vcmask 261120
        %v652 = vsel %vm650, %v626, 0
        %v655 = vsel %vm650, %v634, 0
        %v658 = vsel %vm650, %v635, 0
        %660 = vmatprep.subr.mxu0 0.0
        %661 = vmatpush1.xpose.msra.mxu0 %v655
        %662 = vmatprep.subr.mxu0 0.0
        %663 = vmatpush1.xpose.msra.mxu0 %v658
        %664 = vmatprep.subr.mxu0 0.0
        %665 = vmatpush1.xpose.msra.mxu0 0.0
        %666 = vmatprep.subr.mxu0 0.0
        %667 = vmatpush1.xpose.msra.mxu0 0.0
        %668 = vmatprep.subr.mxu0 0.0
        %669 = vmatpush1.xpose.msra.mxu0 0.0
        %670 = vmatprep.subr.mxu0 0.0
        %671 = vmatpush1.xpose.msra.mxu0 0.0
        %672 = vmatprep.subr.mxu0 0.0
        %673 = vmatpush1.xpose.msra.mxu0 0.0
        %674 = vmatprep.subr.mxu0 0.0
        %675 = vmatpush1.xpose.msra.mxu0 0.0
        %676 = vmatprep.subr.mxu0 0.0
        %677 = vmatpush1.xpose.msra.mxu0 0.0
        %678 = vmatprep.subr.mxu0 0.0
        %679 = vmatpush1.xpose.msra.mxu0 0.0
        %680 = vmatprep.subr.mxu0 0.0
        %681 = vmatpush1.xpose.msra.mxu0 0.0
        %682 = vmatprep.subr.mxu0 0.0
        %683 = vmatpush1.xpose.msra.mxu0 0.0
        %684 = vmatprep.subr.mxu0 0.0
        %685 = vmatpush1.xpose.msra.mxu0 0.0
        %686 = vmatprep.subr.mxu0 0.0
        %687 = vmatpush1.xpose.msra.mxu0 0.0
        %688 = vmatprep.subr.mxu0 0.0
        %689 = vmatpush1.xpose.msra.mxu0 0.0
        %690 = vmatprep.subr.mxu0 0.0
        %691 = vmatpush1.xpose.msra.mxu0 0.0
        %692 = vmatprep.subr.mxu0 0.0
        %693 = vmatpush1.xpose.msra.mxu0 0.0
        %694 = vmatprep.subr.mxu0 0.0
        %695 = vmatpush1.xpose.msra.mxu0 0.0
        %696 = vmatprep.subr.mxu0 0.0
        %697 = vmatpush1.xpose.msra.mxu0 0.0
        %698 = vmatprep.subr.mxu0 0.0
        %699 = vmatpush1.xpose.msra.mxu0 0.0
        %700 = vmatprep.subr.mxu0 0.0
        %701 = vmatpush1.xpose.msra.mxu0 0.0
        %702 = vmatprep.subr.mxu0 0.0
        %703 = vmatpush1.xpose.msra.mxu0 0.0
        %704 = vmatprep.subr.mxu0 0.0
        %705 = vmatpush1.xpose.msra.mxu0 0.0
        %706 = vmatprep.subr.mxu0 0.0
        %707 = vmatpush1.xpose.msra.mxu0 0.0
        %708 = vmatprep.subr.mxu0 0.0
        %709 = vmatpush1.xpose.msra.mxu0 0.0
        %710 = vmatprep.subr.mxu0 0.0
        %711 = vmatpush1.xpose.msra.mxu0 0.0
        %712 = vmatprep.subr.mxu0 0.0
        %713 = vmatpush1.xpose.msra.mxu0 0.0
        %714 = vmatprep.subr.mxu0 0.0
        %715 = vmatpush1.xpose.msra.mxu0 0.0
        %716 = vmatprep.subr.mxu0 0.0
        %717 = vmatpush1.xpose.msra.mxu0 0.0
        %718 = vmatprep.subr.mxu0 0.0
        %719 = vmatpush1.xpose.msra.mxu0 0.0
        %720 = vmatprep.subr.mxu0 0.0
        %721 = vmatpush1.xpose.msra.mxu0 0.0
        %722 = vmatprep.subr.mxu0 0.0
        %723 = vmatpush1.xpose.msra.mxu0 0.0
        %724 = vmatprep.mubr.f32.mxu0 0.0
        %725 = vmatmul.mubr.f32.gmra.mrb[0].mxu0 %v652
        %v726 = vpop.f32.mrb[0].mxu0
        %v727 = vadd.f32 0.0, %v726
        %v728 = vpop.f32.mrb[0].mxu0
        %729 = vdwg.mxu0
        %v731 = vsel %vm650, %v627, 0
        %v734 = vsel %vm650, %v636, 0
        %v737 = vsel %vm650, %v637, 0
        %739 = vmatprep.subr.mxu0 0.0
        %740 = vmatpush1.xpose.msra.mxu0 %v734
        %741 = vmatprep.subr.mxu0 0.0
        %742 = vmatpush1.xpose.msra.mxu0 %v737
        %743 = vmatprep.subr.mxu0 0.0
        %744 = vmatpush1.xpose.msra.mxu0 0.0
        %745 = vmatprep.subr.mxu0 0.0
        %746 = vmatpush1.xpose.msra.mxu0 0.0
        %747 = vmatprep.subr.mxu0 0.0
        %748 = vmatpush1.xpose.msra.mxu0 0.0
        %749 = vmatprep.subr.mxu0 0.0
        %750 = vmatpush1.xpose.msra.mxu0 0.0
        %751 = vmatprep.subr.mxu0 0.0
        %752 = vmatpush1.xpose.msra.mxu0 0.0
        %753 = vmatprep.subr.mxu0 0.0
        %754 = vmatpush1.xpose.msra.mxu0 0.0
        %755 = vmatprep.subr.mxu0 0.0
        %756 = vmatpush1.xpose.msra.mxu0 0.0
        %757 = vmatprep.subr.mxu0 0.0
        %758 = vmatpush1.xpose.msra.mxu0 0.0
        %759 = vmatprep.subr.mxu0 0.0
        %760 = vmatpush1.xpose.msra.mxu0 0.0
        %761 = vmatprep.subr.mxu0 0.0
        %762 = vmatpush1.xpose.msra.mxu0 0.0
        %763 = vmatprep.subr.mxu0 0.0
        %764 = vmatpush1.xpose.msra.mxu0 0.0
        %765 = vmatprep.subr.mxu0 0.0
        %766 = vmatpush1.xpose.msra.mxu0 0.0
        %767 = vmatprep.subr.mxu0 0.0
        %768 = vmatpush1.xpose.msra.mxu0 0.0
        %769 = vmatprep.subr.mxu0 0.0
        %770 = vmatpush1.xpose.msra.mxu0 0.0
        %771 = vmatprep.subr.mxu0 0.0
        %772 = vmatpush1.xpose.msra.mxu0 0.0
        %773 = vmatprep.subr.mxu0 0.0
        %774 = vmatpush1.xpose.msra.mxu0 0.0
        %775 = vmatprep.subr.mxu0 0.0
        %776 = vmatpush1.xpose.msra.mxu0 0.0
        %777 = vmatprep.subr.mxu0 0.0
        %778 = vmatpush1.xpose.msra.mxu0 0.0
        %779 = vmatprep.subr.mxu0 0.0
        %780 = vmatpush1.xpose.msra.mxu0 0.0
        %781 = vmatprep.subr.mxu0 0.0
        %782 = vmatpush1.xpose.msra.mxu0 0.0
        %783 = vmatprep.subr.mxu0 0.0
        %784 = vmatpush1.xpose.msra.mxu0 0.0
        %785 = vmatprep.subr.mxu0 0.0
        %786 = vmatpush1.xpose.msra.mxu0 0.0
        %787 = vmatprep.subr.mxu0 0.0
        %788 = vmatpush1.xpose.msra.mxu0 0.0
        %789 = vmatprep.subr.mxu0 0.0
        %790 = vmatpush1.xpose.msra.mxu0 0.0
        %791 = vmatprep.subr.mxu0 0.0
        %792 = vmatpush1.xpose.msra.mxu0 0.0
        %793 = vmatprep.subr.mxu0 0.0
        %794 = vmatpush1.xpose.msra.mxu0 0.0
        %795 = vmatprep.subr.mxu0 0.0
        %796 = vmatpush1.xpose.msra.mxu0 0.0
        %797 = vmatprep.subr.mxu0 0.0
        %798 = vmatpush1.xpose.msra.mxu0 0.0
        %799 = vmatprep.subr.mxu0 0.0
        %800 = vmatpush1.xpose.msra.mxu0 0.0
        %801 = vmatprep.subr.mxu0 0.0
        %802 = vmatpush1.xpose.msra.mxu0 0.0
        %803 = vmatprep.mubr.f32.mxu0 0.0
        %804 = vmatmul.mubr.f32.gmra.mrb[0].mxu0 %v731
        %v805 = vpop.f32.mrb[0].mxu0
        %v806 = vadd.f32 0.0, %v805
        %v807 = vpop.f32.mrb[0].mxu0
        %808 = vdwg.mxu0
        %v810 = vsel %vm650, %v628, 0
        %v813 = vsel %vm650, %v638, 0
        %v816 = vsel %vm650, %v639, 0
        %818 = vmatprep.subr.mxu0 0.0
        %819 = vmatpush1.xpose.msra.mxu0 %v813
        %820 = vmatprep.subr.mxu0 0.0
        %821 = vmatpush1.xpose.msra.mxu0 %v816
        %822 = vmatprep.subr.mxu0 0.0
        %823 = vmatpush1.xpose.msra.mxu0 0.0
        %824 = vmatprep.subr.mxu0 0.0
        %825 = vmatpush1.xpose.msra.mxu0 0.0
        %826 = vmatprep.subr.mxu0 0.0
        %827 = vmatpush1.xpose.msra.mxu0 0.0
        %828 = vmatprep.subr.mxu0 0.0
        %829 = vmatpush1.xpose.msra.mxu0 0.0
        %830 = vmatprep.subr.mxu0 0.0
        %831 = vmatpush1.xpose.msra.mxu0 0.0
        %832 = vmatprep.subr.mxu0 0.0
        %833 = vmatpush1.xpose.msra.mxu0 0.0
        %834 = vmatprep.subr.mxu0 0.0
        %835 = vmatpush1.xpose.msra.mxu0 0.0
        %836 = vmatprep.subr.mxu0 0.0
        %837 = vmatpush1.xpose.msra.mxu0 0.0
        %838 = vmatprep.subr.mxu0 0.0
        %839 = vmatpush1.xpose.msra.mxu0 0.0
        %840 = vmatprep.subr.mxu0 0.0
        %841 = vmatpush1.xpose.msra.mxu0 0.0
        %842 = vmatprep.subr.mxu0 0.0
        %843 = vmatpush1.xpose.msra.mxu0 0.0
        %844 = vmatprep.subr.mxu0 0.0
        %845 = vmatpush1.xpose.msra.mxu0 0.0
        %846 = vmatprep.subr.mxu0 0.0
        %847 = vmatpush1.xpose.msra.mxu0 0.0
        %848 = vmatprep.subr.mxu0 0.0
        %849 = vmatpush1.xpose.msra.mxu0 0.0
        %850 = vmatprep.subr.mxu0 0.0
        %851 = vmatpush1.xpose.msra.mxu0 0.0
        %852 = vmatprep.subr.mxu0 0.0
        %853 = vmatpush1.xpose.msra.mxu0 0.0
        %854 = vmatprep.subr.mxu0 0.0
        %855 = vmatpush1.xpose.msra.mxu0 0.0
        %856 = vmatprep.subr.mxu0 0.0
        %857 = vmatpush1.xpose.msra.mxu0 0.0
        %858 = vmatprep.subr.mxu0 0.0
        %859 = vmatpush1.xpose.msra.mxu0 0.0
        %860 = vmatprep.subr.mxu0 0.0
        %861 = vmatpush1.xpose.msra.mxu0 0.0
        %862 = vmatprep.subr.mxu0 0.0
        %863 = vmatpush1.xpose.msra.mxu0 0.0
        %864 = vmatprep.subr.mxu0 0.0
        %865 = vmatpush1.xpose.msra.mxu0 0.0
        %866 = vmatprep.subr.mxu0 0.0
        %867 = vmatpush1.xpose.msra.mxu0 0.0
        %868 = vmatprep.subr.mxu0 0.0
        %869 = vmatpush1.xpose.msra.mxu0 0.0
        %870 = vmatprep.subr.mxu0 0.0
        %871 = vmatpush1.xpose.msra.mxu0 0.0
        %872 = vmatprep.subr.mxu0 0.0
        %873 = vmatpush1.xpose.msra.mxu0 0.0
        %874 = vmatprep.subr.mxu0 0.0
        %875 = vmatpush1.xpose.msra.mxu0 0.0
        %876 = vmatprep.subr.mxu0 0.0
        %877 = vmatpush1.xpose.msra.mxu0 0.0
        %878 = vmatprep.subr.mxu0 0.0
        %879 = vmatpush1.xpose.msra.mxu0 0.0
        %880 = vmatprep.subr.mxu0 0.0
        %881 = vmatpush1.xpose.msra.mxu0 0.0
        %882 = vmatprep.mubr.f32.mxu0 0.0
        %883 = vmatmul.mubr.f32.gmra.mrb[0].mxu0 %v810
        %v884 = vpop.f32.mrb[0].mxu0
        %v885 = vadd.f32 0.0, %v884
        %v886 = vpop.f32.mrb[0].mxu0
        %887 = vdwg.mxu0
        %v889 = vsel %vm650, %v629, 0
        %v892 = vsel %vm650, %v640, 0
        %v895 = vsel %vm650, %v641, 0
        %897 = vmatprep.subr.mxu0 0.0
        %898 = vmatpush1.xpose.msra.mxu0 %v892
        %899 = vmatprep.subr.mxu0 0.0
        %900 = vmatpush1.xpose.msra.mxu0 %v895
        %901 = vmatprep.subr.mxu0 0.0
        %902 = vmatpush1.xpose.msra.mxu0 0.0
        %903 = vmatprep.subr.mxu0 0.0
        %904 = vmatpush1.xpose.msra.mxu0 0.0
        %905 = vmatprep.subr.mxu0 0.0
        %906 = vmatpush1.xpose.msra.mxu0 0.0
        %907 = vmatprep.subr.mxu0 0.0
        %908 = vmatpush1.xpose.msra.mxu0 0.0
        %909 = vmatprep.subr.mxu0 0.0
        %910 = vmatpush1.xpose.msra.mxu0 0.0
        %911 = vmatprep.subr.mxu0 0.0
        %912 = vmatpush1.xpose.msra.mxu0 0.0
        %913 = vmatprep.subr.mxu0 0.0
        %914 = vmatpush1.xpose.msra.mxu0 0.0
        %915 = vmatprep.subr.mxu0 0.0
        %916 = vmatpush1.xpose.msra.mxu0 0.0
        %917 = vmatprep.subr.mxu0 0.0
        %918 = vmatpush1.xpose.msra.mxu0 0.0
        %919 = vmatprep.subr.mxu0 0.0
        %920 = vmatpush1.xpose.msra.mxu0 0.0
        %921 = vmatprep.subr.mxu0 0.0
        %922 = vmatpush1.xpose.msra.mxu0 0.0
        %923 = vmatprep.subr.mxu0 0.0
        %924 = vmatpush1.xpose.msra.mxu0 0.0
        %925 = vmatprep.subr.mxu0 0.0
        %926 = vmatpush1.xpose.msra.mxu0 0.0
        %927 = vmatprep.subr.mxu0 0.0
        %928 = vmatpush1.xpose.msra.mxu0 0.0
        %929 = vmatprep.subr.mxu0 0.0
        %930 = vmatpush1.xpose.msra.mxu0 0.0
        %931 = vmatprep.subr.mxu0 0.0
        %932 = vmatpush1.xpose.msra.mxu0 0.0
        %933 = vmatprep.subr.mxu0 0.0
        %934 = vmatpush1.xpose.msra.mxu0 0.0
        %935 = vmatprep.subr.mxu0 0.0
        %936 = vmatpush1.xpose.msra.mxu0 0.0
        %937 = vmatprep.subr.mxu0 0.0
        %938 = vmatpush1.xpose.msra.mxu0 0.0
        %939 = vmatprep.subr.mxu0 0.0
        %940 = vmatpush1.xpose.msra.mxu0 0.0
        %941 = vmatprep.subr.mxu0 0.0
        %942 = vmatpush1.xpose.msra.mxu0 0.0
        %943 = vmatprep.subr.mxu0 0.0
        %944 = vmatpush1.xpose.msra.mxu0 0.0
        %945 = vmatprep.subr.mxu0 0.0
        %946 = vmatpush1.xpose.msra.mxu0 0.0
        %947 = vmatprep.subr.mxu0 0.0
        %948 = vmatpush1.xpose.msra.mxu0 0.0
        %949 = vmatprep.subr.mxu0 0.0
        %950 = vmatpush1.xpose.msra.mxu0 0.0
        %951 = vmatprep.subr.mxu0 0.0
        %952 = vmatpush1.xpose.msra.mxu0 0.0
        %953 = vmatprep.subr.mxu0 0.0
        %954 = vmatpush1.xpose.msra.mxu0 0.0
        %955 = vmatprep.subr.mxu0 0.0
        %956 = vmatpush1.xpose.msra.mxu0 0.0
        %957 = vmatprep.subr.mxu0 0.0
        %958 = vmatpush1.xpose.msra.mxu0 0.0
        %959 = vmatprep.subr.mxu0 0.0
        %960 = vmatpush1.xpose.msra.mxu0 0.0
        %961 = vmatprep.mubr.f32.mxu0 0.0
        %962 = vmatmul.mubr.f32.gmra.mrb[0].mxu0 %v889
        %v963 = vpop.f32.mrb[0].mxu0
        %v964 = vadd.f32 0.0, %v963
        %v965 = vpop.f32.mrb[0].mxu0
        %966 = vdwg.mxu0
        %v968 = vsel %vm650, %v630, 0
        %v971 = vsel %vm650, %v642, 0
        %v974 = vsel %vm650, %v643, 0
        %976 = vmatprep.subr.mxu0 0.0
        %977 = vmatpush1.xpose.msra.mxu0 %v971
        %978 = vmatprep.subr.mxu0 0.0
        %979 = vmatpush1.xpose.msra.mxu0 %v974
        %980 = vmatprep.subr.mxu0 0.0
        %981 = vmatpush1.xpose.msra.mxu0 0.0
        %982 = vmatprep.subr.mxu0 0.0
        %983 = vmatpush1.xpose.msra.mxu0 0.0
        %984 = vmatprep.subr.mxu0 0.0
        %985 = vmatpush1.xpose.msra.mxu0 0.0
        %986 = vmatprep.subr.mxu0 0.0
        %987 = vmatpush1.xpose.msra.mxu0 0.0
        %988 = vmatprep.subr.mxu0 0.0
        %989 = vmatpush1.xpose.msra.mxu0 0.0
        %990 = vmatprep.subr.mxu0 0.0
        %991 = vmatpush1.xpose.msra.mxu0 0.0
        %992 = vmatprep.subr.mxu0 0.0
        %993 = vmatpush1.xpose.msra.mxu0 0.0
        %994 = vmatprep.subr.mxu0 0.0
        %995 = vmatpush1.xpose.msra.mxu0 0.0
        %996 = vmatprep.subr.mxu0 0.0
        %997 = vmatpush1.xpose.msra.mxu0 0.0
        %998 = vmatprep.subr.mxu0 0.0
        %999 = vmatpush1.xpose.msra.mxu0 0.0
        %1000 = vmatprep.subr.mxu0 0.0
        %1001 = vmatpush1.xpose.msra.mxu0 0.0
        %1002 = vmatprep.subr.mxu0 0.0
        %1003 = vmatpush1.xpose.msra.mxu0 0.0
        %1004 = vmatprep.subr.mxu0 0.0
        %1005 = vmatpush1.xpose.msra.mxu0 0.0
        %1006 = vmatprep.subr.mxu0 0.0
        %1007 = vmatpush1.xpose.msra.mxu0 0.0
        %1008 = vmatprep.subr.mxu0 0.0
        %1009 = vmatpush1.xpose.msra.mxu0 0.0
        %1010 = vmatprep.subr.mxu0 0.0
        %1011 = vmatpush1.xpose.msra.mxu0 0.0
        %1012 = vmatprep.subr.mxu0 0.0
        %1013 = vmatpush1.xpose.msra.mxu0 0.0
        %1014 = vmatprep.subr.mxu0 0.0
        %1015 = vmatpush1.xpose.msra.mxu0 0.0
        %1016 = vmatprep.subr.mxu0 0.0
        %1017 = vmatpush1.xpose.msra.mxu0 0.0
        %1018 = vmatprep.subr.mxu0 0.0
        %1019 = vmatpush1.xpose.msra.mxu0 0.0
        %1020 = vmatprep.subr.mxu0 0.0
        %1021 = vmatpush1.xpose.msra.mxu0 0.0
        %1022 = vmatprep.subr.mxu0 0.0
        %1023 = vmatpush1.xpose.msra.mxu0 0.0
        %1024 = vmatprep.subr.mxu0 0.0
        %1025 = vmatpush1.xpose.msra.mxu0 0.0
        %1026 = vmatprep.subr.mxu0 0.0
        %1027 = vmatpush1.xpose.msra.mxu0 0.0
        %1028 = vmatprep.subr.mxu0 0.0
        %1029 = vmatpush1.xpose.msra.mxu0 0.0
        %1030 = vmatprep.subr.mxu0 0.0
        %1031 = vmatpush1.xpose.msra.mxu0 0.0
        %1032 = vmatprep.subr.mxu0 0.0
        %1033 = vmatpush1.xpose.msra.mxu0 0.0
        %1034 = vmatprep.subr.mxu0 0.0
        %1035 = vmatpush1.xpose.msra.mxu0 0.0
        %1036 = vmatprep.subr.mxu0 0.0
        %1037 = vmatpush1.xpose.msra.mxu0 0.0
        %1038 = vmatprep.subr.mxu0 0.0
        %1039 = vmatpush1.xpose.msra.mxu0 0.0
        %1040 = vmatprep.mubr.f32.mxu0 0.0
        %1041 = vmatmul.mubr.f32.gmra.mrb[0].mxu0 %v968
        %v1042 = vpop.f32.mrb[0].mxu0
        %v1043 = vadd.f32 0.0, %v1042
        %v1044 = vpop.f32.mrb[0].mxu0
        %1045 = vdwg.mxu0
        %v1047 = vsel %vm650, %v631, 0
        %v1050 = vsel %vm650, %v644, 0
        %v1053 = vsel %vm650, %v645, 0
        %1055 = vmatprep.subr.mxu0 0.0
        %1056 = vmatpush1.xpose.msra.mxu0 %v1050
        %1057 = vmatprep.subr.mxu0 0.0
        %1058 = vmatpush1.xpose.msra.mxu0 %v1053
        %1059 = vmatprep.subr.mxu0 0.0
        %1060 = vmatpush1.xpose.msra.mxu0 0.0
        %1061 = vmatprep.subr.mxu0 0.0
        %1062 = vmatpush1.xpose.msra.mxu0 0.0
        %1063 = vmatprep.subr.mxu0 0.0
        %1064 = vmatpush1.xpose.msra.mxu0 0.0
        %1065 = vmatprep.subr.mxu0 0.0
        %1066 = vmatpush1.xpose.msra.mxu0 0.0
        %1067 = vmatprep.subr.mxu0 0.0
        %1068 = vmatpush1.xpose.msra.mxu0 0.0
        %1069 = vmatprep.subr.mxu0 0.0
        %1070 = vmatpush1.xpose.msra.mxu0 0.0
        %1071 = vmatprep.subr.mxu0 0.0
        %1072 = vmatpush1.xpose.msra.mxu0 0.0
        %1073 = vmatprep.subr.mxu0 0.0
        %1074 = vmatpush1.xpose.msra.mxu0 0.0
        %1075 = vmatprep.subr.mxu0 0.0
        %1076 = vmatpush1.xpose.msra.mxu0 0.0
        %1077 = vmatprep.subr.mxu0 0.0
        %1078 = vmatpush1.xpose.msra.mxu0 0.0
        %1079 = vmatprep.subr.mxu0 0.0
        %1080 = vmatpush1.xpose.msra.mxu0 0.0
        %1081 = vmatprep.subr.mxu0 0.0
        %1082 = vmatpush1.xpose.msra.mxu0 0.0
        %1083 = vmatprep.subr.mxu0 0.0
        %1084 = vmatpush1.xpose.msra.mxu0 0.0
        %1085 = vmatprep.subr.mxu0 0.0
        %1086 = vmatpush1.xpose.msra.mxu0 0.0
        %1087 = vmatprep.subr.mxu0 0.0
        %1088 = vmatpush1.xpose.msra.mxu0 0.0
        %1089 = vmatprep.subr.mxu0 0.0
        %1090 = vmatpush1.xpose.msra.mxu0 0.0
        %1091 = vmatprep.subr.mxu0 0.0
        %1092 = vmatpush1.xpose.msra.mxu0 0.0
        %1093 = vmatprep.subr.mxu0 0.0
        %1094 = vmatpush1.xpose.msra.mxu0 0.0
        %1095 = vmatprep.subr.mxu0 0.0
        %1096 = vmatpush1.xpose.msra.mxu0 0.0
        %1097 = vmatprep.subr.mxu0 0.0
        %1098 = vmatpush1.xpose.msra.mxu0 0.0
        %1099 = vmatprep.subr.mxu0 0.0
        %1100 = vmatpush1.xpose.msra.mxu0 0.0
        %1101 = vmatprep.subr.mxu0 0.0
        %1102 = vmatpush1.xpose.msra.mxu0 0.0
        %1103 = vmatprep.subr.mxu0 0.0
        %1104 = vmatpush1.xpose.msra.mxu0 0.0
        %1105 = vmatprep.subr.mxu0 0.0
        %1106 = vmatpush1.xpose.msra.mxu0 0.0
        %1107 = vmatprep.subr.mxu0 0.0
        %1108 = vmatpush1.xpose.msra.mxu0 0.0
        %1109 = vmatprep.subr.mxu0 0.0
        %1110 = vmatpush1.xpose.msra.mxu0 0.0
        %1111 = vmatprep.subr.mxu0 0.0
        %1112 = vmatpush1.xpose.msra.mxu0 0.0
        %1113 = vmatprep.subr.mxu0 0.0
        %1114 = vmatpush1.xpose.msra.mxu0 0.0
        %1115 = vmatprep.subr.mxu0 0.0
        %1116 = vmatpush1.xpose.msra.mxu0 0.0
        %1117 = vmatprep.subr.mxu0 0.0
        %1118 = vmatpush1.xpose.msra.mxu0 0.0
        %1119 = vmatprep.mubr.f32.mxu0 0.0
        %1120 = vmatmul.mubr.f32.gmra.mrb[0].mxu0 %v1047
        %v1121 = vpop.f32.mrb[0].mxu0
        %v1122 = vadd.f32 0.0, %v1121
        %v1123 = vpop.f32.mrb[0].mxu0
        %1124 = vdwg.mxu0
        %v1126 = vsel %vm650, %v632, 0
        %v1129 = vsel %vm650, %v646, 0
        %v1132 = vsel %vm650, %v647, 0
        %1134 = vmatprep.subr.mxu0 0.0
        %1135 = vmatpush1.xpose.msra.mxu0 %v1129
        %1136 = vmatprep.subr.mxu0 0.0
        %1137 = vmatpush1.xpose.msra.mxu0 %v1132
        %1138 = vmatprep.subr.mxu0 0.0
        %1139 = vmatpush1.xpose.msra.mxu0 0.0
        %1140 = vmatprep.subr.mxu0 0.0
        %1141 = vmatpush1.xpose.msra.mxu0 0.0
        %1142 = vmatprep.subr.mxu0 0.0
        %1143 = vmatpush1.xpose.msra.mxu0 0.0
        %1144 = vmatprep.subr.mxu0 0.0
        %1145 = vmatpush1.xpose.msra.mxu0 0.0
        %1146 = vmatprep.subr.mxu0 0.0
        %1147 = vmatpush1.xpose.msra.mxu0 0.0
        %1148 = vmatprep.subr.mxu0 0.0
        %1149 = vmatpush1.xpose.msra.mxu0 0.0
        %1150 = vmatprep.subr.mxu0 0.0
        %1151 = vmatpush1.xpose.msra.mxu0 0.0
        %1152 = vmatprep.subr.mxu0 0.0
        %1153 = vmatpush1.xpose.msra.mxu0 0.0
        %1154 = vmatprep.subr.mxu0 0.0
        %1155 = vmatpush1.xpose.msra.mxu0 0.0
        %1156 = vmatprep.subr.mxu0 0.0
        %1157 = vmatpush1.xpose.msra.mxu0 0.0
        %1158 = vmatprep.subr.mxu0 0.0
        %1159 = vmatpush1.xpose.msra.mxu0 0.0
        %1160 = vmatprep.subr.mxu0 0.0
        %1161 = vmatpush1.xpose.msra.mxu0 0.0
        %1162 = vmatprep.subr.mxu0 0.0
        %1163 = vmatpush1.xpose.msra.mxu0 0.0
        %1164 = vmatprep.subr.mxu0 0.0
        %1165 = vmatpush1.xpose.msra.mxu0 0.0
        %1166 = vmatprep.subr.mxu0 0.0
        %1167 = vmatpush1.xpose.msra.mxu0 0.0
        %1168 = vmatprep.subr.mxu0 0.0
        %1169 = vmatpush1.xpose.msra.mxu0 0.0
        %1170 = vmatprep.subr.mxu0 0.0
        %1171 = vmatpush1.xpose.msra.mxu0 0.0
        %1172 = vmatprep.subr.mxu0 0.0
        %1173 = vmatpush1.xpose.msra.mxu0 0.0
        %1174 = vmatprep.subr.mxu0 0.0
        %1175 = vmatpush1.xpose.msra.mxu0 0.0
        %1176 = vmatprep.subr.mxu0 0.0
        %1177 = vmatpush1.xpose.msra.mxu0 0.0
        %1178 = vmatprep.subr.mxu0 0.0
        %1179 = vmatpush1.xpose.msra.mxu0 0.0
        %1180 = vmatprep.subr.mxu0 0.0
        %1181 = vmatpush1.xpose.msra.mxu0 0.0
        %1182 = vmatprep.subr.mxu0 0.0
        %1183 = vmatpush1.xpose.msra.mxu0 0.0
        %1184 = vmatprep.subr.mxu0 0.0
        %1185 = vmatpush1.xpose.msra.mxu0 0.0
        %1186 = vmatprep.subr.mxu0 0.0
        %1187 = vmatpush1.xpose.msra.mxu0 0.0
        %1188 = vmatprep.subr.mxu0 0.0
        %1189 = vmatpush1.xpose.msra.mxu0 0.0
        %1190 = vmatprep.subr.mxu0 0.0
        %1191 = vmatpush1.xpose.msra.mxu0 0.0
        %1192 = vmatprep.subr.mxu0 0.0
        %1193 = vmatpush1.xpose.msra.mxu0 0.0
        %1194 = vmatprep.subr.mxu0 0.0
        %1195 = vmatpush1.xpose.msra.mxu0 0.0
        %1196 = vmatprep.subr.mxu0 0.0
        %1197 = vmatpush1.xpose.msra.mxu0 0.0
        %1198 = vmatprep.mubr.f32.mxu0 0.0
        %1199 = vmatmul.mubr.f32.gmra.mrb[0].mxu0 %v1126
        %v1200 = vpop.f32.mrb[0].mxu0
        %v1201 = vadd.f32 0.0, %v1200
        %v1202 = vpop.f32.mrb[0].mxu0
        %1203 = vdwg.mxu0
        %v1205 = vsel %vm650, %v633, 0
        %v1208 = vsel %vm650, %v648, 0
        %v1211 = vsel %vm650, %v649, 0
        %1213 = vmatprep.subr.mxu0 0.0
        %1214 = vmatpush1.xpose.msra.mxu0 %v1208
        %1215 = vmatprep.subr.mxu0 0.0
        %1216 = vmatpush1.xpose.msra.mxu0 %v1211
        %1217 = vmatprep.subr.mxu0 0.0
        %1218 = vmatpush1.xpose.msra.mxu0 0.0
        %1219 = vmatprep.subr.mxu0 0.0
        %1220 = vmatpush1.xpose.msra.mxu0 0.0
        %1221 = vmatprep.subr.mxu0 0.0
        %1222 = vmatpush1.xpose.msra.mxu0 0.0
        %1223 = vmatprep.subr.mxu0 0.0
        %1224 = vmatpush1.xpose.msra.mxu0 0.0
        %1225 = vmatprep.subr.mxu0 0.0
        %1226 = vmatpush1.xpose.msra.mxu0 0.0
        %1227 = vmatprep.subr.mxu0 0.0
        %1228 = vmatpush1.xpose.msra.mxu0 0.0
        %1229 = vmatprep.subr.mxu0 0.0
        %1230 = vmatpush1.xpose.msra.mxu0 0.0
        %1231 = vmatprep.subr.mxu0 0.0
        %1232 = vmatpush1.xpose.msra.mxu0 0.0
        %1233 = vmatprep.subr.mxu0 0.0
        %1234 = vmatpush1.xpose.msra.mxu0 0.0
        %1235 = vmatprep.subr.mxu0 0.0
        %1236 = vmatpush1.xpose.msra.mxu0 0.0
        %1237 = vmatprep.subr.mxu0 0.0
        %1238 = vmatpush1.xpose.msra.mxu0 0.0
        %1239 = vmatprep.subr.mxu0 0.0
        %1240 = vmatpush1.xpose.msra.mxu0 0.0
        %1241 = vmatprep.subr.mxu0 0.0
        %1242 = vmatpush1.xpose.msra.mxu0 0.0
        %1243 = vmatprep.subr.mxu0 0.0
        %1244 = vmatpush1.xpose.msra.mxu0 0.0
        %1245 = vmatprep.subr.mxu0 0.0
        %1246 = vmatpush1.xpose.msra.mxu0 0.0
        %1247 = vmatprep.subr.mxu0 0.0
        %1248 = vmatpush1.xpose.msra.mxu0 0.0
        %1249 = vmatprep.subr.mxu0 0.0
        %1250 = vmatpush1.xpose.msra.mxu0 0.0
        %1251 = vmatprep.subr.mxu0 0.0
        %1252 = vmatpush1.xpose.msra.mxu0 0.0
        %1253 = vmatprep.subr.mxu0 0.0
        %1254 = vmatpush1.xpose.msra.mxu0 0.0
        %1255 = vmatprep.subr.mxu0 0.0
        %1256 = vmatpush1.xpose.msra.mxu0 0.0
        %1257 = vmatprep.subr.mxu0 0.0
        %1258 = vmatpush1.xpose.msra.mxu0 0.0
        %1259 = vmatprep.subr.mxu0 0.0
        %1260 = vmatpush1.xpose.msra.mxu0 0.0
        %1261 = vmatprep.subr.mxu0 0.0
        %1262 = vmatpush1.xpose.msra.mxu0 0.0
        %1263 = vmatprep.subr.mxu0 0.0
        %1264 = vmatpush1.xpose.msra.mxu0 0.0
        %1265 = vmatprep.subr.mxu0 0.0
        %1266 = vmatpush1.xpose.msra.mxu0 0.0
        %1267 = vmatprep.subr.mxu0 0.0
        %1268 = vmatpush1.xpose.msra.mxu0 0.0
        %1269 = vmatprep.subr.mxu0 0.0
        %1270 = vmatpush1.xpose.msra.mxu0 0.0
        %1271 = vmatprep.subr.mxu0 0.0
        %1272 = vmatpush1.xpose.msra.mxu0 0.0
        %1273 = vmatprep.subr.mxu0 0.0
        %1274 = vmatpush1.xpose.msra.mxu0 0.0
        %1275 = vmatprep.subr.mxu0 0.0
        %1276 = vmatpush1.xpose.msra.mxu0 0.0
        %1277 = vmatprep.mubr.f32.mxu0 0.0
        %1278 = vmatmul.mubr.f32.gmra.mrb[0].mxu0 %v1205
        %v1279 = vpop.f32.mrb[0].mxu0
        %v1280 = vadd.f32 0.0, %v1279
        %v1281 = vpop.f32.mrb[0].mxu0
        %1282 = vdwg.mxu0
        %vm1283 = vcmask 130048
        %v1284 = vsel %vm1283, %v727, -inf
        %1285 = vmax.xlane.f32.xlu0 %v1284
        %v1286 = vpop.xlane.xlu0 %1285
        %v1287 = vsel %vm1283, %v806, -inf
        %1288 = vmax.xlane.f32.xlu0 %v1287
        %v1289 = vpop.xlane.xlu0 %1288
        %v1290 = vsel %vm1283, %v885, -inf
        %1291 = vmax.xlane.f32.xlu0 %v1290
        %v1292 = vpop.xlane.xlu0 %1291
        %v1293 = vsel %vm1283, %v964, -inf
        %1294 = vmax.xlane.f32.xlu0 %v1293
        %v1295 = vpop.xlane.xlu0 %1294
        %v1296 = vsel %vm1283, %v1043, -inf
        %1297 = vmax.xlane.f32.xlu0 %v1296
        %v1298 = vpop.xlane.xlu0 %1297
        %v1299 = vsel %vm1283, %v1122, -inf
        %1300 = vmax.xlane.f32.xlu0 %v1299
        %v1301 = vpop.xlane.xlu0 %1300
        %v1302 = vsel %vm1283, %v1201, -inf
        %1303 = vmax.xlane.f32.xlu0 %v1302
        %v1304 = vpop.xlane.xlu0 %1303
        %v1305 = vsel %vm1283, %v1280, -inf
        %1306 = vmax.xlane.f32.xlu0 %v1305
        %v1307 = vpop.xlane.xlu0 %1306
        %v1308 = vsub.f32 %v727, %v1286
        %v1309 = vsub.f32 %v806, %v1289
        %v1310 = vsub.f32 %v885, %v1292
        %v1311 = vsub.f32 %v964, %v1295
        %v1312 = vsub.f32 %v1043, %v1298
        %v1313 = vsub.f32 %v1122, %v1301
        %v1314 = vsub.f32 %v1201, %v1304
        %v1315 = vsub.f32 %v1280, %v1307
        %v1316 = vmul.f32 %v1308, 1.442695
        %v1317 = vpow.pop %v1316
        %v1318 = vmul.f32 %v1309, 1.442695
        %v1319 = vpow.pop %v1318
        %v1320 = vmul.f32 %v1310, 1.442695
        %v1321 = vpow.pop %v1320
        %v1322 = vmul.f32 %v1311, 1.442695
        %v1323 = vpow.pop %v1322
        %v1324 = vmul.f32 %v1312, 1.442695
        %v1325 = vpow.pop %v1324
        %v1326 = vmul.f32 %v1313, 1.442695
        %v1327 = vpow.pop %v1326
        %v1328 = vmul.f32 %v1314, 1.442695
        %v1329 = vpow.pop %v1328
        %v1330 = vmul.f32 %v1315, 1.442695
        %v1331 = vpow.pop %v1330
        %v1332 = vsel %vm1283, %v1317, 0.0
        %1333 = vadd.xlane.f32.xlu0 %v1332
        %v1334 = vpop.xlane.xlu0 %1333
        %v1335 = vsel %vm1283, %v1319, 0.0
        %1336 = vadd.xlane.f32.xlu0 %v1335
        %v1337 = vpop.xlane.xlu0 %1336
        %v1338 = vsel %vm1283, %v1321, 0.0
        %1339 = vadd.xlane.f32.xlu0 %v1338
        %v1340 = vpop.xlane.xlu0 %1339
        %v1341 = vsel %vm1283, %v1323, 0.0
        %1342 = vadd.xlane.f32.xlu0 %v1341
        %v1343 = vpop.xlane.xlu0 %1342
        %v1344 = vsel %vm1283, %v1325, 0.0
        %1345 = vadd.xlane.f32.xlu0 %v1344
        %v1346 = vpop.xlane.xlu0 %1345
        %v1347 = vsel %vm1283, %v1327, 0.0
        %1348 = vadd.xlane.f32.xlu0 %v1347
        %v1349 = vpop.xlane.xlu0 %1348
        %v1350 = vsel %vm1283, %v1329, 0.0
        %1351 = vadd.xlane.f32.xlu0 %v1350
        %v1352 = vpop.xlane.xlu0 %1351
        %v1353 = vsel %vm1283, %v1331, 0.0
        %1354 = vadd.xlane.f32.xlu0 %v1353
        %v1355 = vpop.xlane.xlu0 %1354
        %v1356 = vrcp.pop %v1334
        %v1357 = vrcp.pop %v1337
        %v1358 = vrcp.pop %v1340
        %v1359 = vrcp.pop %v1343
        %v1360 = vrcp.pop %v1346
        %v1361 = vrcp.pop %v1349
        %v1362 = vrcp.pop %v1352
        %v1363 = vrcp.pop %v1355
        %v1364 = vmul.f32 %v1317, %v1356
        %v1365 = vmul.f32 %v1319, %v1357
        %v1366 = vmul.f32 %v1321, %v1358
        %v1367 = vmul.f32 %v1323, %v1359
        %v1368 = vmul.f32 %v1325, %v1360
        %v1369 = vmul.f32 %v1327, %v1361
        %v1370 = vmul.f32 %v1329, %v1362
        %v1371 = vmul.f32 %v1331, %v1363
        %v1372 = vrot.slane %v1284, 4
        %v1373 = vmax.f32 %v1284, %v1372
        %v1374 = vrot.slane %v1373, 2
        %v1375 = vmax.f32 %v1373, %v1374
        %v1376 = vrot.slane %v1375, 1
        %v1377 = vmax.f32 %v1375, %v1376
        %v1378 = vrot.slane %v1287, 4
        %v1379 = vmax.f32 %v1287, %v1378
        %v1380 = vrot.slane %v1379, 2
        %v1381 = vmax.f32 %v1379, %v1380
        %v1382 = vrot.slane %v1381, 1
        %v1383 = vmax.f32 %v1381, %v1382
        %v1384 = vrot.slane %v1290, 4
        %v1385 = vmax.f32 %v1290, %v1384
        %v1386 = vrot.slane %v1385, 2
        %v1387 = vmax.f32 %v1385, %v1386
        %v1388 = vrot.slane %v1387, 1
        %v1389 = vmax.f32 %v1387, %v1388
        %v1390 = vrot.slane %v1293, 4
        %v1391 = vmax.f32 %v1293, %v1390
        %v1392 = vrot.slane %v1391, 2
        %v1393 = vmax.f32 %v1391, %v1392
        %v1394 = vrot.slane %v1393, 1
        %v1395 = vmax.f32 %v1393, %v1394
        %v1396 = vrot.slane %v1296, 4
        %v1397 = vmax.f32 %v1296, %v1396
        %v1398 = vrot.slane %v1397, 2
        %v1399 = vmax.f32 %v1397, %v1398
        %v1400 = vrot.slane %v1399, 1
        %v1401 = vmax.f32 %v1399, %v1400
        %v1402 = vrot.slane %v1299, 4
        %v1403 = vmax.f32 %v1299, %v1402
        %v1404 = vrot.slane %v1403, 2
        %v1405 = vmax.f32 %v1403, %v1404
        %v1406 = vrot.slane %v1405, 1
        %v1407 = vmax.f32 %v1405, %v1406
        %v1408 = vrot.slane %v1302, 4
        %v1409 = vmax.f32 %v1302, %v1408
        %v1410 = vrot.slane %v1409, 2
        %v1411 = vmax.f32 %v1409, %v1410
        %v1412 = vrot.slane %v1411, 1
        %v1413 = vmax.f32 %v1411, %v1412
        %v1414 = vrot.slane %v1305, 4
        %v1415 = vmax.f32 %v1305, %v1414
        %v1416 = vrot.slane %v1415, 2
        %v1417 = vmax.f32 %v1415, %v1416
        %v1418 = vrot.slane %v1417, 1
        %v1419 = vmax.f32 %v1417, %v1418
        %v1420 = vsub.f32 %v727, %v1377
        %v1421 = vsub.f32 %v806, %v1383
        %v1422 = vsub.f32 %v885, %v1389
        %v1423 = vsub.f32 %v964, %v1395
        %v1424 = vsub.f32 %v1043, %v1401
        %v1425 = vsub.f32 %v1122, %v1407
        %v1426 = vsub.f32 %v1201, %v1413
        %v1427 = vsub.f32 %v1280, %v1419
        %v1428 = vmul.f32 %v1420, 1.442695
        %v1429 = vpow.pop %v1428
        %v1430 = vmul.f32 %v1421, 1.442695
        %v1431 = vpow.pop %v1430
        %v1432 = vmul.f32 %v1422, 1.442695
        %v1433 = vpow.pop %v1432
        %v1434 = vmul.f32 %v1423, 1.442695
        %v1435 = vpow.pop %v1434
        %v1436 = vmul.f32 %v1424, 1.442695
        %v1437 = vpow.pop %v1436
        %v1438 = vmul.f32 %v1425, 1.442695
        %v1439 = vpow.pop %v1438
        %v1440 = vmul.f32 %v1426, 1.442695
        %v1441 = vpow.pop %v1440
        %v1442 = vmul.f32 %v1427, 1.442695
        %v1443 = vpow.pop %v1442
        %v1444 = vsel %vm1283, %v1429, 0.0
        %v1445 = vrot.slane %v1444, 4
        %v1446 = vadd.f32 %v1444, %v1445
        %v1447 = vrot.slane %v1446, 2
        %v1448 = vadd.f32 %v1446, %v1447
        %v1449 = vrot.slane %v1448, 1
        %v1450 = vadd.f32 %v1448, %v1449
        %v1451 = vsel %vm1283, %v1431, 0.0
        %v1452 = vrot.slane %v1451, 4
        %v1453 = vadd.f32 %v1451, %v1452
        %v1454 = vrot.slane %v1453, 2
        %v1455 = vadd.f32 %v1453, %v1454
        %v1456 = vrot.slane %v1455, 1
        %v1457 = vadd.f32 %v1455, %v1456
        %v1458 = vsel %vm1283, %v1433, 0.0
        %v1459 = vrot.slane %v1458, 4
        %v1460 = vadd.f32 %v1458, %v1459
        %v1461 = vrot.slane %v1460, 2
        %v1462 = vadd.f32 %v1460, %v1461
        %v1463 = vrot.slane %v1462, 1
        %v1464 = vadd.f32 %v1462, %v1463
        %v1465 = vsel %vm1283, %v1435, 0.0
        %v1466 = vrot.slane %v1465, 4
        %v1467 = vadd.f32 %v1465, %v1466
        %v1468 = vrot.slane %v1467, 2
        %v1469 = vadd.f32 %v1467, %v1468
        %v1470 = vrot.slane %v1469, 1
        %v1471 = vadd.f32 %v1469, %v1470
        %v1472 = vsel %vm1283, %v1437, 0.0
        %v1473 = vrot.slane %v1472, 4
        %v1474 = vadd.f32 %v1472, %v1473
        %v1475 = vrot.slane %v1474, 2
        %v1476 = vadd.f32 %v1474, %v1475
        %v1477 = vrot.slane %v1476, 1
        %v1478 = vadd.f32 %v1476, %v1477
        %v1479 = vsel %vm1283, %v1439, 0.0
        %v1480 = vrot.slane %v1479, 4
        %v1481 = vadd.f32 %v1479, %v1480
        %v1482 = vrot.slane %v1481, 2
        %v1483 = vadd.f32 %v1481, %v1482
        %v1484 = vrot.slane %v1483, 1
        %v1485 = vadd.f32 %v1483, %v1484
        %v1486 = vsel %vm1283, %v1441, 0.0
        %v1487 = vrot.slane %v1486, 4
        %v1488 = vadd.f32 %v1486, %v1487
        %v1489 = vrot.slane %v1488, 2
        %v1490 = vadd.f32 %v1488, %v1489
        %v1491 = vrot.slane %v1490, 1
        %v1492 = vadd.f32 %v1490, %v1491
        %v1493 = vsel %vm1283, %v1443, 0.0
        %v1494 = vrot.slane %v1493, 4
        %v1495 = vadd.f32 %v1493, %v1494
        %v1496 = vrot.slane %v1495, 2
        %v1497 = vadd.f32 %v1495, %v1496
        %v1498 = vrot.slane %v1497, 1
        %v1499 = vadd.f32 %v1497, %v1498
        %v1500 = vrcp.pop %v1450
        %v1501 = vrcp.pop %v1457
        %v1502 = vrcp.pop %v1464
        %v1503 = vrcp.pop %v1471
        %v1504 = vrcp.pop %v1478
        %v1505 = vrcp.pop %v1485
        %v1506 = vrcp.pop %v1492
        %v1507 = vrcp.pop %v1499
        %v1508 = vmul.f32 %v1429, %v1500
        %v1509 = vmul.f32 %v1431, %v1501
        %v1510 = vmul.f32 %v1433, %v1502
        %v1511 = vmul.f32 %v1435, %v1503
        %v1512 = vmul.f32 %v1437, %v1504
        %v1513 = vmul.f32 %v1439, %v1505
        %v1514 = vmul.f32 %v1441, %v1506
        %v1515 = vmul.f32 %v1443, %v1507
        %v1517 = vsel %vm1283, %v1364, 0
        %1519 = vmatprep.subr.mxu0 0.0
        %1520 = vmatpush1.msra.mxu0 %v634
        %1521 = vmatprep.subr.mxu0 0.0
        %1522 = vmatpush1.msra.mxu0 %v635
        %1523 = vmatprep.subr.mxu0 0.0
        %1524 = vmatpush1.msra.mxu0 0.0
        %1525 = vmatprep.subr.mxu0 0.0
        %1526 = vmatpush1.msra.mxu0 0.0
        %1527 = vmatprep.subr.mxu0 0.0
        %1528 = vmatpush1.msra.mxu0 0.0
        %1529 = vmatprep.subr.mxu0 0.0
        %1530 = vmatpush1.msra.mxu0 0.0
        %1531 = vmatprep.subr.mxu0 0.0
        %1532 = vmatpush1.msra.mxu0 0.0
        %1533 = vmatprep.subr.mxu0 0.0
        %1534 = vmatpush1.msra.mxu0 0.0
        %1535 = vmatprep.subr.mxu0 0.0
        %1536 = vmatpush1.msra.mxu0 0.0
        %1537 = vmatprep.subr.mxu0 0.0
        %1538 = vmatpush1.msra.mxu0 0.0
        %1539 = vmatprep.subr.mxu0 0.0
        %1540 = vmatpush1.msra.mxu0 0.0
        %1541 = vmatprep.subr.mxu0 0.0
        %1542 = vmatpush1.msra.mxu0 0.0
        %1543 = vmatprep.subr.mxu0 0.0
        %1544 = vmatpush1.msra.mxu0 0.0
        %1545 = vmatprep.subr.mxu0 0.0
        %1546 = vmatpush1.msra.mxu0 0.0
        %1547 = vmatprep.subr.mxu0 0.0
        %1548 = vmatpush1.msra.mxu0 0.0
        %1549 = vmatprep.subr.mxu0 0.0
        %1550 = vmatpush1.msra.mxu0 0.0
        %1551 = vmatprep.subr.mxu0 0.0
        %1552 = vmatpush1.msra.mxu0 0.0
        %1553 = vmatprep.subr.mxu0 0.0
        %1554 = vmatpush1.msra.mxu0 0.0
        %1555 = vmatprep.subr.mxu0 0.0
        %1556 = vmatpush1.msra.mxu0 0.0
        %1557 = vmatprep.subr.mxu0 0.0
        %1558 = vmatpush1.msra.mxu0 0.0
        %1559 = vmatprep.subr.mxu0 0.0
        %1560 = vmatpush1.msra.mxu0 0.0
        %1561 = vmatprep.subr.mxu0 0.0
        %1562 = vmatpush1.msra.mxu0 0.0
        %1563 = vmatprep.subr.mxu0 0.0
        %1564 = vmatpush1.msra.mxu0 0.0
        %1565 = vmatprep.subr.mxu0 0.0
        %1566 = vmatpush1.msra.mxu0 0.0
        %1567 = vmatprep.subr.mxu0 0.0
        %1568 = vmatpush1.msra.mxu0 0.0
        %1569 = vmatprep.subr.mxu0 0.0
        %1570 = vmatpush1.msra.mxu0 0.0
        %1571 = vmatprep.subr.mxu0 0.0
        %1572 = vmatpush1.msra.mxu0 0.0
        %1573 = vmatprep.subr.mxu0 0.0
        %1574 = vmatpush1.msra.mxu0 0.0
        %1575 = vmatprep.subr.mxu0 0.0
        %1576 = vmatpush1.msra.mxu0 0.0
        %1577 = vmatprep.subr.mxu0 0.0
        %1578 = vmatpush1.msra.mxu0 0.0
        %1579 = vmatprep.subr.mxu0 0.0
        %1580 = vmatpush1.msra.mxu0 0.0
        %1581 = vmatprep.subr.mxu0 0.0
        %1582 = vmatpush1.msra.mxu0 0.0
        %1583 = vmatprep.mubr.f32.mxu0 0.0
        %1584 = vmatmul.mubr.f32.gmra.mrb[0].mxu0 %v1517
        %v1585 = vpop.f32.mrb[0].mxu0
        %v1586 = vadd.f32 0.0, %v1585
        %v1587 = vpop.f32.mrb[0].mxu0
        %1588 = vdwg.mxu0
        %v1590 = vsel %vm1283, %v1365, 0
        %1592 = vmatprep.subr.mxu0 0.0
        %1593 = vmatpush1.msra.mxu0 %v636
        %1594 = vmatprep.subr.mxu0 0.0
        %1595 = vmatpush1.msra.mxu0 %v637
        %1596 = vmatprep.subr.mxu0 0.0
        %1597 = vmatpush1.msra.mxu0 0.0
        %1598 = vmatprep.subr.mxu0 0.0
        %1599 = vmatpush1.msra.mxu0 0.0
        %1600 = vmatprep.subr.mxu0 0.0
        %1601 = vmatpush1.msra.mxu0 0.0
        %1602 = vmatprep.subr.mxu0 0.0
        %1603 = vmatpush1.msra.mxu0 0.0
        %1604 = vmatprep.subr.mxu0 0.0
        %1605 = vmatpush1.msra.mxu0 0.0
        %1606 = vmatprep.subr.mxu0 0.0
        %1607 = vmatpush1.msra.mxu0 0.0
        %1608 = vmatprep.subr.mxu0 0.0
        %1609 = vmatpush1.msra.mxu0 0.0
        %1610 = vmatprep.subr.mxu0 0.0
        %1611 = vmatpush1.msra.mxu0 0.0
        %1612 = vmatprep.subr.mxu0 0.0
        %1613 = vmatpush1.msra.mxu0 0.0
        %1614 = vmatprep.subr.mxu0 0.0
        %1615 = vmatpush1.msra.mxu0 0.0
        %1616 = vmatprep.subr.mxu0 0.0
        %1617 = vmatpush1.msra.mxu0 0.0
        %1618 = vmatprep.subr.mxu0 0.0
        %1619 = vmatpush1.msra.mxu0 0.0
        %1620 = vmatprep.subr.mxu0 0.0
        %1621 = vmatpush1.msra.mxu0 0.0
        %1622 = vmatprep.subr.mxu0 0.0
        %1623 = vmatpush1.msra.mxu0 0.0
        %1624 = vmatprep.subr.mxu0 0.0
        %1625 = vmatpush1.msra.mxu0 0.0
        %1626 = vmatprep.subr.mxu0 0.0
        %1627 = vmatpush1.msra.mxu0 0.0
        %1628 = vmatprep.subr.mxu0 0.0
        %1629 = vmatpush1.msra.mxu0 0.0
        %1630 = vmatprep.subr.mxu0 0.0
        %1631 = vmatpush1.msra.mxu0 0.0
        %1632 = vmatprep.subr.mxu0 0.0
        %1633 = vmatpush1.msra.mxu0 0.0
        %1634 = vmatprep.subr.mxu0 0.0
        %1635 = vmatpush1.msra.mxu0 0.0
        %1636 = vmatprep.subr.mxu0 0.0
        %1637 = vmatpush1.msra.mxu0 0.0
        %1638 = vmatprep.subr.mxu0 0.0
        %1639 = vmatpush1.msra.mxu0 0.0
        %1640 = vmatprep.subr.mxu0 0.0
        %1641 = vmatpush1.msra.mxu0 0.0
        %1642 = vmatprep.subr.mxu0 0.0
        %1643 = vmatpush1.msra.mxu0 0.0
        %1644 = vmatprep.subr.mxu0 0.0
        %1645 = vmatpush1.msra.mxu0 0.0
        %1646 = vmatprep.subr.mxu0 0.0
        %1647 = vmatpush1.msra.mxu0 0.0
        %1648 = vmatprep.subr.mxu0 0.0
        %1649 = vmatpush1.msra.mxu0 0.0
        %1650 = vmatprep.subr.mxu0 0.0
        %1651 = vmatpush1.msra.mxu0 0.0
        %1652 = vmatprep.subr.mxu0 0.0
        %1653 = vmatpush1.msra.mxu0 0.0
        %1654 = vmatprep.subr.mxu0 0.0
        %1655 = vmatpush1.msra.mxu0 0.0
        %1656 = vmatprep.mubr.f32.mxu0 0.0
        %1657 = vmatmul.mubr.f32.gmra.mrb[0].mxu0 %v1590
        %v1658 = vpop.f32.mrb[0].mxu0
        %v1659 = vadd.f32 0.0, %v1658
        %v1660 = vpop.f32.mrb[0].mxu0
        %1661 = vdwg.mxu0
        %v1663 = vsel %vm1283, %v1366, 0
        %1665 = vmatprep.subr.mxu0 0.0
        %1666 = vmatpush1.msra.mxu0 %v638
        %1667 = vmatprep.subr.mxu0 0.0
        %1668 = vmatpush1.msra.mxu0 %v639
        %1669 = vmatprep.subr.mxu0 0.0
        %1670 = vmatpush1.msra.mxu0 0.0
        %1671 = vmatprep.subr.mxu0 0.0
        %1672 = vmatpush1.msra.mxu0 0.0
        %1673 = vmatprep.subr.mxu0 0.0
        %1674 = vmatpush1.msra.mxu0 0.0
        %1675 = vmatprep.subr.mxu0 0.0
        %1676 = vmatpush1.msra.mxu0 0.0
        %1677 = vmatprep.subr.mxu0 0.0
        %1678 = vmatpush1.msra.mxu0 0.0
        %1679 = vmatprep.subr.mxu0 0.0
        %1680 = vmatpush1.msra.mxu0 0.0
        %1681 = vmatprep.subr.mxu0 0.0
        %1682 = vmatpush1.msra.mxu0 0.0
        %1683 = vmatprep.subr.mxu0 0.0
        %1684 = vmatpush1.msra.mxu0 0.0
        %1685 = vmatprep.subr.mxu0 0.0
        %1686 = vmatpush1.msra.mxu0 0.0
        %1687 = vmatprep.subr.mxu0 0.0
        %1688 = vmatpush1.msra.mxu0 0.0
        %1689 = vmatprep.subr.mxu0 0.0
        %1690 = vmatpush1.msra.mxu0 0.0
        %1691 = vmatprep.subr.mxu0 0.0
        %1692 = vmatpush1.msra.mxu0 0.0
        %1693 = vmatprep.subr.mxu0 0.0
        %1694 = vmatpush1.msra.mxu0 0.0
        %1695 = vmatprep.subr.mxu0 0.0
        %1696 = vmatpush1.msra.mxu0 0.0
        %1697 = vmatprep.subr.mxu0 0.0
        %1698 = vmatpush1.msra.mxu0 0.0
        %1699 = vmatprep.subr.mxu0 0.0
        %1700 = vmatpush1.msra.mxu0 0.0
        %1701 = vmatprep.subr.mxu0 0.0
        %1702 = vmatpush1.msra.mxu0 0.0
        %1703 = vmatprep.subr.mxu0 0.0
        %1704 = vmatpush1.msra.mxu0 0.0
        %1705 = vmatprep.subr.mxu0 0.0
        %1706 = vmatpush1.msra.mxu0 0.0
        %1707 = vmatprep.subr.mxu0 0.0
        %1708 = vmatpush1.msra.mxu0 0.0
        %1709 = vmatprep.subr.mxu0 0.0
        %1710 = vmatpush1.msra.mxu0 0.0
        %1711 = vmatprep.subr.mxu0 0.0
        %1712 = vmatpush1.msra.mxu0 0.0
        %1713 = vmatprep.subr.mxu0 0.0
        %1714 = vmatpush1.msra.mxu0 0.0
        %1715 = vmatprep.subr.mxu0 0.0
        %1716 = vmatpush1.msra.mxu0 0.0
        %1717 = vmatprep.subr.mxu0 0.0
        %1718 = vmatpush1.msra.mxu0 0.0
        %1719 = vmatprep.subr.mxu0 0.0
        %1720 = vmatpush1.msra.mxu0 0.0
        %1721 = vmatprep.subr.mxu0 0.0
        %1722 = vmatpush1.msra.mxu0 0.0
        %1723 = vmatprep.subr.mxu0 0.0
        %1724 = vmatpush1.msra.mxu0 0.0
        %1725 = vmatprep.subr.mxu0 0.0
        %1726 = vmatpush1.msra.mxu0 0.0
        %1727 = vmatprep.subr.mxu0 0.0
        %1728 = vmatpush1.msra.mxu0 0.0
        %1729 = vmatprep.mubr.f32.mxu0 0.0
        %1730 = vmatmul.mubr.f32.gmra.mrb[0].mxu0 %v1663
        %v1731 = vpop.f32.mrb[0].mxu0
        %v1732 = vadd.f32 0.0, %v1731
        %v1733 = vpop.f32.mrb[0].mxu0
        %1734 = vdwg.mxu0
        %v1736 = vsel %vm1283, %v1367, 0
        %1738 = vmatprep.subr.mxu0 0.0
        %1739 = vmatpush1.msra.mxu0 %v640
        %1740 = vmatprep.subr.mxu0 0.0
        %1741 = vmatpush1.msra.mxu0 %v641
        %1742 = vmatprep.subr.mxu0 0.0
        %1743 = vmatpush1.msra.mxu0 0.0
        %1744 = vmatprep.subr.mxu0 0.0
        %1745 = vmatpush1.msra.mxu0 0.0
        %1746 = vmatprep.subr.mxu0 0.0
        %1747 = vmatpush1.msra.mxu0 0.0
        %1748 = vmatprep.subr.mxu0 0.0
        %1749 = vmatpush1.msra.mxu0 0.0
        %1750 = vmatprep.subr.mxu0 0.0
        %1751 = vmatpush1.msra.mxu0 0.0
        %1752 = vmatprep.subr.mxu0 0.0
        %1753 = vmatpush1.msra.mxu0 0.0
        %1754 = vmatprep.subr.mxu0 0.0
        %1755 = vmatpush1.msra.mxu0 0.0
        %1756 = vmatprep.subr.mxu0 0.0
        %1757 = vmatpush1.msra.mxu0 0.0
        %1758 = vmatprep.subr.mxu0 0.0
        %1759 = vmatpush1.msra.mxu0 0.0
        %1760 = vmatprep.subr.mxu0 0.0
        %1761 = vmatpush1.msra.mxu0 0.0
        %1762 = vmatprep.subr.mxu0 0.0
        %1763 = vmatpush1.msra.mxu0 0.0
        %1764 = vmatprep.subr.mxu0 0.0
        %1765 = vmatpush1.msra.mxu0 0.0
        %1766 = vmatprep.subr.mxu0 0.0
        %1767 = vmatpush1.msra.mxu0 0.0
        %1768 = vmatprep.subr.mxu0 0.0
        %1769 = vmatpush1.msra.mxu0 0.0
        %1770 = vmatprep.subr.mxu0 0.0
        %1771 = vmatpush1.msra.mxu0 0.0
        %1772 = vmatprep.subr.mxu0 0.0
        %1773 = vmatpush1.msra.mxu0 0.0
        %1774 = vmatprep.subr.mxu0 0.0
        %1775 = vmatpush1.msra.mxu0 0.0
        %1776 = vmatprep.subr.mxu0 0.0
        %1777 = vmatpush1.msra.mxu0 0.0
        %1778 = vmatprep.subr.mxu0 0.0
        %1779 = vmatpush1.msra.mxu0 0.0
        %1780 = vmatprep.subr.mxu0 0.0
        %1781 = vmatpush1.msra.mxu0 0.0
        %1782 = vmatprep.subr.mxu0 0.0
        %1783 = vmatpush1.msra.mxu0 0.0
        %1784 = vmatprep.subr.mxu0 0.0
        %1785 = vmatpush1.msra.mxu0 0.0
        %1786 = vmatprep.subr.mxu0 0.0
        %1787 = vmatpush1.msra.mxu0 0.0
        %1788 = vmatprep.subr.mxu0 0.0
        %1789 = vmatpush1.msra.mxu0 0.0
        %1790 = vmatprep.subr.mxu0 0.0
        %1791 = vmatpush1.msra.mxu0 0.0
        %1792 = vmatprep.subr.mxu0 0.0
        %1793 = vmatpush1.msra.mxu0 0.0
        %1794 = vmatprep.subr.mxu0 0.0
        %1795 = vmatpush1.msra.mxu0 0.0
        %1796 = vmatprep.subr.mxu0 0.0
        %1797 = vmatpush1.msra.mxu0 0.0
        %1798 = vmatprep.subr.mxu0 0.0
        %1799 = vmatpush1.msra.mxu0 0.0
        %1800 = vmatprep.subr.mxu0 0.0
        %1801 = vmatpush1.msra.mxu0 0.0
        %1802 = vmatprep.mubr.f32.mxu0 0.0
        %1803 = vmatmul.mubr.f32.gmra.mrb[0].mxu0 %v1736
        %v1804 = vpop.f32.mrb[0].mxu0
        %v1805 = vadd.f32 0.0, %v1804
        %v1806 = vpop.f32.mrb[0].mxu0
        %1807 = vdwg.mxu0
        %v1809 = vsel %vm1283, %v1368, 0
        %1811 = vmatprep.subr.mxu0 0.0
        %1812 = vmatpush1.msra.mxu0 %v642
        %1813 = vmatprep.subr.mxu0 0.0
        %1814 = vmatpush1.msra.mxu0 %v643
        %1815 = vmatprep.subr.mxu0 0.0
        %1816 = vmatpush1.msra.mxu0 0.0
        %1817 = vmatprep.subr.mxu0 0.0
        %1818 = vmatpush1.msra.mxu0 0.0
        %1819 = vmatprep.subr.mxu0 0.0
        %1820 = vmatpush1.msra.mxu0 0.0
        %1821 = vmatprep.subr.mxu0 0.0
        %1822 = vmatpush1.msra.mxu0 0.0
        %1823 = vmatprep.subr.mxu0 0.0
        %1824 = vmatpush1.msra.mxu0 0.0
        %1825 = vmatprep.subr.mxu0 0.0
        %1826 = vmatpush1.msra.mxu0 0.0
        %1827 = vmatprep.subr.mxu0 0.0
        %1828 = vmatpush1.msra.mxu0 0.0
        %1829 = vmatprep.subr.mxu0 0.0
        %1830 = vmatpush1.msra.mxu0 0.0
        %1831 = vmatprep.subr.mxu0 0.0
        %1832 = vmatpush1.msra.mxu0 0.0
        %1833 = vmatprep.subr.mxu0 0.0
        %1834 = vmatpush1.msra.mxu0 0.0
        %1835 = vmatprep.subr.mxu0 0.0
        %1836 = vmatpush1.msra.mxu0 0.0
        %1837 = vmatprep.subr.mxu0 0.0
        %1838 = vmatpush1.msra.mxu0 0.0
        %1839 = vmatprep.subr.mxu0 0.0
        %1840 = vmatpush1.msra.mxu0 0.0
        %1841 = vmatprep.subr.mxu0 0.0
        %1842 = vmatpush1.msra.mxu0 0.0
        %1843 = vmatprep.subr.mxu0 0.0
        %1844 = vmatpush1.msra.mxu0 0.0
        %1845 = vmatprep.subr.mxu0 0.0
        %1846 = vmatpush1.msra.mxu0 0.0
        %1847 = vmatprep.subr.mxu0 0.0
        %1848 = vmatpush1.msra.mxu0 0.0
        %1849 = vmatprep.subr.mxu0 0.0
        %1850 = vmatpush1.msra.mxu0 0.0
        %1851 = vmatprep.subr.mxu0 0.0
        %1852 = vmatpush1.msra.mxu0 0.0
        %1853 = vmatprep.subr.mxu0 0.0
        %1854 = vmatpush1.msra.mxu0 0.0
        %1855 = vmatprep.subr.mxu0 0.0
        %1856 = vmatpush1.msra.mxu0 0.0
        %1857 = vmatprep.subr.mxu0 0.0
        %1858 = vmatpush1.msra.mxu0 0.0
        %1859 = vmatprep.subr.mxu0 0.0
        %1860 = vmatpush1.msra.mxu0 0.0
        %1861 = vmatprep.subr.mxu0 0.0
        %1862 = vmatpush1.msra.mxu0 0.0
        %1863 = vmatprep.subr.mxu0 0.0
        %1864 = vmatpush1.msra.mxu0 0.0
        %1865 = vmatprep.subr.mxu0 0.0
        %1866 = vmatpush1.msra.mxu0 0.0
        %1867 = vmatprep.subr.mxu0 0.0
        %1868 = vmatpush1.msra.mxu0 0.0
        %1869 = vmatprep.subr.mxu0 0.0
        %1870 = vmatpush1.msra.mxu0 0.0
        %1871 = vmatprep.subr.mxu0 0.0
        %1872 = vmatpush1.msra.mxu0 0.0
        %1873 = vmatprep.subr.mxu0 0.0
        %1874 = vmatpush1.msra.mxu0 0.0
        %1875 = vmatprep.mubr.f32.mxu0 0.0
        %1876 = vmatmul.mubr.f32.gmra.mrb[0].mxu0 %v1809
        %v1877 = vpop.f32.mrb[0].mxu0
        %v1878 = vadd.f32 0.0, %v1877
        %v1879 = vpop.f32.mrb[0].mxu0
        %1880 = vdwg.mxu0
        %v1882 = vsel %vm1283, %v1369, 0
        %1884 = vmatprep.subr.mxu0 0.0
        %1885 = vmatpush1.msra.mxu0 %v644
        %1886 = vmatprep.subr.mxu0 0.0
        %1887 = vmatpush1.msra.mxu0 %v645
        %1888 = vmatprep.subr.mxu0 0.0
        %1889 = vmatpush1.msra.mxu0 0.0
        %1890 = vmatprep.subr.mxu0 0.0
        %1891 = vmatpush1.msra.mxu0 0.0
        %1892 = vmatprep.subr.mxu0 0.0
        %1893 = vmatpush1.msra.mxu0 0.0
        %1894 = vmatprep.subr.mxu0 0.0
        %1895 = vmatpush1.msra.mxu0 0.0
        %1896 = vmatprep.subr.mxu0 0.0
        %1897 = vmatpush1.msra.mxu0 0.0
        %1898 = vmatprep.subr.mxu0 0.0
        %1899 = vmatpush1.msra.mxu0 0.0
        %1900 = vmatprep.subr.mxu0 0.0
        %1901 = vmatpush1.msra.mxu0 0.0
        %1902 = vmatprep.subr.mxu0 0.0
        %1903 = vmatpush1.msra.mxu0 0.0
        %1904 = vmatprep.subr.mxu0 0.0
        %1905 = vmatpush1.msra.mxu0 0.0
        %1906 = vmatprep.subr.mxu0 0.0
        %1907 = vmatpush1.msra.mxu0 0.0
        %1908 = vmatprep.subr.mxu0 0.0
        %1909 = vmatpush1.msra.mxu0 0.0
        %1910 = vmatprep.subr.mxu0 0.0
        %1911 = vmatpush1.msra.mxu0 0.0
        %1912 = vmatprep.subr.mxu0 0.0
        %1913 = vmatpush1.msra.mxu0 0.0
        %1914 = vmatprep.subr.mxu0 0.0
        %1915 = vmatpush1.msra.mxu0 0.0
        %1916 = vmatprep.subr.mxu0 0.0
        %1917 = vmatpush1.msra.mxu0 0.0
        %1918 = vmatprep.subr.mxu0 0.0
        %1919 = vmatpush1.msra.mxu0 0.0
        %1920 = vmatprep.subr.mxu0 0.0
        %1921 = vmatpush1.msra.mxu0 0.0
        %1922 = vmatprep.subr.mxu0 0.0
        %1923 = vmatpush1.msra.mxu0 0.0
        %1924 = vmatprep.subr.mxu0 0.0
        %1925 = vmatpush1.msra.mxu0 0.0
        %1926 = vmatprep.subr.mxu0 0.0
        %1927 = vmatpush1.msra.mxu0 0.0
        %1928 = vmatprep.subr.mxu0 0.0
        %1929 = vmatpush1.msra.mxu0 0.0
        %1930 = vmatprep.subr.mxu0 0.0
        %1931 = vmatpush1.msra.mxu0 0.0
        %1932 = vmatprep.subr.mxu0 0.0
        %1933 = vmatpush1.msra.mxu0 0.0
        %1934 = vmatprep.subr.mxu0 0.0
        %1935 = vmatpush1.msra.mxu0 0.0
        %1936 = vmatprep.subr.mxu0 0.0
        %1937 = vmatpush1.msra.mxu0 0.0
        %1938 = vmatprep.subr.mxu0 0.0
        %1939 = vmatpush1.msra.mxu0 0.0
        %1940 = vmatprep.subr.mxu0 0.0
        %1941 = vmatpush1.msra.mxu0 0.0
        %1942 = vmatprep.subr.mxu0 0.0
        %1943 = vmatpush1.msra.mxu0 0.0
        %1944 = vmatprep.subr.mxu0 0.0
        %1945 = vmatpush1.msra.mxu0 0.0
        %1946 = vmatprep.subr.mxu0 0.0
        %1947 = vmatpush1.msra.mxu0 0.0
        %1948 = vmatprep.mubr.f32.mxu0 0.0
        %1949 = vmatmul.mubr.f32.gmra.mrb[0].mxu0 %v1882
        %v1950 = vpop.f32.mrb[0].mxu0
        %v1951 = vadd.f32 0.0, %v1950
        %v1952 = vpop.f32.mrb[0].mxu0
        %1953 = vdwg.mxu0
        %v1955 = vsel %vm1283, %v1370, 0
        %1957 = vmatprep.subr.mxu0 0.0
        %1958 = vmatpush1.msra.mxu0 %v646
        %1959 = vmatprep.subr.mxu0 0.0
        %1960 = vmatpush1.msra.mxu0 %v647
        %1961 = vmatprep.subr.mxu0 0.0
        %1962 = vmatpush1.msra.mxu0 0.0
        %1963 = vmatprep.subr.mxu0 0.0
        %1964 = vmatpush1.msra.mxu0 0.0
        %1965 = vmatprep.subr.mxu0 0.0
        %1966 = vmatpush1.msra.mxu0 0.0
        %1967 = vmatprep.subr.mxu0 0.0
        %1968 = vmatpush1.msra.mxu0 0.0
        %1969 = vmatprep.subr.mxu0 0.0
        %1970 = vmatpush1.msra.mxu0 0.0
        %1971 = vmatprep.subr.mxu0 0.0
        %1972 = vmatpush1.msra.mxu0 0.0
        %1973 = vmatprep.subr.mxu0 0.0
        %1974 = vmatpush1.msra.mxu0 0.0
        %1975 = vmatprep.subr.mxu0 0.0
        %1976 = vmatpush1.msra.mxu0 0.0
        %1977 = vmatprep.subr.mxu0 0.0
        %1978 = vmatpush1.msra.mxu0 0.0
        %1979 = vmatprep.subr.mxu0 0.0
        %1980 = vmatpush1.msra.mxu0 0.0
        %1981 = vmatprep.subr.mxu0 0.0
        %1982 = vmatpush1.msra.mxu0 0.0
        %1983 = vmatprep.subr.mxu0 0.0
        %1984 = vmatpush1.msra.mxu0 0.0
        %1985 = vmatprep.subr.mxu0 0.0
        %1986 = vmatpush1.msra.mxu0 0.0
        %1987 = vmatprep.subr.mxu0 0.0
        %1988 = vmatpush1.msra.mxu0 0.0
        %1989 = vmatprep.subr.mxu0 0.0
        %1990 = vmatpush1.msra.mxu0 0.0
        %1991 = vmatprep.subr.mxu0 0.0
        %1992 = vmatpush1.msra.mxu0 0.0
        %1993 = vmatprep.subr.mxu0 0.0
        %1994 = vmatpush1.msra.mxu0 0.0
        %1995 = vmatprep.subr.mxu0 0.0
        %1996 = vmatpush1.msra.mxu0 0.0
        %1997 = vmatprep.subr.mxu0 0.0
        %1998 = vmatpush1.msra.mxu0 0.0
        %1999 = vmatprep.subr.mxu0 0.0
        %2000 = vmatpush1.msra.mxu0 0.0
        %2001 = vmatprep.subr.mxu0 0.0
        %2002 = vmatpush1.msra.mxu0 0.0
        %2003 = vmatprep.subr.mxu0 0.0
        %2004 = vmatpush1.msra.mxu0 0.0
        %2005 = vmatprep.subr.mxu0 0.0
        %2006 = vmatpush1.msra.mxu0 0.0
        %2007 = vmatprep.subr.mxu0 0.0
        %2008 = vmatpush1.msra.mxu0 0.0
        %2009 = vmatprep.subr.mxu0 0.0
        %2010 = vmatpush1.msra.mxu0 0.0
        %2011 = vmatprep.subr.mxu0 0.0
        %2012 = vmatpush1.msra.mxu0 0.0
        %2013 = vmatprep.subr.mxu0 0.0
        %2014 = vmatpush1.msra.mxu0 0.0
        %2015 = vmatprep.subr.mxu0 0.0
        %2016 = vmatpush1.msra.mxu0 0.0
        %2017 = vmatprep.subr.mxu0 0.0
        %2018 = vmatpush1.msra.mxu0 0.0
        %2019 = vmatprep.subr.mxu0 0.0
        %2020 = vmatpush1.msra.mxu0 0.0
        %2021 = vmatprep.mubr.f32.mxu0 0.0
        %2022 = vmatmul.mubr.f32.gmra.mrb[0].mxu0 %v1955
        %v2023 = vpop.f32.mrb[0].mxu0
        %v2024 = vadd.f32 0.0, %v2023
        %v2025 = vpop.f32.mrb[0].mxu0
        %2026 = vdwg.mxu0
        %v2028 = vsel %vm1283, %v1371, 0
        %2030 = vmatprep.subr.mxu0 0.0
        %2031 = vmatpush1.msra.mxu0 %v648
        %2032 = vmatprep.subr.mxu0 0.0
        %2033 = vmatpush1.msra.mxu0 %v649
        %2034 = vmatprep.subr.mxu0 0.0
        %2035 = vmatpush1.msra.mxu0 0.0
        %2036 = vmatprep.subr.mxu0 0.0
        %2037 = vmatpush1.msra.mxu0 0.0
        %2038 = vmatprep.subr.mxu0 0.0
        %2039 = vmatpush1.msra.mxu0 0.0
        %2040 = vmatprep.subr.mxu0 0.0
        %2041 = vmatpush1.msra.mxu0 0.0
        %2042 = vmatprep.subr.mxu0 0.0
        %2043 = vmatpush1.msra.mxu0 0.0
        %2044 = vmatprep.subr.mxu0 0.0
        %2045 = vmatpush1.msra.mxu0 0.0
        %2046 = vmatprep.subr.mxu0 0.0
        %2047 = vmatpush1.msra.mxu0 0.0
        %2048 = vmatprep.subr.mxu0 0.0
        %2049 = vmatpush1.msra.mxu0 0.0
        %2050 = vmatprep.subr.mxu0 0.0
        %2051 = vmatpush1.msra.mxu0 0.0
        %2052 = vmatprep.subr.mxu0 0.0
        %2053 = vmatpush1.msra.mxu0 0.0
        %2054 = vmatprep.subr.mxu0 0.0
        %2055 = vmatpush1.msra.mxu0 0.0
        %2056 = vmatprep.subr.mxu0 0.0
        %2057 = vmatpush1.msra.mxu0 0.0
        %2058 = vmatprep.subr.mxu0 0.0
        %2059 = vmatpush1.msra.mxu0 0.0
        %2060 = vmatprep.subr.mxu0 0.0
        %2061 = vmatpush1.msra.mxu0 0.0
        %2062 = vmatprep.subr.mxu0 0.0
        %2063 = vmatpush1.msra.mxu0 0.0
        %2064 = vmatprep.subr.mxu0 0.0
        %2065 = vmatpush1.msra.mxu0 0.0
        %2066 = vmatprep.subr.mxu0 0.0
        %2067 = vmatpush1.msra.mxu0 0.0
        %2068 = vmatprep.subr.mxu0 0.0
        %2069 = vmatpush1.msra.mxu0 0.0
        %2070 = vmatprep.subr.mxu0 0.0
        %2071 = vmatpush1.msra.mxu0 0.0
        %2072 = vmatprep.subr.mxu0 0.0
        %2073 = vmatpush1.msra.mxu0 0.0
        %2074 = vmatprep.subr.mxu0 0.0
        %2075 = vmatpush1.msra.mxu0 0.0
        %2076 = vmatprep.subr.mxu0 0.0
        %2077 = vmatpush1.msra.mxu0 0.0
        %2078 = vmatprep.subr.mxu0 0.0
        %2079 = vmatpush1.msra.mxu0 0.0
        %2080 = vmatprep.subr.mxu0 0.0
        %2081 = vmatpush1.msra.mxu0 0.0
        %2082 = vmatprep.subr.mxu0 0.0
        %2083 = vmatpush1.msra.mxu0 0.0
        %2084 = vmatprep.subr.mxu0 0.0
        %2085 = vmatpush1.msra.mxu0 0.0
        %2086 = vmatprep.subr.mxu0 0.0
        %2087 = vmatpush1.msra.mxu0 0.0
        %2088 = vmatprep.subr.mxu0 0.0
        %2089 = vmatpush1.msra.mxu0 0.0
        %2090 = vmatprep.subr.mxu0 0.0
        %2091 = vmatpush1.msra.mxu0 0.0
        %2092 = vmatprep.subr.mxu0 0.0
        %2093 = vmatpush1.msra.mxu0 0.0
        %2094 = vmatprep.mubr.f32.mxu0 0.0
        %2095 = vmatmul.mubr.f32.gmra.mrb[0].mxu0 %v2028
        %v2096 = vpop.f32.mrb[0].mxu0
        %v2097 = vadd.f32 0.0, %v2096
        %v2098 = vpop.f32.mrb[0].mxu0
        %2099 = vdwg.mxu0
        %2100 = vxpose.xlu0.b32.start [1/16] %v1508, 128
        %2101 = vxpose.xlu0.b32.cont [2/16] 0.0, 128
        %2102 = vxpose.xlu0.b32.cont [3/16] 0.0, 128
        %2103 = vxpose.xlu0.b32.cont [4/16] 0.0, 128
        %2104 = vxpose.xlu0.b32.cont [5/16] 0.0, 128
        %2105 = vxpose.xlu0.b32.cont [6/16] 0.0, 128
        %2106 = vxpose.xlu0.b32.cont [7/16] 0.0, 128
        %2107 = vxpose.xlu0.b32.cont [8/16] 0.0, 128
        %2108 = vxpose.xlu0.b32.cont [9/16] 0.0, 128
        %2109 = vxpose.xlu0.b32.cont [10/16] 0.0, 128
        %2110 = vxpose.xlu0.b32.cont [11/16] 0.0, 128
        %2111 = vxpose.xlu0.b32.cont [12/16] 0.0, 128
        %2112 = vxpose.xlu0.b32.cont [13/16] 0.0, 128
        %2113 = vxpose.xlu0.b32.cont [14/16] 0.0, 128
        %2114 = vxpose.xlu0.b32.cont [15/16] 0.0, 128
        %2115 = vxpose.xlu0.b32.end [16/16] 0.0, 128
        %v2116 = vpop.trf.xlu0
        %v2117 = vpop.trf.xlu0
        %v2118 = vpop.trf.xlu0
        %v2119 = vpop.trf.xlu0
        %v2120 = vpop.trf.xlu0
        %v2121 = vpop.trf.xlu0
        %v2122 = vpop.trf.xlu0
        %v2123 = vpop.trf.xlu0
        %v2124 = vpop.trf.xlu0
        %v2125 = vpop.trf.xlu0
        %v2126 = vpop.trf.xlu0
        %v2127 = vpop.trf.xlu0
        %v2128 = vpop.trf.xlu0
        %v2129 = vpop.trf.xlu0
        %v2130 = vpop.trf.xlu0
        %v2131 = vpop.trf.xlu0
        %vm2132 = vcmask 64512
        %v2134 = vsel %vm2132, %v2116, 0
        %v2137 = vsel %vm2132, %v2117, 0
        %2139 = vmatprep.subr.mxu0 0.0
        %2140 = vmatpush1.msra.mxu0 %v626
        %2141 = vmatprep.subr.mxu0 0.0
        %2142 = vmatpush1.msra.mxu0 0.0
        %2143 = vmatprep.subr.mxu0 0.0
        %2144 = vmatpush1.msra.mxu0 0.0
        %2145 = vmatprep.subr.mxu0 0.0
        %2146 = vmatpush1.msra.mxu0 0.0
        %2147 = vmatprep.subr.mxu0 0.0
        %2148 = vmatpush1.msra.mxu0 0.0
        %2149 = vmatprep.subr.mxu0 0.0
        %2150 = vmatpush1.msra.mxu0 0.0
        %2151 = vmatprep.subr.mxu0 0.0
        %2152 = vmatpush1.msra.mxu0 0.0
        %2153 = vmatprep.subr.mxu0 0.0
        %2154 = vmatpush1.msra.mxu0 0.0
        %2155 = vmatprep.subr.mxu0 0.0
        %2156 = vmatpush1.msra.mxu0 0.0
        %2157 = vmatprep.subr.mxu0 0.0
        %2158 = vmatpush1.msra.mxu0 0.0
        %2159 = vmatprep.subr.mxu0 0.0
        %2160 = vmatpush1.msra.mxu0 0.0
        %2161 = vmatprep.subr.mxu0 0.0
        %2162 = vmatpush1.msra.mxu0 0.0
        %2163 = vmatprep.subr.mxu0 0.0
        %2164 = vmatpush1.msra.mxu0 0.0
        %2165 = vmatprep.subr.mxu0 0.0
        %2166 = vmatpush1.msra.mxu0 0.0
        %2167 = vmatprep.subr.mxu0 0.0
        %2168 = vmatpush1.msra.mxu0 0.0
        %2169 = vmatprep.subr.mxu0 0.0
        %2170 = vmatpush1.msra.mxu0 0.0
        %2171 = vmatprep.subr.mxu0 0.0
        %2172 = vmatpush1.msra.mxu0 0.0
        %2173 = vmatprep.subr.mxu0 0.0
        %2174 = vmatpush1.msra.mxu0 0.0
        %2175 = vmatprep.subr.mxu0 0.0
        %2176 = vmatpush1.msra.mxu0 0.0
        %2177 = vmatprep.subr.mxu0 0.0
        %2178 = vmatpush1.msra.mxu0 0.0
        %2179 = vmatprep.subr.mxu0 0.0
        %2180 = vmatpush1.msra.mxu0 0.0
        %2181 = vmatprep.subr.mxu0 0.0
        %2182 = vmatpush1.msra.mxu0 0.0
        %2183 = vmatprep.subr.mxu0 0.0
        %2184 = vmatpush1.msra.mxu0 0.0
        %2185 = vmatprep.subr.mxu0 0.0
        %2186 = vmatpush1.msra.mxu0 0.0
        %2187 = vmatprep.subr.mxu0 0.0
        %2188 = vmatpush1.msra.mxu0 0.0
        %2189 = vmatprep.subr.mxu0 0.0
        %2190 = vmatpush1.msra.mxu0 0.0
        %2191 = vmatprep.subr.mxu0 0.0
        %2192 = vmatpush1.msra.mxu0 0.0
        %2193 = vmatprep.subr.mxu0 0.0
        %2194 = vmatpush1.msra.mxu0 0.0
        %2195 = vmatprep.subr.mxu0 0.0
        %2196 = vmatpush1.msra.mxu0 0.0
        %2197 = vmatprep.subr.mxu0 0.0
        %2198 = vmatpush1.msra.mxu0 0.0
        %2199 = vmatprep.subr.mxu0 0.0
        %2200 = vmatpush1.msra.mxu0 0.0
        %2201 = vmatprep.subr.mxu0 0.0
        %2202 = vmatpush1.msra.mxu0 0.0
        %2203 = vmatprep.mubr.f32.mxu0 0.0
        %2204 = vmatmul.mubr.f32.gmra.mrb[0].mxu0 %v2134
        %v2205 = vpop.f32.mrb[0].mxu0
        %v2206 = vadd.f32 0.0, %v2205
        %v2207 = vpop.f32.mrb[0].mxu0
        %2208 = vmatprep.mubr.f32.mxu0 0.0
        %2209 = vmatmul.mubr.f32.gmra.mrb[0].mxu0 %v2137
        %v2210 = vpop.f32.mrb[0].mxu0
        %v2211 = vadd.f32 0.0, %v2210
        %v2212 = vpop.f32.mrb[0].mxu0
        %2213 = vdwg.mxu0
        %2214 = vxpose.xlu0.b32.start [1/16] %v1509, 128
        %2215 = vxpose.xlu0.b32.cont [2/16] 0.0, 128
        %2216 = vxpose.xlu0.b32.cont [3/16] 0.0, 128
        %2217 = vxpose.xlu0.b32.cont [4/16] 0.0, 128
        %2218 = vxpose.xlu0.b32.cont [5/16] 0.0, 128
        %2219 = vxpose.xlu0.b32.cont [6/16] 0.0, 128
        %2220 = vxpose.xlu0.b32.cont [7/16] 0.0, 128
        %2221 = vxpose.xlu0.b32.cont [8/16] 0.0, 128
        %2222 = vxpose.xlu0.b32.cont [9/16] 0.0, 128
        %2223 = vxpose.xlu0.b32.cont [10/16] 0.0, 128
        %2224 = vxpose.xlu0.b32.cont [11/16] 0.0, 128
        %2225 = vxpose.xlu0.b32.cont [12/16] 0.0, 128
        %2226 = vxpose.xlu0.b32.cont [13/16] 0.0, 128
        %2227 = vxpose.xlu0.b32.cont [14/16] 0.0, 128
        %2228 = vxpose.xlu0.b32.cont [15/16] 0.0, 128
        %2229 = vxpose.xlu0.b32.end [16/16] 0.0, 128
        %v2230 = vpop.trf.xlu0
        %v2231 = vpop.trf.xlu0
        %v2232 = vpop.trf.xlu0
        %v2233 = vpop.trf.xlu0
        %v2234 = vpop.trf.xlu0
        %v2235 = vpop.trf.xlu0
        %v2236 = vpop.trf.xlu0
        %v2237 = vpop.trf.xlu0
        %v2238 = vpop.trf.xlu0
        %v2239 = vpop.trf.xlu0
        %v2240 = vpop.trf.xlu0
        %v2241 = vpop.trf.xlu0
        %v2242 = vpop.trf.xlu0
        %v2243 = vpop.trf.xlu0
        %v2244 = vpop.trf.xlu0
        %v2245 = vpop.trf.xlu0
        %v2247 = vsel %vm2132, %v2230, 0
        %v2250 = vsel %vm2132, %v2231, 0
        %2252 = vmatprep.subr.mxu0 0.0
        %2253 = vmatpush1.msra.mxu0 %v627
        %2254 = vmatprep.subr.mxu0 0.0
        %2255 = vmatpush1.msra.mxu0 0.0
        %2256 = vmatprep.subr.mxu0 0.0
        %2257 = vmatpush1.msra.mxu0 0.0
        %2258 = vmatprep.subr.mxu0 0.0
        %2259 = vmatpush1.msra.mxu0 0.0
        %2260 = vmatprep.subr.mxu0 0.0
        %2261 = vmatpush1.msra.mxu0 0.0
        %2262 = vmatprep.subr.mxu0 0.0
        %2263 = vmatpush1.msra.mxu0 0.0
        %2264 = vmatprep.subr.mxu0 0.0
        %2265 = vmatpush1.msra.mxu0 0.0
        %2266 = vmatprep.subr.mxu0 0.0
        %2267 = vmatpush1.msra.mxu0 0.0
        %2268 = vmatprep.subr.mxu0 0.0
        %2269 = vmatpush1.msra.mxu0 0.0
        %2270 = vmatprep.subr.mxu0 0.0
        %2271 = vmatpush1.msra.mxu0 0.0
        %2272 = vmatprep.subr.mxu0 0.0
        %2273 = vmatpush1.msra.mxu0 0.0
        %2274 = vmatprep.subr.mxu0 0.0
        %2275 = vmatpush1.msra.mxu0 0.0
        %2276 = vmatprep.subr.mxu0 0.0
        %2277 = vmatpush1.msra.mxu0 0.0
        %2278 = vmatprep.subr.mxu0 0.0
        %2279 = vmatpush1.msra.mxu0 0.0
        %2280 = vmatprep.subr.mxu0 0.0
        %2281 = vmatpush1.msra.mxu0 0.0
        %2282 = vmatprep.subr.mxu0 0.0
        %2283 = vmatpush1.msra.mxu0 0.0
        %2284 = vmatprep.subr.mxu0 0.0
        %2285 = vmatpush1.msra.mxu0 0.0
        %2286 = vmatprep.subr.mxu0 0.0
        %2287 = vmatpush1.msra.mxu0 0.0
        %2288 = vmatprep.subr.mxu0 0.0
        %2289 = vmatpush1.msra.mxu0 0.0
        %2290 = vmatprep.subr.mxu0 0.0
        %2291 = vmatpush1.msra.mxu0 0.0
        %2292 = vmatprep.subr.mxu0 0.0
        %2293 = vmatpush1.msra.mxu0 0.0
        %2294 = vmatprep.subr.mxu0 0.0
        %2295 = vmatpush1.msra.mxu0 0.0
        %2296 = vmatprep.subr.mxu0 0.0
        %2297 = vmatpush1.msra.mxu0 0.0
        %2298 = vmatprep.subr.mxu0 0.0
        %2299 = vmatpush1.msra.mxu0 0.0
        %2300 = vmatprep.subr.mxu0 0.0
        %2301 = vmatpush1.msra.mxu0 0.0
        %2302 = vmatprep.subr.mxu0 0.0
        %2303 = vmatpush1.msra.mxu0 0.0
        %2304 = vmatprep.subr.mxu0 0.0
        %2305 = vmatpush1.msra.mxu0 0.0
        %2306 = vmatprep.subr.mxu0 0.0
        %2307 = vmatpush1.msra.mxu0 0.0
        %2308 = vmatprep.subr.mxu0 0.0
        %2309 = vmatpush1.msra.mxu0 0.0
        %2310 = vmatprep.subr.mxu0 0.0
        %2311 = vmatpush1.msra.mxu0 0.0
        %2312 = vmatprep.subr.mxu0 0.0
        %2313 = vmatpush1.msra.mxu0 0.0
        %2314 = vmatprep.subr.mxu0 0.0
        %2315 = vmatpush1.msra.mxu0 0.0
        %2316 = vmatprep.mubr.f32.mxu0 0.0
        %2317 = vmatmul.mubr.f32.gmra.mrb[0].mxu0 %v2247
        %v2318 = vpop.f32.mrb[0].mxu0
        %v2319 = vadd.f32 0.0, %v2318
        %v2320 = vpop.f32.mrb[0].mxu0
        %2321 = vmatprep.mubr.f32.mxu0 0.0
        %2322 = vmatmul.mubr.f32.gmra.mrb[0].mxu0 %v2250
        %v2323 = vpop.f32.mrb[0].mxu0
        %v2324 = vadd.f32 0.0, %v2323
        %v2325 = vpop.f32.mrb[0].mxu0
        %2326 = vdwg.mxu0
        %2327 = vxpose.xlu0.b32.start [1/16] %v1510, 128
        %2328 = vxpose.xlu0.b32.cont [2/16] 0.0, 128
        %2329 = vxpose.xlu0.b32.cont [3/16] 0.0, 128
        %2330 = vxpose.xlu0.b32.cont [4/16] 0.0, 128
        %2331 = vxpose.xlu0.b32.cont [5/16] 0.0, 128
        %2332 = vxpose.xlu0.b32.cont [6/16] 0.0, 128
        %2333 = vxpose.xlu0.b32.cont [7/16] 0.0, 128
        %2334 = vxpose.xlu0.b32.cont [8/16] 0.0, 128
        %2335 = vxpose.xlu0.b32.cont [9/16] 0.0, 128
        %2336 = vxpose.xlu0.b32.cont [10/16] 0.0, 128
        %2337 = vxpose.xlu0.b32.cont [11/16] 0.0, 128
        %2338 = vxpose.xlu0.b32.cont [12/16] 0.0, 128
        %2339 = vxpose.xlu0.b32.cont [13/16] 0.0, 128
        %2340 = vxpose.xlu0.b32.cont [14/16] 0.0, 128
        %2341 = vxpose.xlu0.b32.cont [15/16] 0.0, 128
        %2342 = vxpose.xlu0.b32.end [16/16] 0.0, 128
        %v2343 = vpop.trf.xlu0
        %v2344 = vpop.trf.xlu0
        %v2345 = vpop.trf.xlu0
        %v2346 = vpop.trf.xlu0
        %v2347 = vpop.trf.xlu0
        %v2348 = vpop.trf.xlu0
        %v2349 = vpop.trf.xlu0
        %v2350 = vpop.trf.xlu0
        %v2351 = vpop.trf.xlu0
        %v2352 = vpop.trf.xlu0
        %v2353 = vpop.trf.xlu0
        %v2354 = vpop.trf.xlu0
        %v2355 = vpop.trf.xlu0
        %v2356 = vpop.trf.xlu0
        %v2357 = vpop.trf.xlu0
        %v2358 = vpop.trf.xlu0
        %v2360 = vsel %vm2132, %v2343, 0
        %v2363 = vsel %vm2132, %v2344, 0
        %2365 = vmatprep.subr.mxu0 0.0
        %2366 = vmatpush1.msra.mxu0 %v628
        %2367 = vmatprep.subr.mxu0 0.0
        %2368 = vmatpush1.msra.mxu0 0.0
        %2369 = vmatprep.subr.mxu0 0.0
        %2370 = vmatpush1.msra.mxu0 0.0
        %2371 = vmatprep.subr.mxu0 0.0
        %2372 = vmatpush1.msra.mxu0 0.0
        %2373 = vmatprep.subr.mxu0 0.0
        %2374 = vmatpush1.msra.mxu0 0.0
        %2375 = vmatprep.subr.mxu0 0.0
        %2376 = vmatpush1.msra.mxu0 0.0
        %2377 = vmatprep.subr.mxu0 0.0
        %2378 = vmatpush1.msra.mxu0 0.0
        %2379 = vmatprep.subr.mxu0 0.0
        %2380 = vmatpush1.msra.mxu0 0.0
        %2381 = vmatprep.subr.mxu0 0.0
        %2382 = vmatpush1.msra.mxu0 0.0
        %2383 = vmatprep.subr.mxu0 0.0
        %2384 = vmatpush1.msra.mxu0 0.0
        %2385 = vmatprep.subr.mxu0 0.0
        %2386 = vmatpush1.msra.mxu0 0.0
        %2387 = vmatprep.subr.mxu0 0.0
        %2388 = vmatpush1.msra.mxu0 0.0
        %2389 = vmatprep.subr.mxu0 0.0
        %2390 = vmatpush1.msra.mxu0 0.0
        %2391 = vmatprep.subr.mxu0 0.0
        %2392 = vmatpush1.msra.mxu0 0.0
        %2393 = vmatprep.subr.mxu0 0.0
        %2394 = vmatpush1.msra.mxu0 0.0
        %2395 = vmatprep.subr.mxu0 0.0
        %2396 = vmatpush1.msra.mxu0 0.0
        %2397 = vmatprep.subr.mxu0 0.0
        %2398 = vmatpush1.msra.mxu0 0.0
        %2399 = vmatprep.subr.mxu0 0.0
        %2400 = vmatpush1.msra.mxu0 0.0
        %2401 = vmatprep.subr.mxu0 0.0
        %2402 = vmatpush1.msra.mxu0 0.0
        %2403 = vmatprep.subr.mxu0 0.0
        %2404 = vmatpush1.msra.mxu0 0.0
        %2405 = vmatprep.subr.mxu0 0.0
        %2406 = vmatpush1.msra.mxu0 0.0
        %2407 = vmatprep.subr.mxu0 0.0
        %2408 = vmatpush1.msra.mxu0 0.0
        %2409 = vmatprep.subr.mxu0 0.0
        %2410 = vmatpush1.msra.mxu0 0.0
        %2411 = vmatprep.subr.mxu0 0.0
        %2412 = vmatpush1.msra.mxu0 0.0
        %2413 = vmatprep.subr.mxu0 0.0
        %2414 = vmatpush1.msra.mxu0 0.0
        %2415 = vmatprep.subr.mxu0 0.0
        %2416 = vmatpush1.msra.mxu0 0.0
        %2417 = vmatprep.subr.mxu0 0.0
        %2418 = vmatpush1.msra.mxu0 0.0
        %2419 = vmatprep.subr.mxu0 0.0
        %2420 = vmatpush1.msra.mxu0 0.0
        %2421 = vmatprep.subr.mxu0 0.0
        %2422 = vmatpush1.msra.mxu0 0.0
        %2423 = vmatprep.subr.mxu0 0.0
        %2424 = vmatpush1.msra.mxu0 0.0
        %2425 = vmatprep.subr.mxu0 0.0
        %2426 = vmatpush1.msra.mxu0 0.0
        %2427 = vmatprep.subr.mxu0 0.0
        %2428 = vmatpush1.msra.mxu0 0.0
        %2429 = vmatprep.mubr.f32.mxu0 0.0
        %2430 = vmatmul.mubr.f32.gmra.mrb[0].mxu0 %v2360
        %v2431 = vpop.f32.mrb[0].mxu0
        %v2432 = vadd.f32 0.0, %v2431
        %v2433 = vpop.f32.mrb[0].mxu0
        %2434 = vmatprep.mubr.f32.mxu0 0.0
        %2435 = vmatmul.mubr.f32.gmra.mrb[0].mxu0 %v2363
        %v2436 = vpop.f32.mrb[0].mxu0
        %v2437 = vadd.f32 0.0, %v2436
        %v2438 = vpop.f32.mrb[0].mxu0
        %2439 = vdwg.mxu0
        %2440 = vxpose.xlu0.b32.start [1/16] %v1511, 128
        %2441 = vxpose.xlu0.b32.cont [2/16] 0.0, 128
        %2442 = vxpose.xlu0.b32.cont [3/16] 0.0, 128
        %2443 = vxpose.xlu0.b32.cont [4/16] 0.0, 128
        %2444 = vxpose.xlu0.b32.cont [5/16] 0.0, 128
        %2445 = vxpose.xlu0.b32.cont [6/16] 0.0, 128
        %2446 = vxpose.xlu0.b32.cont [7/16] 0.0, 128
        %2447 = vxpose.xlu0.b32.cont [8/16] 0.0, 128
        %2448 = vxpose.xlu0.b32.cont [9/16] 0.0, 128
        %2449 = vxpose.xlu0.b32.cont [10/16] 0.0, 128
        %2450 = vxpose.xlu0.b32.cont [11/16] 0.0, 128
        %2451 = vxpose.xlu0.b32.cont [12/16] 0.0, 128
        %2452 = vxpose.xlu0.b32.cont [13/16] 0.0, 128
        %2453 = vxpose.xlu0.b32.cont [14/16] 0.0, 128
        %2454 = vxpose.xlu0.b32.cont [15/16] 0.0, 128
        %2455 = vxpose.xlu0.b32.end [16/16] 0.0, 128
        %v2456 = vpop.trf.xlu0
        %v2457 = vpop.trf.xlu0
        %v2458 = vpop.trf.xlu0
        %v2459 = vpop.trf.xlu0
        %v2460 = vpop.trf.xlu0
        %v2461 = vpop.trf.xlu0
        %v2462 = vpop.trf.xlu0
        %v2463 = vpop.trf.xlu0
        %v2464 = vpop.trf.xlu0
        %v2465 = vpop.trf.xlu0
        %v2466 = vpop.trf.xlu0
        %v2467 = vpop.trf.xlu0
        %v2468 = vpop.trf.xlu0
        %v2469 = vpop.trf.xlu0
        %v2470 = vpop.trf.xlu0
        %v2471 = vpop.trf.xlu0
        %v2473 = vsel %vm2132, %v2456, 0
        %v2476 = vsel %vm2132, %v2457, 0
        %2478 = vmatprep.subr.mxu0 0.0
        %2479 = vmatpush1.msra.mxu0 %v629
        %2480 = vmatprep.subr.mxu0 0.0
        %2481 = vmatpush1.msra.mxu0 0.0
        %2482 = vmatprep.subr.mxu0 0.0
        %2483 = vmatpush1.msra.mxu0 0.0
        %2484 = vmatprep.subr.mxu0 0.0
        %2485 = vmatpush1.msra.mxu0 0.0
        %2486 = vmatprep.subr.mxu0 0.0
        %2487 = vmatpush1.msra.mxu0 0.0
        %2488 = vmatprep.subr.mxu0 0.0
        %2489 = vmatpush1.msra.mxu0 0.0
        %2490 = vmatprep.subr.mxu0 0.0
        %2491 = vmatpush1.msra.mxu0 0.0
        %2492 = vmatprep.subr.mxu0 0.0
        %2493 = vmatpush1.msra.mxu0 0.0
        %2494 = vmatprep.subr.mxu0 0.0
        %2495 = vmatpush1.msra.mxu0 0.0
        %2496 = vmatprep.subr.mxu0 0.0
        %2497 = vmatpush1.msra.mxu0 0.0
        %2498 = vmatprep.subr.mxu0 0.0
        %2499 = vmatpush1.msra.mxu0 0.0
        %2500 = vmatprep.subr.mxu0 0.0
        %2501 = vmatpush1.msra.mxu0 0.0
        %2502 = vmatprep.subr.mxu0 0.0
        %2503 = vmatpush1.msra.mxu0 0.0
        %2504 = vmatprep.subr.mxu0 0.0
        %2505 = vmatpush1.msra.mxu0 0.0
        %2506 = vmatprep.subr.mxu0 0.0
        %2507 = vmatpush1.msra.mxu0 0.0
        %2508 = vmatprep.subr.mxu0 0.0
        %2509 = vmatpush1.msra.mxu0 0.0
        %2510 = vmatprep.subr.mxu0 0.0
        %2511 = vmatpush1.msra.mxu0 0.0
        %2512 = vmatprep.subr.mxu0 0.0
        %2513 = vmatpush1.msra.mxu0 0.0
        %2514 = vmatprep.subr.mxu0 0.0
        %2515 = vmatpush1.msra.mxu0 0.0
        %2516 = vmatprep.subr.mxu0 0.0
        %2517 = vmatpush1.msra.mxu0 0.0
        %2518 = vmatprep.subr.mxu0 0.0
        %2519 = vmatpush1.msra.mxu0 0.0
        %2520 = vmatprep.subr.mxu0 0.0
        %2521 = vmatpush1.msra.mxu0 0.0
        %2522 = vmatprep.subr.mxu0 0.0
        %2523 = vmatpush1.msra.mxu0 0.0
        %2524 = vmatprep.subr.mxu0 0.0
        %2525 = vmatpush1.msra.mxu0 0.0
        %2526 = vmatprep.subr.mxu0 0.0
        %2527 = vmatpush1.msra.mxu0 0.0
        %2528 = vmatprep.subr.mxu0 0.0
        %2529 = vmatpush1.msra.mxu0 0.0
        %2530 = vmatprep.subr.mxu0 0.0
        %2531 = vmatpush1.msra.mxu0 0.0
        %2532 = vmatprep.subr.mxu0 0.0
        %2533 = vmatpush1.msra.mxu0 0.0
        %2534 = vmatprep.subr.mxu0 0.0
        %2535 = vmatpush1.msra.mxu0 0.0
        %2536 = vmatprep.subr.mxu0 0.0
        %2537 = vmatpush1.msra.mxu0 0.0
        %2538 = vmatprep.subr.mxu0 0.0
        %2539 = vmatpush1.msra.mxu0 0.0
        %2540 = vmatprep.subr.mxu0 0.0
        %2541 = vmatpush1.msra.mxu0 0.0
        %2542 = vmatprep.mubr.f32.mxu0 0.0
        %2543 = vmatmul.mubr.f32.gmra.mrb[0].mxu0 %v2473
        %v2544 = vpop.f32.mrb[0].mxu0
        %v2545 = vadd.f32 0.0, %v2544
        %v2546 = vpop.f32.mrb[0].mxu0
        %2547 = vmatprep.mubr.f32.mxu0 0.0
        %2548 = vmatmul.mubr.f32.gmra.mrb[0].mxu0 %v2476
        %v2549 = vpop.f32.mrb[0].mxu0
        %v2550 = vadd.f32 0.0, %v2549
        %v2551 = vpop.f32.mrb[0].mxu0
        %2552 = vdwg.mxu0
        %2553 = vxpose.xlu0.b32.start [1/16] %v1512, 128
        %2554 = vxpose.xlu0.b32.cont [2/16] 0.0, 128
        %2555 = vxpose.xlu0.b32.cont [3/16] 0.0, 128
        %2556 = vxpose.xlu0.b32.cont [4/16] 0.0, 128
        %2557 = vxpose.xlu0.b32.cont [5/16] 0.0, 128
        %2558 = vxpose.xlu0.b32.cont [6/16] 0.0, 128
        %2559 = vxpose.xlu0.b32.cont [7/16] 0.0, 128
        %2560 = vxpose.xlu0.b32.cont [8/16] 0.0, 128
        %2561 = vxpose.xlu0.b32.cont [9/16] 0.0, 128
        %2562 = vxpose.xlu0.b32.cont [10/16] 0.0, 128
        %2563 = vxpose.xlu0.b32.cont [11/16] 0.0, 128
        %2564 = vxpose.xlu0.b32.cont [12/16] 0.0, 128
        %2565 = vxpose.xlu0.b32.cont [13/16] 0.0, 128
        %2566 = vxpose.xlu0.b32.cont [14/16] 0.0, 128
        %2567 = vxpose.xlu0.b32.cont [15/16] 0.0, 128
        %2568 = vxpose.xlu0.b32.end [16/16] 0.0, 128
        %v2569 = vpop.trf.xlu0
        %v2570 = vpop.trf.xlu0
        %v2571 = vpop.trf.xlu0
        %v2572 = vpop.trf.xlu0
        %v2573 = vpop.trf.xlu0
        %v2574 = vpop.trf.xlu0
        %v2575 = vpop.trf.xlu0
        %v2576 = vpop.trf.xlu0
        %v2577 = vpop.trf.xlu0
        %v2578 = vpop.trf.xlu0
        %v2579 = vpop.trf.xlu0
        %v2580 = vpop.trf.xlu0
        %v2581 = vpop.trf.xlu0
        %v2582 = vpop.trf.xlu0
        %v2583 = vpop.trf.xlu0
        %v2584 = vpop.trf.xlu0
        %v2586 = vsel %vm2132, %v2569, 0
        %v2589 = vsel %vm2132, %v2570, 0
        %2591 = vmatprep.subr.mxu0 0.0
        %2592 = vmatpush1.msra.mxu0 %v630
        %2593 = vmatprep.subr.mxu0 0.0
        %2594 = vmatpush1.msra.mxu0 0.0
        %2595 = vmatprep.subr.mxu0 0.0
        %2596 = vmatpush1.msra.mxu0 0.0
        %2597 = vmatprep.subr.mxu0 0.0
        %2598 = vmatpush1.msra.mxu0 0.0
        %2599 = vmatprep.subr.mxu0 0.0
        %2600 = vmatpush1.msra.mxu0 0.0
        %2601 = vmatprep.subr.mxu0 0.0
        %2602 = vmatpush1.msra.mxu0 0.0
        %2603 = vmatprep.subr.mxu0 0.0
        %2604 = vmatpush1.msra.mxu0 0.0
        %2605 = vmatprep.subr.mxu0 0.0
        %2606 = vmatpush1.msra.mxu0 0.0
        %2607 = vmatprep.subr.mxu0 0.0
        %2608 = vmatpush1.msra.mxu0 0.0
        %2609 = vmatprep.subr.mxu0 0.0
        %2610 = vmatpush1.msra.mxu0 0.0
        %2611 = vmatprep.subr.mxu0 0.0
        %2612 = vmatpush1.msra.mxu0 0.0
        %2613 = vmatprep.subr.mxu0 0.0
        %2614 = vmatpush1.msra.mxu0 0.0
        %2615 = vmatprep.subr.mxu0 0.0
        %2616 = vmatpush1.msra.mxu0 0.0
        %2617 = vmatprep.subr.mxu0 0.0
        %2618 = vmatpush1.msra.mxu0 0.0
        %2619 = vmatprep.subr.mxu0 0.0
        %2620 = vmatpush1.msra.mxu0 0.0
        %2621 = vmatprep.subr.mxu0 0.0
        %2622 = vmatpush1.msra.mxu0 0.0
        %2623 = vmatprep.subr.mxu0 0.0
        %2624 = vmatpush1.msra.mxu0 0.0
        %2625 = vmatprep.subr.mxu0 0.0
        %2626 = vmatpush1.msra.mxu0 0.0
        %2627 = vmatprep.subr.mxu0 0.0
        %2628 = vmatpush1.msra.mxu0 0.0
        %2629 = vmatprep.subr.mxu0 0.0
        %2630 = vmatpush1.msra.mxu0 0.0
        %2631 = vmatprep.subr.mxu0 0.0
        %2632 = vmatpush1.msra.mxu0 0.0
        %2633 = vmatprep.subr.mxu0 0.0
        %2634 = vmatpush1.msra.mxu0 0.0
        %2635 = vmatprep.subr.mxu0 0.0
        %2636 = vmatpush1.msra.mxu0 0.0
        %2637 = vmatprep.subr.mxu0 0.0
        %2638 = vmatpush1.msra.mxu0 0.0
        %2639 = vmatprep.subr.mxu0 0.0
        %2640 = vmatpush1.msra.mxu0 0.0
        %2641 = vmatprep.subr.mxu0 0.0
        %2642 = vmatpush1.msra.mxu0 0.0
        %2643 = vmatprep.subr.mxu0 0.0
        %2644 = vmatpush1.msra.mxu0 0.0
        %2645 = vmatprep.subr.mxu0 0.0
        %2646 = vmatpush1.msra.mxu0 0.0
        %2647 = vmatprep.subr.mxu0 0.0
        %2648 = vmatpush1.msra.mxu0 0.0
        %2649 = vmatprep.subr.mxu0 0.0
        %2650 = vmatpush1.msra.mxu0 0.0
        %2651 = vmatprep.subr.mxu0 0.0
        %2652 = vmatpush1.msra.mxu0 0.0
        %2653 = vmatprep.subr.mxu0 0.0
        %2654 = vmatpush1.msra.mxu0 0.0
        %2655 = vmatprep.mubr.f32.mxu0 0.0
        %2656 = vmatmul.mubr.f32.gmra.mrb[0].mxu0 %v2586
        %v2657 = vpop.f32.mrb[0].mxu0
        %v2658 = vadd.f32 0.0, %v2657
        %v2659 = vpop.f32.mrb[0].mxu0
        %2660 = vmatprep.mubr.f32.mxu0 0.0
        %2661 = vmatmul.mubr.f32.gmra.mrb[0].mxu0 %v2589
        %v2662 = vpop.f32.mrb[0].mxu0
        %v2663 = vadd.f32 0.0, %v2662
        %v2664 = vpop.f32.mrb[0].mxu0
        %2665 = vdwg.mxu0
        %2666 = vxpose.xlu0.b32.start [1/16] %v1513, 128
        %2667 = vxpose.xlu0.b32.cont [2/16] 0.0, 128
        %2668 = vxpose.xlu0.b32.cont [3/16] 0.0, 128
        %2669 = vxpose.xlu0.b32.cont [4/16] 0.0, 128
        %2670 = vxpose.xlu0.b32.cont [5/16] 0.0, 128
        %2671 = vxpose.xlu0.b32.cont [6/16] 0.0, 128
        %2672 = vxpose.xlu0.b32.cont [7/16] 0.0, 128
        %2673 = vxpose.xlu0.b32.cont [8/16] 0.0, 128
        %2674 = vxpose.xlu0.b32.cont [9/16] 0.0, 128
        %2675 = vxpose.xlu0.b32.cont [10/16] 0.0, 128
        %2676 = vxpose.xlu0.b32.cont [11/16] 0.0, 128
        %2677 = vxpose.xlu0.b32.cont [12/16] 0.0, 128
        %2678 = vxpose.xlu0.b32.cont [13/16] 0.0, 128
        %2679 = vxpose.xlu0.b32.cont [14/16] 0.0, 128
        %2680 = vxpose.xlu0.b32.cont [15/16] 0.0, 128
        %2681 = vxpose.xlu0.b32.end [16/16] 0.0, 128
        %v2682 = vpop.trf.xlu0
        %v2683 = vpop.trf.xlu0
        %v2684 = vpop.trf.xlu0
        %v2685 = vpop.trf.xlu0
        %v2686 = vpop.trf.xlu0
        %v2687 = vpop.trf.xlu0
        %v2688 = vpop.trf.xlu0
        %v2689 = vpop.trf.xlu0
        %v2690 = vpop.trf.xlu0
        %v2691 = vpop.trf.xlu0
        %v2692 = vpop.trf.xlu0
        %v2693 = vpop.trf.xlu0
        %v2694 = vpop.trf.xlu0
        %v2695 = vpop.trf.xlu0
        %v2696 = vpop.trf.xlu0
        %v2697 = vpop.trf.xlu0
        %v2699 = vsel %vm2132, %v2682, 0
        %v2702 = vsel %vm2132, %v2683, 0
        %2704 = vmatprep.subr.mxu0 0.0
        %2705 = vmatpush1.msra.mxu0 %v631
        %2706 = vmatprep.subr.mxu0 0.0
        %2707 = vmatpush1.msra.mxu0 0.0
        %2708 = vmatprep.subr.mxu0 0.0
        %2709 = vmatpush1.msra.mxu0 0.0
        %2710 = vmatprep.subr.mxu0 0.0
        %2711 = vmatpush1.msra.mxu0 0.0
        %2712 = vmatprep.subr.mxu0 0.0
        %2713 = vmatpush1.msra.mxu0 0.0
        %2714 = vmatprep.subr.mxu0 0.0
        %2715 = vmatpush1.msra.mxu0 0.0
        %2716 = vmatprep.subr.mxu0 0.0
        %2717 = vmatpush1.msra.mxu0 0.0
        %2718 = vmatprep.subr.mxu0 0.0
        %2719 = vmatpush1.msra.mxu0 0.0
        %2720 = vmatprep.subr.mxu0 0.0
        %2721 = vmatpush1.msra.mxu0 0.0
        %2722 = vmatprep.subr.mxu0 0.0
        %2723 = vmatpush1.msra.mxu0 0.0
        %2724 = vmatprep.subr.mxu0 0.0
        %2725 = vmatpush1.msra.mxu0 0.0
        %2726 = vmatprep.subr.mxu0 0.0
        %2727 = vmatpush1.msra.mxu0 0.0
        %2728 = vmatprep.subr.mxu0 0.0
        %2729 = vmatpush1.msra.mxu0 0.0
        %2730 = vmatprep.subr.mxu0 0.0
        %2731 = vmatpush1.msra.mxu0 0.0
        %2732 = vmatprep.subr.mxu0 0.0
        %2733 = vmatpush1.msra.mxu0 0.0
        %2734 = vmatprep.subr.mxu0 0.0
        %2735 = vmatpush1.msra.mxu0 0.0
        %2736 = vmatprep.subr.mxu0 0.0
        %2737 = vmatpush1.msra.mxu0 0.0
        %2738 = vmatprep.subr.mxu0 0.0
        %2739 = vmatpush1.msra.mxu0 0.0
        %2740 = vmatprep.subr.mxu0 0.0
        %2741 = vmatpush1.msra.mxu0 0.0
        %2742 = vmatprep.subr.mxu0 0.0
        %2743 = vmatpush1.msra.mxu0 0.0
        %2744 = vmatprep.subr.mxu0 0.0
        %2745 = vmatpush1.msra.mxu0 0.0
        %2746 = vmatprep.subr.mxu0 0.0
        %2747 = vmatpush1.msra.mxu0 0.0
        %2748 = vmatprep.subr.mxu0 0.0
        %2749 = vmatpush1.msra.mxu0 0.0
        %2750 = vmatprep.subr.mxu0 0.0
        %2751 = vmatpush1.msra.mxu0 0.0
        %2752 = vmatprep.subr.mxu0 0.0
        %2753 = vmatpush1.msra.mxu0 0.0
        %2754 = vmatprep.subr.mxu0 0.0
        %2755 = vmatpush1.msra.mxu0 0.0
        %2756 = vmatprep.subr.mxu0 0.0
        %2757 = vmatpush1.msra.mxu0 0.0
        %2758 = vmatprep.subr.mxu0 0.0
        %2759 = vmatpush1.msra.mxu0 0.0
        %2760 = vmatprep.subr.mxu0 0.0
        %2761 = vmatpush1.msra.mxu0 0.0
        %2762 = vmatprep.subr.mxu0 0.0
        %2763 = vmatpush1.msra.mxu0 0.0
        %2764 = vmatprep.subr.mxu0 0.0
        %2765 = vmatpush1.msra.mxu0 0.0
        %2766 = vmatprep.subr.mxu0 0.0
        %2767 = vmatpush1.msra.mxu0 0.0
        %2768 = vmatprep.mubr.f32.mxu0 0.0
        %2769 = vmatmul.mubr.f32.gmra.mrb[0].mxu0 %v2699
        %v2770 = vpop.f32.mrb[0].mxu0
        %v2771 = vadd.f32 0.0, %v2770
        %v2772 = vpop.f32.mrb[0].mxu0
        %2773 = vmatprep.mubr.f32.mxu0 0.0
        %2774 = vmatmul.mubr.f32.gmra.mrb[0].mxu0 %v2702
        %v2775 = vpop.f32.mrb[0].mxu0
        %v2776 = vadd.f32 0.0, %v2775
        %v2777 = vpop.f32.mrb[0].mxu0
        %2778 = vdwg.mxu0
        %2779 = vxpose.xlu0.b32.start [1/16] %v1514, 128
        %2780 = vxpose.xlu0.b32.cont [2/16] 0.0, 128
        %2781 = vxpose.xlu0.b32.cont [3/16] 0.0, 128
        %2782 = vxpose.xlu0.b32.cont [4/16] 0.0, 128
        %2783 = vxpose.xlu0.b32.cont [5/16] 0.0, 128
        %2784 = vxpose.xlu0.b32.cont [6/16] 0.0, 128
        %2785 = vxpose.xlu0.b32.cont [7/16] 0.0, 128
        %2786 = vxpose.xlu0.b32.cont [8/16] 0.0, 128
        %2787 = vxpose.xlu0.b32.cont [9/16] 0.0, 128
        %2788 = vxpose.xlu0.b32.cont [10/16] 0.0, 128
        %2789 = vxpose.xlu0.b32.cont [11/16] 0.0, 128
        %2790 = vxpose.xlu0.b32.cont [12/16] 0.0, 128
        %2791 = vxpose.xlu0.b32.cont [13/16] 0.0, 128
        %2792 = vxpose.xlu0.b32.cont [14/16] 0.0, 128
        %2793 = vxpose.xlu0.b32.cont [15/16] 0.0, 128
        %2794 = vxpose.xlu0.b32.end [16/16] 0.0, 128
        %v2795 = vpop.trf.xlu0
        %v2796 = vpop.trf.xlu0
        %v2797 = vpop.trf.xlu0
        %v2798 = vpop.trf.xlu0
        %v2799 = vpop.trf.xlu0
        %v2800 = vpop.trf.xlu0
        %v2801 = vpop.trf.xlu0
        %v2802 = vpop.trf.xlu0
        %v2803 = vpop.trf.xlu0
        %v2804 = vpop.trf.xlu0
        %v2805 = vpop.trf.xlu0
        %v2806 = vpop.trf.xlu0
        %v2807 = vpop.trf.xlu0
        %v2808 = vpop.trf.xlu0
        %v2809 = vpop.trf.xlu0
        %v2810 = vpop.trf.xlu0
        %v2812 = vsel %vm2132, %v2795, 0
        %v2815 = vsel %vm2132, %v2796, 0
        %2817 = vmatprep.subr.mxu0 0.0
        %2818 = vmatpush1.msra.mxu0 %v632
        %2819 = vmatprep.subr.mxu0 0.0
        %2820 = vmatpush1.msra.mxu0 0.0
        %2821 = vmatprep.subr.mxu0 0.0
        %2822 = vmatpush1.msra.mxu0 0.0
        %2823 = vmatprep.subr.mxu0 0.0
        %2824 = vmatpush1.msra.mxu0 0.0
        %2825 = vmatprep.subr.mxu0 0.0
        %2826 = vmatpush1.msra.mxu0 0.0
        %2827 = vmatprep.subr.mxu0 0.0
        %2828 = vmatpush1.msra.mxu0 0.0
        %2829 = vmatprep.subr.mxu0 0.0
        %2830 = vmatpush1.msra.mxu0 0.0
        %2831 = vmatprep.subr.mxu0 0.0
        %2832 = vmatpush1.msra.mxu0 0.0
        %2833 = vmatprep.subr.mxu0 0.0
        %2834 = vmatpush1.msra.mxu0 0.0
        %2835 = vmatprep.subr.mxu0 0.0
        %2836 = vmatpush1.msra.mxu0 0.0
        %2837 = vmatprep.subr.mxu0 0.0
        %2838 = vmatpush1.msra.mxu0 0.0
        %2839 = vmatprep.subr.mxu0 0.0
        %2840 = vmatpush1.msra.mxu0 0.0
        %2841 = vmatprep.subr.mxu0 0.0
        %2842 = vmatpush1.msra.mxu0 0.0
        %2843 = vmatprep.subr.mxu0 0.0
        %2844 = vmatpush1.msra.mxu0 0.0
        %2845 = vmatprep.subr.mxu0 0.0
        %2846 = vmatpush1.msra.mxu0 0.0
        %2847 = vmatprep.subr.mxu0 0.0
        %2848 = vmatpush1.msra.mxu0 0.0
        %2849 = vmatprep.subr.mxu0 0.0
        %2850 = vmatpush1.msra.mxu0 0.0
        %2851 = vmatprep.subr.mxu0 0.0
        %2852 = vmatpush1.msra.mxu0 0.0
        %2853 = vmatprep.subr.mxu0 0.0
        %2854 = vmatpush1.msra.mxu0 0.0
        %2855 = vmatprep.subr.mxu0 0.0
        %2856 = vmatpush1.msra.mxu0 0.0
        %2857 = vmatprep.subr.mxu0 0.0
        %2858 = vmatpush1.msra.mxu0 0.0
        %2859 = vmatprep.subr.mxu0 0.0
        %2860 = vmatpush1.msra.mxu0 0.0
        %2861 = vmatprep.subr.mxu0 0.0
        %2862 = vmatpush1.msra.mxu0 0.0
        %2863 = vmatprep.subr.mxu0 0.0
        %2864 = vmatpush1.msra.mxu0 0.0
        %2865 = vmatprep.subr.mxu0 0.0
        %2866 = vmatpush1.msra.mxu0 0.0
        %2867 = vmatprep.subr.mxu0 0.0
        %2868 = vmatpush1.msra.mxu0 0.0
        %2869 = vmatprep.subr.mxu0 0.0
        %2870 = vmatpush1.msra.mxu0 0.0
        %2871 = vmatprep.subr.mxu0 0.0
        %2872 = vmatpush1.msra.mxu0 0.0
        %2873 = vmatprep.subr.mxu0 0.0
        %2874 = vmatpush1.msra.mxu0 0.0
        %2875 = vmatprep.subr.mxu0 0.0
        %2876 = vmatpush1.msra.mxu0 0.0
        %2877 = vmatprep.subr.mxu0 0.0
        %2878 = vmatpush1.msra.mxu0 0.0
        %2879 = vmatprep.subr.mxu0 0.0
        %2880 = vmatpush1.msra.mxu0 0.0
        %2881 = vmatprep.mubr.f32.mxu0 0.0
        %2882 = vmatmul.mubr.f32.gmra.mrb[0].mxu0 %v2812
        %v2883 = vpop.f32.mrb[0].mxu0
        %v2884 = vadd.f32 0.0, %v2883
        %v2885 = vpop.f32.mrb[0].mxu0
        %2886 = vmatprep.mubr.f32.mxu0 0.0
        %2887 = vmatmul.mubr.f32.gmra.mrb[0].mxu0 %v2815
        %v2888 = vpop.f32.mrb[0].mxu0
        %v2889 = vadd.f32 0.0, %v2888
        %v2890 = vpop.f32.mrb[0].mxu0
        %2891 = vdwg.mxu0
        %2892 = vxpose.xlu0.b32.start [1/16] %v1515, 128
        %2893 = vxpose.xlu0.b32.cont [2/16] 0.0, 128
        %2894 = vxpose.xlu0.b32.cont [3/16] 0.0, 128
        %2895 = vxpose.xlu0.b32.cont [4/16] 0.0, 128
        %2896 = vxpose.xlu0.b32.cont [5/16] 0.0, 128
        %2897 = vxpose.xlu0.b32.cont [6/16] 0.0, 128
        %2898 = vxpose.xlu0.b32.cont [7/16] 0.0, 128
        %2899 = vxpose.xlu0.b32.cont [8/16] 0.0, 128
        %2900 = vxpose.xlu0.b32.cont [9/16] 0.0, 128
        %2901 = vxpose.xlu0.b32.cont [10/16] 0.0, 128
        %2902 = vxpose.xlu0.b32.cont [11/16] 0.0, 128
        %2903 = vxpose.xlu0.b32.cont [12/16] 0.0, 128
        %2904 = vxpose.xlu0.b32.cont [13/16] 0.0, 128
        %2905 = vxpose.xlu0.b32.cont [14/16] 0.0, 128
        %2906 = vxpose.xlu0.b32.cont [15/16] 0.0, 128
        %2907 = vxpose.xlu0.b32.end [16/16] 0.0, 128
        %v2908 = vpop.trf.xlu0
        %v2909 = vpop.trf.xlu0
        %v2910 = vpop.trf.xlu0
        %v2911 = vpop.trf.xlu0
        %v2912 = vpop.trf.xlu0
        %v2913 = vpop.trf.xlu0
        %v2914 = vpop.trf.xlu0
        %v2915 = vpop.trf.xlu0
        %v2916 = vpop.trf.xlu0
        %v2917 = vpop.trf.xlu0
        %v2918 = vpop.trf.xlu0
        %v2919 = vpop.trf.xlu0
        %v2920 = vpop.trf.xlu0
        %v2921 = vpop.trf.xlu0
        %v2922 = vpop.trf.xlu0
        %v2923 = vpop.trf.xlu0
        %v2925 = vsel %vm2132, %v2908, 0
        %v2928 = vsel %vm2132, %v2909, 0
        %2930 = vmatprep.subr.mxu0 0.0
        %2931 = vmatpush1.msra.mxu0 %v633
        %2932 = vmatprep.subr.mxu0 0.0
        %2933 = vmatpush1.msra.mxu0 0.0
        %2934 = vmatprep.subr.mxu0 0.0
        %2935 = vmatpush1.msra.mxu0 0.0
        %2936 = vmatprep.subr.mxu0 0.0
        %2937 = vmatpush1.msra.mxu0 0.0
        %2938 = vmatprep.subr.mxu0 0.0
        %2939 = vmatpush1.msra.mxu0 0.0
        %2940 = vmatprep.subr.mxu0 0.0
        %2941 = vmatpush1.msra.mxu0 0.0
        %2942 = vmatprep.subr.mxu0 0.0
        %2943 = vmatpush1.msra.mxu0 0.0
        %2944 = vmatprep.subr.mxu0 0.0
        %2945 = vmatpush1.msra.mxu0 0.0
        %2946 = vmatprep.subr.mxu0 0.0
        %2947 = vmatpush1.msra.mxu0 0.0
        %2948 = vmatprep.subr.mxu0 0.0
        %2949 = vmatpush1.msra.mxu0 0.0
        %2950 = vmatprep.subr.mxu0 0.0
        %2951 = vmatpush1.msra.mxu0 0.0
        %2952 = vmatprep.subr.mxu0 0.0
        %2953 = vmatpush1.msra.mxu0 0.0
        %2954 = vmatprep.subr.mxu0 0.0
        %2955 = vmatpush1.msra.mxu0 0.0
        %2956 = vmatprep.subr.mxu0 0.0
        %2957 = vmatpush1.msra.mxu0 0.0
        %2958 = vmatprep.subr.mxu0 0.0
        %2959 = vmatpush1.msra.mxu0 0.0
        %2960 = vmatprep.subr.mxu0 0.0
        %2961 = vmatpush1.msra.mxu0 0.0
        %2962 = vmatprep.subr.mxu0 0.0
        %2963 = vmatpush1.msra.mxu0 0.0
        %2964 = vmatprep.subr.mxu0 0.0
        %2965 = vmatpush1.msra.mxu0 0.0
        %2966 = vmatprep.subr.mxu0 0.0
        %2967 = vmatpush1.msra.mxu0 0.0
        %2968 = vmatprep.subr.mxu0 0.0
        %2969 = vmatpush1.msra.mxu0 0.0
        %2970 = vmatprep.subr.mxu0 0.0
        %2971 = vmatpush1.msra.mxu0 0.0
        %2972 = vmatprep.subr.mxu0 0.0
        %2973 = vmatpush1.msra.mxu0 0.0
        %2974 = vmatprep.subr.mxu0 0.0
        %2975 = vmatpush1.msra.mxu0 0.0
        %2976 = vmatprep.subr.mxu0 0.0
        %2977 = vmatpush1.msra.mxu0 0.0
        %2978 = vmatprep.subr.mxu0 0.0
        %2979 = vmatpush1.msra.mxu0 0.0
        %2980 = vmatprep.subr.mxu0 0.0
        %2981 = vmatpush1.msra.mxu0 0.0
        %2982 = vmatprep.subr.mxu0 0.0
        %2983 = vmatpush1.msra.mxu0 0.0
        %2984 = vmatprep.subr.mxu0 0.0
        %2985 = vmatpush1.msra.mxu0 0.0
        %2986 = vmatprep.subr.mxu0 0.0
        %2987 = vmatpush1.msra.mxu0 0.0
        %2988 = vmatprep.subr.mxu0 0.0
        %2989 = vmatpush1.msra.mxu0 0.0
        %2990 = vmatprep.subr.mxu0 0.0
        %2991 = vmatpush1.msra.mxu0 0.0
        %2992 = vmatprep.subr.mxu0 0.0
        %2993 = vmatpush1.msra.mxu0 0.0
        %2994 = vmatprep.mubr.f32.mxu0 0.0
        %2995 = vmatmul.mubr.f32.gmra.mrb[0].mxu0 %v2925
        %v2996 = vpop.f32.mrb[0].mxu0
        %v2997 = vadd.f32 0.0, %v2996
        %v2998 = vpop.f32.mrb[0].mxu0
        %2999 = vmatprep.mubr.f32.mxu0 0.0
        %3000 = vmatmul.mubr.f32.gmra.mrb[0].mxu0 %v2928
        %v3001 = vpop.f32.mrb[0].mxu0
        %v3002 = vadd.f32 0.0, %v3001
        %v3003 = vpop.f32.mrb[0].mxu0
        %3004 = vdwg.mxu0
        %v3005 = vld [vmem:[#allocation7] sm:$0xff]
        %v3006 = vld [vmem:[#allocation7 + $0x8] sm:$0xff]
        %v3007 = vld [vmem:[#allocation7 + $0x10] sm:$0xff]
        %v3008 = vld [vmem:[#allocation7 + $0x18] sm:$0xff]
        %v3009 = vld [vmem:[#allocation8] sm:$0xff]
        %v3010 = vld [vmem:[#allocation8 + $0x8] sm:$0xff]
        %v3011 = vld [vmem:[#allocation8 + $0x10] sm:$0xff]
        %v3012 = vld [vmem:[#allocation8 + $0x18] sm:$0xff]
        %v3014 = vsel %vm650, %v1586, 0
        %v3017 = vsel %vm650, %v2206, 0
        %v3020 = vsel %vm650, %v2211, 0
        %v3023 = vsel %vm650, %v1659, 0
        %v3026 = vsel %vm650, %v2319, 0
        %v3029 = vsel %vm650, %v2324, 0
        %v3032 = vsel %vm650, %v1732, 0
        %v3035 = vsel %vm650, %v2432, 0
        %v3038 = vsel %vm650, %v2437, 0
        %v3041 = vsel %vm650, %v1805, 0
        %v3044 = vsel %vm650, %v2545, 0
        %v3047 = vsel %vm650, %v2550, 0
        %v3050 = vsel %vm650, %v1878, 0
        %v3053 = vsel %vm650, %v2658, 0
        %v3056 = vsel %vm650, %v2663, 0
        %v3059 = vsel %vm650, %v1951, 0
        %v3062 = vsel %vm650, %v2771, 0
        %v3065 = vsel %vm650, %v2776, 0
        %v3068 = vsel %vm650, %v2024, 0
        %v3071 = vsel %vm650, %v2884, 0
        %v3074 = vsel %vm650, %v2889, 0
        %v3077 = vsel %vm650, %v2097, 0
        %v3080 = vsel %vm650, %v2997, 0
        %v3083 = vsel %vm650, %v3002, 0
        %3085 = vmatprep.subr.mxu0 0.0
        %3086 = vmatpush1.msra.mxu0 %v3009
        %3087 = vmatprep.subr.mxu0 0.0
        %3088 = vmatpush1.msra.mxu0 %v3010
        %3089 = vmatprep.subr.mxu0 0.0
        %3090 = vmatpush1.msra.mxu0 %v3011
        %3091 = vmatprep.subr.mxu0 0.0
        %3092 = vmatpush1.msra.mxu0 %v3012
        %3093 = vmatprep.subr.mxu0 0.0
        %3094 = vmatpush1.msra.mxu0 0.0
        %3095 = vmatprep.subr.mxu0 0.0
        %3096 = vmatpush1.msra.mxu0 0.0
        %3097 = vmatprep.subr.mxu0 0.0
        %3098 = vmatpush1.msra.mxu0 0.0
        %3099 = vmatprep.subr.mxu0 0.0
        %3100 = vmatpush1.msra.mxu0 0.0
        %3101 = vmatprep.subr.mxu0 0.0
        %3102 = vmatpush1.msra.mxu0 0.0
        %3103 = vmatprep.subr.mxu0 0.0
        %3104 = vmatpush1.msra.mxu0 0.0
        %3105 = vmatprep.subr.mxu0 0.0
        %3106 = vmatpush1.msra.mxu0 0.0
        %3107 = vmatprep.subr.mxu0 0.0
        %3108 = vmatpush1.msra.mxu0 0.0
        %3109 = vmatprep.subr.mxu0 0.0
        %3110 = vmatpush1.msra.mxu0 0.0
        %3111 = vmatprep.subr.mxu0 0.0
        %3112 = vmatpush1.msra.mxu0 0.0
        %3113 = vmatprep.subr.mxu0 0.0
        %3114 = vmatpush1.msra.mxu0 0.0
        %3115 = vmatprep.subr.mxu0 0.0
        %3116 = vmatpush1.msra.mxu0 0.0
        %3117 = vmatprep.subr.mxu0 0.0
        %3118 = vmatpush1.msra.mxu0 0.0
        %3119 = vmatprep.subr.mxu0 0.0
        %3120 = vmatpush1.msra.mxu0 0.0
        %3121 = vmatprep.subr.mxu0 0.0
        %3122 = vmatpush1.msra.mxu0 0.0
        %3123 = vmatprep.subr.mxu0 0.0
        %3124 = vmatpush1.msra.mxu0 0.0
        %3125 = vmatprep.subr.mxu0 0.0
        %3126 = vmatpush1.msra.mxu0 0.0
        %3127 = vmatprep.subr.mxu0 0.0
        %3128 = vmatpush1.msra.mxu0 0.0
        %3129 = vmatprep.subr.mxu0 0.0
        %3130 = vmatpush1.msra.mxu0 0.0
        %3131 = vmatprep.subr.mxu0 0.0
        %3132 = vmatpush1.msra.mxu0 0.0
        %3133 = vmatprep.subr.mxu0 0.0
        %3134 = vmatpush1.msra.mxu0 0.0
        %3135 = vmatprep.subr.mxu0 0.0
        %3136 = vmatpush1.msra.mxu0 0.0
        %3137 = vmatprep.subr.mxu0 0.0
        %3138 = vmatpush1.msra.mxu0 0.0
        %3139 = vmatprep.subr.mxu0 0.0
        %3140 = vmatpush1.msra.mxu0 0.0
        %3141 = vmatprep.subr.mxu0 0.0
        %3142 = vmatpush1.msra.mxu0 0.0
        %3143 = vmatprep.subr.mxu0 0.0
        %3144 = vmatpush1.msra.mxu0 0.0
        %3145 = vmatprep.subr.mxu0 0.0
        %3146 = vmatpush1.msra.mxu0 0.0
        %3147 = vmatprep.subr.mxu0 0.0
        %3148 = vmatpush1.msra.mxu0 0.0
        %3149 = vmatprep.mubr.f32.mxu0 0.0
        %3150 = vmatmul.mubr.f32.gmra.mrb[0].mxu0 %v3014
        %v3151 = vpop.f32.mrb[0].mxu0
        %v3152 = vadd.f32 0.0, %v3151
        %v3153 = vpop.f32.mrb[0].mxu0
        %3154 = vmatprep.mubr.f32.mxu0 0.0
        %3155 = vmatmul.mubr.f32.gmra.mrb[0].mxu0 %v3017
        %v3156 = vpop.f32.mrb[0].mxu0
        %v3157 = vadd.f32 0.0, %v3156
        %v3158 = vpop.f32.mrb[0].mxu0
        %3159 = vmatprep.mubr.f32.mxu0 0.0
        %3160 = vmatmul.mubr.f32.gmra.mrb[0].mxu0 %v3020
        %v3161 = vpop.f32.mrb[0].mxu0
        %v3162 = vadd.f32 0.0, %v3161
        %v3163 = vpop.f32.mrb[0].mxu0
        %3164 = vmatprep.mubr.f32.mxu0 0.0
        %3165 = vmatmul.mubr.f32.gmra.mrb[0].mxu0 %v3023
        %v3166 = vpop.f32.mrb[0].mxu0
        %v3167 = vadd.f32 0.0, %v3166
        %v3168 = vpop.f32.mrb[0].mxu0
        %3169 = vmatprep.mubr.f32.mxu0 0.0
        %3170 = vmatmul.mubr.f32.gmra.mrb[0].mxu0 %v3026
        %v3171 = vpop.f32.mrb[0].mxu0
        %v3172 = vadd.f32 0.0, %v3171
        %v3173 = vpop.f32.mrb[0].mxu0
        %3174 = vmatprep.mubr.f32.mxu0 0.0
        %3175 = vmatmul.mubr.f32.gmra.mrb[0].mxu0 %v3029
        %v3176 = vpop.f32.mrb[0].mxu0
        %v3177 = vadd.f32 0.0, %v3176
        %v3178 = vpop.f32.mrb[0].mxu0
        %3179 = vmatprep.mubr.f32.mxu0 0.0
        %3180 = vmatmul.mubr.f32.gmra.mrb[0].mxu0 %v3032
        %v3181 = vpop.f32.mrb[0].mxu0
        %v3182 = vadd.f32 0.0, %v3181
        %v3183 = vpop.f32.mrb[0].mxu0
        %3184 = vmatprep.mubr.f32.mxu0 0.0
        %3185 = vmatmul.mubr.f32.gmra.mrb[0].mxu0 %v3035
        %v3186 = vpop.f32.mrb[0].mxu0
        %v3187 = vadd.f32 0.0, %v3186
        %v3188 = vpop.f32.mrb[0].mxu0
        %3189 = vmatprep.mubr.f32.mxu0 0.0
        %3190 = vmatmul.mubr.f32.gmra.mrb[0].mxu0 %v3038
        %v3191 = vpop.f32.mrb[0].mxu0
        %v3192 = vadd.f32 0.0, %v3191
        %v3193 = vpop.f32.mrb[0].mxu0
        %3194 = vmatprep.mubr.f32.mxu0 0.0
        %3195 = vmatmul.mubr.f32.gmra.mrb[0].mxu0 %v3041
        %v3196 = vpop.f32.mrb[0].mxu0
        %v3197 = vadd.f32 0.0, %v3196
        %v3198 = vpop.f32.mrb[0].mxu0
        %3199 = vmatprep.mubr.f32.mxu0 0.0
        %3200 = vmatmul.mubr.f32.gmra.mrb[0].mxu0 %v3044
        %v3201 = vpop.f32.mrb[0].mxu0
        %v3202 = vadd.f32 0.0, %v3201
        %v3203 = vpop.f32.mrb[0].mxu0
        %3204 = vmatprep.mubr.f32.mxu0 0.0
        %3205 = vmatmul.mubr.f32.gmra.mrb[0].mxu0 %v3047
        %v3206 = vpop.f32.mrb[0].mxu0
        %v3207 = vadd.f32 0.0, %v3206
        %v3208 = vpop.f32.mrb[0].mxu0
        %3209 = vmatprep.mubr.f32.mxu0 0.0
        %3210 = vmatmul.mubr.f32.gmra.mrb[0].mxu0 %v3050
        %v3211 = vpop.f32.mrb[0].mxu0
        %v3212 = vadd.f32 0.0, %v3211
        %v3213 = vpop.f32.mrb[0].mxu0
        %3214 = vmatprep.mubr.f32.mxu0 0.0
        %3215 = vmatmul.mubr.f32.gmra.mrb[0].mxu0 %v3053
        %v3216 = vpop.f32.mrb[0].mxu0
        %v3217 = vadd.f32 0.0, %v3216
        %v3218 = vpop.f32.mrb[0].mxu0
        %3219 = vmatprep.mubr.f32.mxu0 0.0
        %3220 = vmatmul.mubr.f32.gmra.mrb[0].mxu0 %v3056
        %v3221 = vpop.f32.mrb[0].mxu0
        %v3222 = vadd.f32 0.0, %v3221
        %v3223 = vpop.f32.mrb[0].mxu0
        %3224 = vmatprep.mubr.f32.mxu0 0.0
        %3225 = vmatmul.mubr.f32.gmra.mrb[0].mxu0 %v3059
        %v3226 = vpop.f32.mrb[0].mxu0
        %v3227 = vadd.f32 0.0, %v3226
        %v3228 = vpop.f32.mrb[0].mxu0
        %3229 = vmatprep.mubr.f32.mxu0 0.0
        %3230 = vmatmul.mubr.f32.gmra.mrb[0].mxu0 %v3062
        %v3231 = vpop.f32.mrb[0].mxu0
        %v3232 = vadd.f32 0.0, %v3231
        %v3233 = vpop.f32.mrb[0].mxu0
        %3234 = vmatprep.mubr.f32.mxu0 0.0
        %3235 = vmatmul.mubr.f32.gmra.mrb[0].mxu0 %v3065
        %v3236 = vpop.f32.mrb[0].mxu0
        %v3237 = vadd.f32 0.0, %v3236
        %v3238 = vpop.f32.mrb[0].mxu0
        %3239 = vmatprep.mubr.f32.mxu0 0.0
        %3240 = vmatmul.mubr.f32.gmra.mrb[0].mxu0 %v3068
        %v3241 = vpop.f32.mrb[0].mxu0
        %v3242 = vadd.f32 0.0, %v3241
        %v3243 = vpop.f32.mrb[0].mxu0
        %3244 = vmatprep.mubr.f32.mxu0 0.0
        %3245 = vmatmul.mubr.f32.gmra.mrb[0].mxu0 %v3071
        %v3246 = vpop.f32.mrb[0].mxu0
        %v3247 = vadd.f32 0.0, %v3246
        %v3248 = vpop.f32.mrb[0].mxu0
        %3249 = vmatprep.mubr.f32.mxu0 0.0
        %3250 = vmatmul.mubr.f32.gmra.mrb[0].mxu0 %v3074
        %v3251 = vpop.f32.mrb[0].mxu0
        %v3252 = vadd.f32 0.0, %v3251
        %v3253 = vpop.f32.mrb[0].mxu0
        %3254 = vmatprep.mubr.f32.mxu0 0.0
        %3255 = vmatmul.mubr.f32.gmra.mrb[0].mxu0 %v3077
        %v3256 = vpop.f32.mrb[0].mxu0
        %v3257 = vadd.f32 0.0, %v3256
        %v3258 = vpop.f32.mrb[0].mxu0
        %3259 = vmatprep.mubr.f32.mxu0 0.0
        %3260 = vmatmul.mubr.f32.gmra.mrb[0].mxu0 %v3080
        %v3261 = vpop.f32.mrb[0].mxu0
        %v3262 = vadd.f32 0.0, %v3261
        %v3263 = vpop.f32.mrb[0].mxu0
        %3264 = vmatprep.mubr.f32.mxu0 0.0
        %3265 = vmatmul.mubr.f32.gmra.mrb[0].mxu0 %v3083
        %v3266 = vpop.f32.mrb[0].mxu0
        %v3267 = vadd.f32 0.0, %v3266
        %v3268 = vpop.f32.mrb[0].mxu0
        %3269 = vdwg.mxu0
        %3270 = vmatprep.subr.mxu0 0.0
        %3271 = vmatpush1.msra.mxu0 %v3005
        %3272 = vmatprep.subr.mxu0 0.0
        %3273 = vmatpush1.msra.mxu0 %v3006
        %3274 = vmatprep.subr.mxu0 0.0
        %3275 = vmatpush1.msra.mxu0 %v3007
        %3276 = vmatprep.subr.mxu0 0.0
        %3277 = vmatpush1.msra.mxu0 %v3008
        %3278 = vmatprep.subr.mxu0 0.0
        %3279 = vmatpush1.msra.mxu0 0.0
        %3280 = vmatprep.subr.mxu0 0.0
        %3281 = vmatpush1.msra.mxu0 0.0
        %3282 = vmatprep.subr.mxu0 0.0
        %3283 = vmatpush1.msra.mxu0 0.0
        %3284 = vmatprep.subr.mxu0 0.0
        %3285 = vmatpush1.msra.mxu0 0.0
        %3286 = vmatprep.subr.mxu0 0.0
        %3287 = vmatpush1.msra.mxu0 0.0
        %3288 = vmatprep.subr.mxu0 0.0
        %3289 = vmatpush1.msra.mxu0 0.0
        %3290 = vmatprep.subr.mxu0 0.0
        %3291 = vmatpush1.msra.mxu0 0.0
        %3292 = vmatprep.subr.mxu0 0.0
        %3293 = vmatpush1.msra.mxu0 0.0
        %3294 = vmatprep.subr.mxu0 0.0
        %3295 = vmatpush1.msra.mxu0 0.0
        %3296 = vmatprep.subr.mxu0 0.0
        %3297 = vmatpush1.msra.mxu0 0.0
        %3298 = vmatprep.subr.mxu0 0.0
        %3299 = vmatpush1.msra.mxu0 0.0
        %3300 = vmatprep.subr.mxu0 0.0
        %3301 = vmatpush1.msra.mxu0 0.0
        %3302 = vmatprep.subr.mxu0 0.0
        %3303 = vmatpush1.msra.mxu0 0.0
        %3304 = vmatprep.subr.mxu0 0.0
        %3305 = vmatpush1.msra.mxu0 0.0
        %3306 = vmatprep.subr.mxu0 0.0
        %3307 = vmatpush1.msra.mxu0 0.0
        %3308 = vmatprep.subr.mxu0 0.0
        %3309 = vmatpush1.msra.mxu0 0.0
        %3310 = vmatprep.subr.mxu0 0.0
        %3311 = vmatpush1.msra.mxu0 0.0
        %3312 = vmatprep.subr.mxu0 0.0
        %3313 = vmatpush1.msra.mxu0 0.0
        %3314 = vmatprep.subr.mxu0 0.0
        %3315 = vmatpush1.msra.mxu0 0.0
        %3316 = vmatprep.subr.mxu0 0.0
        %3317 = vmatpush1.msra.mxu0 0.0
        %3318 = vmatprep.subr.mxu0 0.0
        %3319 = vmatpush1.msra.mxu0 0.0
        %3320 = vmatprep.subr.mxu0 0.0
        %3321 = vmatpush1.msra.mxu0 0.0
        %3322 = vmatprep.subr.mxu0 0.0
        %3323 = vmatpush1.msra.mxu0 0.0
        %3324 = vmatprep.subr.mxu0 0.0
        %3325 = vmatpush1.msra.mxu0 0.0
        %3326 = vmatprep.subr.mxu0 0.0
        %3327 = vmatpush1.msra.mxu0 0.0
        %3328 = vmatprep.subr.mxu0 0.0
        %3329 = vmatpush1.msra.mxu0 0.0
        %3330 = vmatprep.subr.mxu0 0.0
        %3331 = vmatpush1.msra.mxu0 0.0
        %3332 = vmatprep.subr.mxu0 0.0
        %3333 = vmatpush1.msra.mxu0 0.0
        %3334 = vmatprep.mubr.f32.mxu0 0.0
        %3335 = vmatmul.mubr.f32.gmra.mrb[0].mxu0 %v652
        %v3336 = vpop.f32.mrb[0].mxu0
        %v3337 = vadd.f32 %v3152, %v3336
        %v3338 = vpop.f32.mrb[0].mxu0
        %3339 = vmatprep.mubr.f32.mxu0 0.0
        %3340 = vmatmul.mubr.f32.gmra.mrb[0].mxu0 %v655
        %v3341 = vpop.f32.mrb[0].mxu0
        %v3342 = vadd.f32 %v3157, %v3341
        %v3343 = vpop.f32.mrb[0].mxu0
        %3344 = vmatprep.mubr.f32.mxu0 0.0
        %3345 = vmatmul.mubr.f32.gmra.mrb[0].mxu0 %v658
        %v3346 = vpop.f32.mrb[0].mxu0
        %v3347 = vadd.f32 %v3162, %v3346
        %v3348 = vpop.f32.mrb[0].mxu0
        %3349 = vmatprep.mubr.f32.mxu0 0.0
        %3350 = vmatmul.mubr.f32.gmra.mrb[0].mxu0 %v731
        %v3351 = vpop.f32.mrb[0].mxu0
        %v3352 = vadd.f32 %v3167, %v3351
        %v3353 = vpop.f32.mrb[0].mxu0
        %3354 = vmatprep.mubr.f32.mxu0 0.0
        %3355 = vmatmul.mubr.f32.gmra.mrb[0].mxu0 %v734
        %v3356 = vpop.f32.mrb[0].mxu0
        %v3357 = vadd.f32 %v3172, %v3356
        %v3358 = vpop.f32.mrb[0].mxu0
        %3359 = vmatprep.mubr.f32.mxu0 0.0
        %3360 = vmatmul.mubr.f32.gmra.mrb[0].mxu0 %v737
        %v3361 = vpop.f32.mrb[0].mxu0
        %v3362 = vadd.f32 %v3177, %v3361
        %v3363 = vpop.f32.mrb[0].mxu0
        %3364 = vmatprep.mubr.f32.mxu0 0.0
        %3365 = vmatmul.mubr.f32.gmra.mrb[0].mxu0 %v810
        %v3366 = vpop.f32.mrb[0].mxu0
        %v3367 = vadd.f32 %v3182, %v3366
        %v3368 = vpop.f32.mrb[0].mxu0
        %3369 = vmatprep.mubr.f32.mxu0 0.0
        %3370 = vmatmul.mubr.f32.gmra.mrb[0].mxu0 %v813
        %v3371 = vpop.f32.mrb[0].mxu0
        %v3372 = vadd.f32 %v3187, %v3371
        %v3373 = vpop.f32.mrb[0].mxu0
        %3374 = vmatprep.mubr.f32.mxu0 0.0
        %3375 = vmatmul.mubr.f32.gmra.mrb[0].mxu0 %v816
        %v3376 = vpop.f32.mrb[0].mxu0
        %v3377 = vadd.f32 %v3192, %v3376
        %v3378 = vpop.f32.mrb[0].mxu0
        %3379 = vmatprep.mubr.f32.mxu0 0.0
        %3380 = vmatmul.mubr.f32.gmra.mrb[0].mxu0 %v889
        %v3381 = vpop.f32.mrb[0].mxu0
        %v3382 = vadd.f32 %v3197, %v3381
        %v3383 = vpop.f32.mrb[0].mxu0
        %3384 = vmatprep.mubr.f32.mxu0 0.0
        %3385 = vmatmul.mubr.f32.gmra.mrb[0].mxu0 %v892
        %v3386 = vpop.f32.mrb[0].mxu0
        %v3387 = vadd.f32 %v3202, %v3386
        %v3388 = vpop.f32.mrb[0].mxu0
        %3389 = vmatprep.mubr.f32.mxu0 0.0
        %3390 = vmatmul.mubr.f32.gmra.mrb[0].mxu0 %v895
        %v3391 = vpop.f32.mrb[0].mxu0
        %v3392 = vadd.f32 %v3207, %v3391
        %v3393 = vpop.f32.mrb[0].mxu0
        %3394 = vmatprep.mubr.f32.mxu0 0.0
        %3395 = vmatmul.mubr.f32.gmra.mrb[0].mxu0 %v968
        %v3396 = vpop.f32.mrb[0].mxu0
        %v3397 = vadd.f32 %v3212, %v3396
        %v3398 = vpop.f32.mrb[0].mxu0
        %3399 = vmatprep.mubr.f32.mxu0 0.0
        %3400 = vmatmul.mubr.f32.gmra.mrb[0].mxu0 %v971
        %v3401 = vpop.f32.mrb[0].mxu0
        %v3402 = vadd.f32 %v3217, %v3401
        %v3403 = vpop.f32.mrb[0].mxu0
        %3404 = vmatprep.mubr.f32.mxu0 0.0
        %3405 = vmatmul.mubr.f32.gmra.mrb[0].mxu0 %v974
        %v3406 = vpop.f32.mrb[0].mxu0
        %v3407 = vadd.f32 %v3222, %v3406
        %v3408 = vpop.f32.mrb[0].mxu0
        %3409 = vmatprep.mubr.f32.mxu0 0.0
        %3410 = vmatmul.mubr.f32.gmra.mrb[0].mxu0 %v1047
        %v3411 = vpop.f32.mrb[0].mxu0
        %v3412 = vadd.f32 %v3227, %v3411
        %v3413 = vpop.f32.mrb[0].mxu0
        %3414 = vmatprep.mubr.f32.mxu0 0.0
        %3415 = vmatmul.mubr.f32.gmra.mrb[0].mxu0 %v1050
        %v3416 = vpop.f32.mrb[0].mxu0
        %v3417 = vadd.f32 %v3232, %v3416
        %v3418 = vpop.f32.mrb[0].mxu0
        %3419 = vmatprep.mubr.f32.mxu0 0.0
        %3420 = vmatmul.mubr.f32.gmra.mrb[0].mxu0 %v1053
        %v3421 = vpop.f32.mrb[0].mxu0
        %v3422 = vadd.f32 %v3237, %v3421
        %v3423 = vpop.f32.mrb[0].mxu0
        %3424 = vmatprep.mubr.f32.mxu0 0.0
        %3425 = vmatmul.mubr.f32.gmra.mrb[0].mxu0 %v1126
        %v3426 = vpop.f32.mrb[0].mxu0
        %v3427 = vadd.f32 %v3242, %v3426
        %v3428 = vpop.f32.mrb[0].mxu0
        %3429 = vmatprep.mubr.f32.mxu0 0.0
        %3430 = vmatmul.mubr.f32.gmra.mrb[0].mxu0 %v1129
        %v3431 = vpop.f32.mrb[0].mxu0
        %v3432 = vadd.f32 %v3247, %v3431
        %v3433 = vpop.f32.mrb[0].mxu0
        %3434 = vmatprep.mubr.f32.mxu0 0.0
        %3435 = vmatmul.mubr.f32.gmra.mrb[0].mxu0 %v1132
        %v3436 = vpop.f32.mrb[0].mxu0
        %v3437 = vadd.f32 %v3252, %v3436
        %v3438 = vpop.f32.mrb[0].mxu0
        %3439 = vmatprep.mubr.f32.mxu0 0.0
        %3440 = vmatmul.mubr.f32.gmra.mrb[0].mxu0 %v1205
        %v3441 = vpop.f32.mrb[0].mxu0
        %v3442 = vadd.f32 %v3257, %v3441
        %v3443 = vpop.f32.mrb[0].mxu0
        %3444 = vmatprep.mubr.f32.mxu0 0.0
        %3445 = vmatmul.mubr.f32.gmra.mrb[0].mxu0 %v1208
        %v3446 = vpop.f32.mrb[0].mxu0
        %v3447 = vadd.f32 %v3262, %v3446
        %v3448 = vpop.f32.mrb[0].mxu0
        %3449 = vmatprep.mubr.f32.mxu0 0.0
        %3450 = vmatmul.mubr.f32.gmra.mrb[0].mxu0 %v1211
        %v3451 = vpop.f32.mrb[0].mxu0
        %v3452 = vadd.f32 %v3267, %v3451
        %v3453 = vpop.f32.mrb[0].mxu0
        %3454 = vdwg.mxu0
        %v3455 = vld [vmem:[%s4] sm:$0x1]
        %v3457 = vlaneseq
        %v3458 = vshrl.u32 %v3457, 7
        %v3459 = vsub.s32 0, %v3458
        %v3460 = vrot.slane %v3455, %v3459
        %v3462 = vadd.f32 %v3337, %v3460
        %v3463 = vadd.f32 %v3342, %v3460
        %v3464 = vadd.f32 %v3347, %v3460
        %v3465 = vadd.f32 %v3352, %v3460
        %v3466 = vadd.f32 %v3357, %v3460
        %v3467 = vadd.f32 %v3362, %v3460
        %v3468 = vadd.f32 %v3367, %v3460
        %v3469 = vadd.f32 %v3372, %v3460
        %v3470 = vadd.f32 %v3377, %v3460
        %v3471 = vadd.f32 %v3382, %v3460
        %v3472 = vadd.f32 %v3387, %v3460
        %v3473 = vadd.f32 %v3392, %v3460
        %v3474 = vadd.f32 %v3397, %v3460
        %v3475 = vadd.f32 %v3402, %v3460
        %v3476 = vadd.f32 %v3407, %v3460
        %v3477 = vadd.f32 %v3412, %v3460
        %v3478 = vadd.f32 %v3417, %v3460
        %v3479 = vadd.f32 %v3422, %v3460
        %v3480 = vadd.f32 %v3427, %v3460
        %v3481 = vadd.f32 %v3432, %v3460
        %v3482 = vadd.f32 %v3437, %v3460
        %v3483 = vadd.f32 %v3442, %v3460
        %v3484 = vadd.f32 %v3447, %v3460
        %v3485 = vadd.f32 %v3452, %v3460
        %v3486 = vld [vmem:[%s5] sm:$0x1]
        %v3488 = vlaneseq
        %v3489 = vshrl.u32 %v3488, 7
        %v3490 = vsub.s32 0, %v3489
        %v3491 = vrot.slane %v3486, %v3490
        %v3493 = vmul.f32 %v3462, %v3491
        %v3494 = vmul.f32 %v3463, %v3491
        %v3495 = vmul.f32 %v3464, %v3491
        %v3496 = vmul.f32 %v3465, %v3491
        %v3497 = vmul.f32 %v3466, %v3491
        %v3498 = vmul.f32 %v3467, %v3491
        %v3499 = vmul.f32 %v3468, %v3491
        %v3500 = vmul.f32 %v3469, %v3491
        %v3501 = vmul.f32 %v3470, %v3491
        %v3502 = vmul.f32 %v3471, %v3491
        %v3503 = vmul.f32 %v3472, %v3491
        %v3504 = vmul.f32 %v3473, %v3491
        %v3505 = vmul.f32 %v3474, %v3491
        %v3506 = vmul.f32 %v3475, %v3491
        %v3507 = vmul.f32 %v3476, %v3491
        %v3508 = vmul.f32 %v3477, %v3491
        %v3509 = vmul.f32 %v3478, %v3491
        %v3510 = vmul.f32 %v3479, %v3491
        %v3511 = vmul.f32 %v3480, %v3491
        %v3512 = vmul.f32 %v3481, %v3491
        %v3513 = vmul.f32 %v3482, %v3491
        %v3514 = vmul.f32 %v3483, %v3491
        %v3515 = vmul.f32 %v3484, %v3491
        %v3516 = vmul.f32 %v3485, %v3491
        %v3517 = vld [vmem:[#allocation10] sm:$0x1]
        %v3519 = vlaneseq
        %v3520 = vshrl.u32 %v3519, 7
        %v3521 = vsub.s32 0, %v3520
        %v3522 = vrot.slane %v3517, %v3521
        %v3524 = vadd.f32 %v3493, %v3522
        %v3525 = vadd.f32 %v3494, %v3522
        %v3526 = vadd.f32 %v3495, %v3522
        %v3527 = vadd.f32 %v3496, %v3522
        %v3528 = vadd.f32 %v3497, %v3522
        %v3529 = vadd.f32 %v3498, %v3522
        %v3530 = vadd.f32 %v3499, %v3522
        %v3531 = vadd.f32 %v3500, %v3522
        %v3532 = vadd.f32 %v3501, %v3522
        %v3533 = vadd.f32 %v3502, %v3522
        %v3534 = vadd.f32 %v3503, %v3522
        %v3535 = vadd.f32 %v3504, %v3522
        %v3536 = vadd.f32 %v3505, %v3522
        %v3537 = vadd.f32 %v3506, %v3522
        %v3538 = vadd.f32 %v3507, %v3522
        %v3539 = vadd.f32 %v3508, %v3522
        %v3540 = vadd.f32 %v3509, %v3522
        %v3541 = vadd.f32 %v3510, %v3522
        %v3542 = vadd.f32 %v3511, %v3522
        %v3543 = vadd.f32 %v3512, %v3522
        %v3544 = vadd.f32 %v3513, %v3522
        %v3545 = vadd.f32 %v3514, %v3522
        %v3546 = vadd.f32 %v3515, %v3522
        %v3547 = vadd.f32 %v3516, %v3522
        %v3548 = vmax.f32 %v3524, 0.0
        %v3549 = vmax.f32 %v3525, 0.0
        %v3550 = vmax.f32 %v3526, 0.0
        %v3551 = vmax.f32 %v3527, 0.0
        %v3552 = vmax.f32 %v3528, 0.0
        %v3553 = vmax.f32 %v3529, 0.0
        %v3554 = vmax.f32 %v3530, 0.0
        %v3555 = vmax.f32 %v3531, 0.0
        %v3556 = vmax.f32 %v3532, 0.0
        %v3557 = vmax.f32 %v3533, 0.0
        %v3558 = vmax.f32 %v3534, 0.0
        %v3559 = vmax.f32 %v3535, 0.0
        %v3560 = vmax.f32 %v3536, 0.0
        %v3561 = vmax.f32 %v3537, 0.0
        %v3562 = vmax.f32 %v3538, 0.0
        %v3563 = vmax.f32 %v3539, 0.0
        %v3564 = vmax.f32 %v3540, 0.0
        %v3565 = vmax.f32 %v3541, 0.0
        %v3566 = vmax.f32 %v3542, 0.0
        %v3567 = vmax.f32 %v3543, 0.0
        %v3568 = vmax.f32 %v3544, 0.0
        %v3569 = vmax.f32 %v3545, 0.0
        %v3570 = vmax.f32 %v3546, 0.0
        %v3571 = vmax.f32 %v3547, 0.0
        %v3572 = vld [vmem:[#allocation11] sm:$0xff]
        %v3573 = vld [vmem:[#allocation11 + $0x8] sm:$0xff]
        %v3574 = vld [vmem:[#allocation11 + $0x10] sm:$0xff]
        %v3575 = vld [vmem:[#allocation11 + $0x18] sm:$0xff]
        %v3576 = vld [vmem:[#allocation13] sm:$0x1]
        %v3578 = vlaneseq
        %v3579 = vshrl.u32 %v3578, 7
        %v3580 = vsub.s32 0, %v3579
        %v3581 = vrot.slane %v3576, %v3580
        %v3584 = vsel %vm650, %v3548, 0
        %v3587 = vsel %vm650, %v3549, 0
        %v3590 = vsel %vm650, %v3550, 0
        %v3593 = vsel %vm650, %v3551, 0
        %v3596 = vsel %vm650, %v3552, 0
        %v3599 = vsel %vm650, %v3553, 0
        %v3602 = vsel %vm650, %v3554, 0
        %v3605 = vsel %vm650, %v3555, 0
        %v3608 = vsel %vm650, %v3556, 0
        %v3611 = vsel %vm650, %v3557, 0
        %v3614 = vsel %vm650, %v3558, 0
        %v3617 = vsel %vm650, %v3559, 0
        %v3620 = vsel %vm650, %v3560, 0
        %v3623 = vsel %vm650, %v3561, 0
        %v3626 = vsel %vm650, %v3562, 0
        %v3629 = vsel %vm650, %v3563, 0
        %v3632 = vsel %vm650, %v3564, 0
        %v3635 = vsel %vm650, %v3565, 0
        %v3638 = vsel %vm650, %v3566, 0
        %v3641 = vsel %vm650, %v3567, 0
        %v3644 = vsel %vm650, %v3568, 0
        %v3647 = vsel %vm650, %v3569, 0
        %v3650 = vsel %vm650, %v3570, 0
        %v3653 = vsel %vm650, %v3571, 0
        %3655 = vmatprep.subr.mxu0 0.0
        %3656 = vmatpush1.msra.mxu0 %v3572
        %3657 = vmatprep.subr.mxu0 0.0
        %3658 = vmatpush1.msra.mxu0 %v3573
        %3659 = vmatprep.subr.mxu0 0.0
        %3660 = vmatpush1.msra.mxu0 %v3574
        %3661 = vmatprep.subr.mxu0 0.0
        %3662 = vmatpush1.msra.mxu0 %v3575
        %3663 = vmatprep.subr.mxu0 0.0
        %3664 = vmatpush1.msra.mxu0 0.0
        %3665 = vmatprep.subr.mxu0 0.0
        %3666 = vmatpush1.msra.mxu0 0.0
        %3667 = vmatprep.subr.mxu0 0.0
        %3668 = vmatpush1.msra.mxu0 0.0
        %3669 = vmatprep.subr.mxu0 0.0
        %3670 = vmatpush1.msra.mxu0 0.0
        %3671 = vmatprep.subr.mxu0 0.0
        %3672 = vmatpush1.msra.mxu0 0.0
        %3673 = vmatprep.subr.mxu0 0.0
        %3674 = vmatpush1.msra.mxu0 0.0
        %3675 = vmatprep.subr.mxu0 0.0
        %3676 = vmatpush1.msra.mxu0 0.0
        %3677 = vmatprep.subr.mxu0 0.0
        %3678 = vmatpush1.msra.mxu0 0.0
        %3679 = vmatprep.subr.mxu0 0.0
        %3680 = vmatpush1.msra.mxu0 0.0
        %3681 = vmatprep.subr.mxu0 0.0
        %3682 = vmatpush1.msra.mxu0 0.0
        %3683 = vmatprep.subr.mxu0 0.0
        %3684 = vmatpush1.msra.mxu0 0.0
        %3685 = vmatprep.subr.mxu0 0.0
        %3686 = vmatpush1.msra.mxu0 0.0
        %3687 = vmatprep.subr.mxu0 0.0
        %3688 = vmatpush1.msra.mxu0 0.0
        %3689 = vmatprep.subr.mxu0 0.0
        %3690 = vmatpush1.msra.mxu0 0.0
        %3691 = vmatprep.subr.mxu0 0.0
        %3692 = vmatpush1.msra.mxu0 0.0
        %3693 = vmatprep.subr.mxu0 0.0
        %3694 = vmatpush1.msra.mxu0 0.0
        %3695 = vmatprep.subr.mxu0 0.0
        %3696 = vmatpush1.msra.mxu0 0.0
        %3697 = vmatprep.subr.mxu0 0.0
        %3698 = vmatpush1.msra.mxu0 0.0
        %3699 = vmatprep.subr.mxu0 0.0
        %3700 = vmatpush1.msra.mxu0 0.0
        %3701 = vmatprep.subr.mxu0 0.0
        %3702 = vmatpush1.msra.mxu0 0.0
        %3703 = vmatprep.subr.mxu0 0.0
        %3704 = vmatpush1.msra.mxu0 0.0
        %3705 = vmatprep.subr.mxu0 0.0
        %3706 = vmatpush1.msra.mxu0 0.0
        %3707 = vmatprep.subr.mxu0 0.0
        %3708 = vmatpush1.msra.mxu0 0.0
        %3709 = vmatprep.subr.mxu0 0.0
        %3710 = vmatpush1.msra.mxu0 0.0
        %3711 = vmatprep.subr.mxu0 0.0
        %3712 = vmatpush1.msra.mxu0 0.0
        %3713 = vmatprep.subr.mxu0 0.0
        %3714 = vmatpush1.msra.mxu0 0.0
        %3715 = vmatprep.subr.mxu0 0.0
        %3716 = vmatpush1.msra.mxu0 0.0
        %3717 = vmatprep.subr.mxu0 0.0
        %3718 = vmatpush1.msra.mxu0 0.0
        %3719 = vmatprep.mubr.f32.mxu0 0.0
        %3720 = vmatmul.mubr.f32.gmra.mrb[0].mxu0 %v3584
        %v3721 = vpop.f32.mrb[0].mxu0
        %v3722 = vadd.f32 %v3581, %v3721
        %v3723 = vpop.f32.mrb[0].mxu0
        %3724 = vmatprep.mubr.f32.mxu0 0.0
        %3725 = vmatmul.mubr.f32.gmra.mrb[0].mxu0 %v3587
        %v3726 = vpop.f32.mrb[0].mxu0
        %v3727 = vadd.f32 %v3581, %v3726
        %v3728 = vpop.f32.mrb[0].mxu0
        %3729 = vmatprep.mubr.f32.mxu0 0.0
        %3730 = vmatmul.mubr.f32.gmra.mrb[0].mxu0 %v3590
        %v3731 = vpop.f32.mrb[0].mxu0
        %v3732 = vadd.f32 %v3581, %v3731
        %v3733 = vpop.f32.mrb[0].mxu0
        %3734 = vmatprep.mubr.f32.mxu0 0.0
        %3735 = vmatmul.mubr.f32.gmra.mrb[0].mxu0 %v3593
        %v3736 = vpop.f32.mrb[0].mxu0
        %v3737 = vadd.f32 %v3581, %v3736
        %v3738 = vpop.f32.mrb[0].mxu0
        %3739 = vmatprep.mubr.f32.mxu0 0.0
        %3740 = vmatmul.mubr.f32.gmra.mrb[0].mxu0 %v3596
        %v3741 = vpop.f32.mrb[0].mxu0
        %v3742 = vadd.f32 %v3581, %v3741
        %v3743 = vpop.f32.mrb[0].mxu0
        %3744 = vmatprep.mubr.f32.mxu0 0.0
        %3745 = vmatmul.mubr.f32.gmra.mrb[0].mxu0 %v3599
        %v3746 = vpop.f32.mrb[0].mxu0
        %v3747 = vadd.f32 %v3581, %v3746
        %v3748 = vpop.f32.mrb[0].mxu0
        %3749 = vmatprep.mubr.f32.mxu0 0.0
        %3750 = vmatmul.mubr.f32.gmra.mrb[0].mxu0 %v3602
        %v3751 = vpop.f32.mrb[0].mxu0
        %v3752 = vadd.f32 %v3581, %v3751
        %v3753 = vpop.f32.mrb[0].mxu0
        %3754 = vmatprep.mubr.f32.mxu0 0.0
        %3755 = vmatmul.mubr.f32.gmra.mrb[0].mxu0 %v3605
        %v3756 = vpop.f32.mrb[0].mxu0
        %v3757 = vadd.f32 %v3581, %v3756
        %v3758 = vpop.f32.mrb[0].mxu0
        %3759 = vmatprep.mubr.f32.mxu0 0.0
        %3760 = vmatmul.mubr.f32.gmra.mrb[0].mxu0 %v3608
        %v3761 = vpop.f32.mrb[0].mxu0
        %v3762 = vadd.f32 %v3581, %v3761
        %v3763 = vpop.f32.mrb[0].mxu0
        %3764 = vmatprep.mubr.f32.mxu0 0.0
        %3765 = vmatmul.mubr.f32.gmra.mrb[0].mxu0 %v3611
        %v3766 = vpop.f32.mrb[0].mxu0
        %v3767 = vadd.f32 %v3581, %v3766
        %v3768 = vpop.f32.mrb[0].mxu0
        %3769 = vmatprep.mubr.f32.mxu0 0.0
        %3770 = vmatmul.mubr.f32.gmra.mrb[0].mxu0 %v3614
        %v3771 = vpop.f32.mrb[0].mxu0
        %v3772 = vadd.f32 %v3581, %v3771
        %v3773 = vpop.f32.mrb[0].mxu0
        %3774 = vmatprep.mubr.f32.mxu0 0.0
        %3775 = vmatmul.mubr.f32.gmra.mrb[0].mxu0 %v3617
        %v3776 = vpop.f32.mrb[0].mxu0
        %v3777 = vadd.f32 %v3581, %v3776
        %v3778 = vpop.f32.mrb[0].mxu0
        %3779 = vmatprep.mubr.f32.mxu0 0.0
        %3780 = vmatmul.mubr.f32.gmra.mrb[0].mxu0 %v3620
        %v3781 = vpop.f32.mrb[0].mxu0
        %v3782 = vadd.f32 %v3581, %v3781
        %v3783 = vpop.f32.mrb[0].mxu0
        %3784 = vmatprep.mubr.f32.mxu0 0.0
        %3785 = vmatmul.mubr.f32.gmra.mrb[0].mxu0 %v3623
        %v3786 = vpop.f32.mrb[0].mxu0
        %v3787 = vadd.f32 %v3581, %v3786
        %v3788 = vpop.f32.mrb[0].mxu0
        %3789 = vmatprep.mubr.f32.mxu0 0.0
        %3790 = vmatmul.mubr.f32.gmra.mrb[0].mxu0 %v3626
        %v3791 = vpop.f32.mrb[0].mxu0
        %v3792 = vadd.f32 %v3581, %v3791
        %v3793 = vpop.f32.mrb[0].mxu0
        %3794 = vmatprep.mubr.f32.mxu0 0.0
        %3795 = vmatmul.mubr.f32.gmra.mrb[0].mxu0 %v3629
        %v3796 = vpop.f32.mrb[0].mxu0
        %v3797 = vadd.f32 %v3581, %v3796
        %v3798 = vpop.f32.mrb[0].mxu0
        %3799 = vmatprep.mubr.f32.mxu0 0.0
        %3800 = vmatmul.mubr.f32.gmra.mrb[0].mxu0 %v3632
        %v3801 = vpop.f32.mrb[0].mxu0
        %v3802 = vadd.f32 %v3581, %v3801
        %v3803 = vpop.f32.mrb[0].mxu0
        %3804 = vmatprep.mubr.f32.mxu0 0.0
        %3805 = vmatmul.mubr.f32.gmra.mrb[0].mxu0 %v3635
        %v3806 = vpop.f32.mrb[0].mxu0
        %v3807 = vadd.f32 %v3581, %v3806
        %v3808 = vpop.f32.mrb[0].mxu0
        %3809 = vmatprep.mubr.f32.mxu0 0.0
        %3810 = vmatmul.mubr.f32.gmra.mrb[0].mxu0 %v3638
        %v3811 = vpop.f32.mrb[0].mxu0
        %v3812 = vadd.f32 %v3581, %v3811
        %v3813 = vpop.f32.mrb[0].mxu0
        %3814 = vmatprep.mubr.f32.mxu0 0.0
        %3815 = vmatmul.mubr.f32.gmra.mrb[0].mxu0 %v3641
        %v3816 = vpop.f32.mrb[0].mxu0
        %v3817 = vadd.f32 %v3581, %v3816
        %v3818 = vpop.f32.mrb[0].mxu0
        %3819 = vmatprep.mubr.f32.mxu0 0.0
        %3820 = vmatmul.mubr.f32.gmra.mrb[0].mxu0 %v3644
        %v3821 = vpop.f32.mrb[0].mxu0
        %v3822 = vadd.f32 %v3581, %v3821
        %v3823 = vpop.f32.mrb[0].mxu0
        %3824 = vmatprep.mubr.f32.mxu0 0.0
        %3825 = vmatmul.mubr.f32.gmra.mrb[0].mxu0 %v3647
        %v3826 = vpop.f32.mrb[0].mxu0
        %v3827 = vadd.f32 %v3581, %v3826
        %v3828 = vpop.f32.mrb[0].mxu0
        %3829 = vmatprep.mubr.f32.mxu0 0.0
        %3830 = vmatmul.mubr.f32.gmra.mrb[0].mxu0 %v3650
        %v3831 = vpop.f32.mrb[0].mxu0
        %v3832 = vadd.f32 %v3581, %v3831
        %v3833 = vpop.f32.mrb[0].mxu0
        %3834 = vmatprep.mubr.f32.mxu0 0.0
        %3835 = vmatmul.mubr.f32.gmra.mrb[0].mxu0 %v3653
        %v3836 = vpop.f32.mrb[0].mxu0
        %v3837 = vadd.f32 %v3581, %v3836
        %v3838 = vpop.f32.mrb[0].mxu0
        %3839 = vdwg.mxu0
        %v3840 = vmax.f32 %v3722, 0.0
        %v3841 = vmax.f32 %v3727, 0.0
        %v3842 = vmax.f32 %v3732, 0.0
        %v3843 = vmax.f32 %v3737, 0.0
        %v3844 = vmax.f32 %v3742, 0.0
        %v3845 = vmax.f32 %v3747, 0.0
        %v3846 = vmax.f32 %v3752, 0.0
        %v3847 = vmax.f32 %v3757, 0.0
        %v3848 = vmax.f32 %v3762, 0.0
        %v3849 = vmax.f32 %v3767, 0.0
        %v3850 = vmax.f32 %v3772, 0.0
        %v3851 = vmax.f32 %v3777, 0.0
        %v3852 = vmax.f32 %v3782, 0.0
        %v3853 = vmax.f32 %v3787, 0.0
        %v3854 = vmax.f32 %v3792, 0.0
        %v3855 = vmax.f32 %v3797, 0.0
        %v3856 = vmax.f32 %v3802, 0.0
        %v3857 = vmax.f32 %v3807, 0.0
        %v3858 = vmax.f32 %v3812, 0.0
        %v3859 = vmax.f32 %v3817, 0.0
        %v3860 = vmax.f32 %v3822, 0.0
        %v3861 = vmax.f32 %v3827, 0.0
        %v3862 = vmax.f32 %v3832, 0.0
        %v3863 = vmax.f32 %v3837, 0.0
        %v3864 = vsel %vm650, %v3840, 0.0
        %v3865 = vrot.slane %v3864, 4
        %v3866 = vadd.f32 %v3864, %v3865
        %v3867 = vrot.slane %v3866, 2
        %v3868 = vadd.f32 %v3866, %v3867
        %v3869 = vrot.slane %v3868, 1
        %v3870 = vadd.f32 %v3868, %v3869
        %v3871 = vsel %vm650, %v3843, 0.0
        %v3872 = vrot.slane %v3871, 4
        %v3873 = vadd.f32 %v3871, %v3872
        %v3874 = vrot.slane %v3873, 2
        %v3875 = vadd.f32 %v3873, %v3874
        %v3876 = vrot.slane %v3875, 1
        %v3877 = vadd.f32 %v3875, %v3876
        %v3878 = vsel %vm650, %v3846, 0.0
        %v3879 = vrot.slane %v3878, 4
        %v3880 = vadd.f32 %v3878, %v3879
        %v3881 = vrot.slane %v3880, 2
        %v3882 = vadd.f32 %v3880, %v3881
        %v3883 = vrot.slane %v3882, 1
        %v3884 = vadd.f32 %v3882, %v3883
        %v3885 = vsel %vm650, %v3849, 0.0
        %v3886 = vrot.slane %v3885, 4
        %v3887 = vadd.f32 %v3885, %v3886
        %v3888 = vrot.slane %v3887, 2
        %v3889 = vadd.f32 %v3887, %v3888
        %v3890 = vrot.slane %v3889, 1
        %v3891 = vadd.f32 %v3889, %v3890
        %v3892 = vsel %vm650, %v3852, 0.0
        %v3893 = vrot.slane %v3892, 4
        %v3894 = vadd.f32 %v3892, %v3893
        %v3895 = vrot.slane %v3894, 2
        %v3896 = vadd.f32 %v3894, %v3895
        %v3897 = vrot.slane %v3896, 1
        %v3898 = vadd.f32 %v3896, %v3897
        %v3899 = vsel %vm650, %v3855, 0.0
        %v3900 = vrot.slane %v3899, 4
        %v3901 = vadd.f32 %v3899, %v3900
        %v3902 = vrot.slane %v3901, 2
        %v3903 = vadd.f32 %v3901, %v3902
        %v3904 = vrot.slane %v3903, 1
        %v3905 = vadd.f32 %v3903, %v3904
        %v3906 = vsel %vm650, %v3858, 0.0
        %v3907 = vrot.slane %v3906, 4
        %v3908 = vadd.f32 %v3906, %v3907
        %v3909 = vrot.slane %v3908, 2
        %v3910 = vadd.f32 %v3908, %v3909
        %v3911 = vrot.slane %v3910, 1
        %v3912 = vadd.f32 %v3910, %v3911
        %v3913 = vsel %vm650, %v3861, 0.0
        %v3914 = vrot.slane %v3913, 4
        %v3915 = vadd.f32 %v3913, %v3914
        %v3916 = vrot.slane %v3915, 2
        %v3917 = vadd.f32 %v3915, %v3916
        %v3918 = vrot.slane %v3917, 1
        %v3919 = vadd.f32 %v3917, %v3918
        %v3920 = vsel %vm650, %v3841, 0.0
        %v3921 = vsel %vm650, %v3842, 0.0
        %v3922 = vadd.f32 %v3920, %v3921
        %v3923 = vrot.slane %v3922, 4
        %v3924 = vadd.f32 %v3922, %v3923
        %v3925 = vrot.slane %v3924, 2
        %v3926 = vadd.f32 %v3924, %v3925
        %v3927 = vrot.slane %v3926, 1
        %v3928 = vadd.f32 %v3926, %v3927
        %v3929 = vsel %vm650, %v3844, 0.0
        %v3930 = vsel %vm650, %v3845, 0.0
        %v3931 = vadd.f32 %v3929, %v3930
        %v3932 = vrot.slane %v3931, 4
        %v3933 = vadd.f32 %v3931, %v3932
        %v3934 = vrot.slane %v3933, 2
        %v3935 = vadd.f32 %v3933, %v3934
        %v3936 = vrot.slane %v3935, 1
        %v3937 = vadd.f32 %v3935, %v3936
        %v3938 = vsel %vm650, %v3847, 0.0
        %v3939 = vsel %vm650, %v3848, 0.0
        %v3940 = vadd.f32 %v3938, %v3939
        %v3941 = vrot.slane %v3940, 4
        %v3942 = vadd.f32 %v3940, %v3941
        %v3943 = vrot.slane %v3942, 2
        %v3944 = vadd.f32 %v3942, %v3943
        %v3945 = vrot.slane %v3944, 1
        %v3946 = vadd.f32 %v3944, %v3945
        %v3947 = vsel %vm650, %v3850, 0.0
        %v3948 = vsel %vm650, %v3851, 0.0
        %v3949 = vadd.f32 %v3947, %v3948
        %v3950 = vrot.slane %v3949, 4
        %v3951 = vadd.f32 %v3949, %v3950
        %v3952 = vrot.slane %v3951, 2
        %v3953 = vadd.f32 %v3951, %v3952
        %v3954 = vrot.slane %v3953, 1
        %v3955 = vadd.f32 %v3953, %v3954
        %v3956 = vsel %vm650, %v3853, 0.0
        %v3957 = vsel %vm650, %v3854, 0.0
        %v3958 = vadd.f32 %v3956, %v3957
        %v3959 = vrot.slane %v3958, 4
        %v3960 = vadd.f32 %v3958, %v3959
        %v3961 = vrot.slane %v3960, 2
        %v3962 = vadd.f32 %v3960, %v3961
        %v3963 = vrot.slane %v3962, 1
        %v3964 = vadd.f32 %v3962, %v3963
        %v3965 = vsel %vm650, %v3856, 0.0
        %v3966 = vsel %vm650, %v3857, 0.0
        %v3967 = vadd.f32 %v3965, %v3966
        %v3968 = vrot.slane %v3967, 4
        %v3969 = vadd.f32 %v3967, %v3968
        %v3970 = vrot.slane %v3969, 2
        %v3971 = vadd.f32 %v3969, %v3970
        %v3972 = vrot.slane %v3971, 1
        %v3973 = vadd.f32 %v3971, %v3972
        %v3974 = vsel %vm650, %v3859, 0.0
        %v3975 = vsel %vm650, %v3860, 0.0
        %v3976 = vadd.f32 %v3974, %v3975
        %v3977 = vrot.slane %v3976, 4
        %v3978 = vadd.f32 %v3976, %v3977
        %v3979 = vrot.slane %v3978, 2
        %v3980 = vadd.f32 %v3978, %v3979
        %v3981 = vrot.slane %v3980, 1
        %v3982 = vadd.f32 %v3980, %v3981
        %v3983 = vsel %vm650, %v3862, 0.0
        %v3984 = vsel %vm650, %v3863, 0.0
        %v3985 = vadd.f32 %v3983, %v3984
        %v3986 = vrot.slane %v3985, 4
        %v3987 = vadd.f32 %v3985, %v3986
        %v3988 = vrot.slane %v3987, 2
        %v3989 = vadd.f32 %v3987, %v3988
        %v3990 = vrot.slane %v3989, 1
        %v3991 = vadd.f32 %v3989, %v3990
        %v3992 = vld [vmem:[%s9] sm:$0xff]
        %v3993 = vld [vmem:[%s9 + $0x8] sm:$0xff]
        %v3994 = vld [vmem:[%s9 + $0x10] sm:$0xff]
        %v3995 = vld [vmem:[%s9 + $0x18] sm:$0xff]
        %v3996 = vld [vmem:[#allocation14] sm:$0xff]
        %v3997 = vld [vmem:[#allocation14 + $0x8] sm:$0xff]
        %v3998 = vld [vmem:[#allocation14 + $0x10] sm:$0xff]
        %v3999 = vld [vmem:[#allocation14 + $0x18] sm:$0xff]
        %vm4008 = vcmask 1041409
        %v4009 = vsel %vm4008, %v3937, %v3928
        %vm4010 = vcmask 1042434
        %v4011 = vsel %vm4010, %v3946, %v4009
        %vm4012 = vcmask 1043459
        %v4013 = vsel %vm4012, %v3955, %v4011
        %vm4014 = vcmask 1044484
        %v4015 = vsel %vm4014, %v3964, %v4013
        %vm4016 = vcmask 1045509
        %v4017 = vsel %vm4016, %v3973, %v4015
        %vm4018 = vcmask 1046534
        %v4019 = vsel %vm4018, %v3982, %v4017
        %vm4020 = vcmask 1047559
        %v4021 = vsel %vm4020, %v3991, %v4019
        %v4022 = vsel %vm650, %v4021, 0
        %4024 = vmatprep.subr.mxu0 0.0
        %4025 = vmatpush1.msra.mxu0 %v3996
        %4026 = vmatprep.subr.mxu0 0.0
        %4027 = vmatpush1.msra.mxu0 %v3997
        %4028 = vmatprep.subr.mxu0 0.0
        %4029 = vmatpush1.msra.mxu0 %v3998
        %4030 = vmatprep.subr.mxu0 0.0
        %4031 = vmatpush1.msra.mxu0 %v3999
        %4032 = vmatprep.subr.mxu0 0.0
        %4033 = vmatpush1.msra.mxu0 0.0
        %4034 = vmatprep.subr.mxu0 0.0
        %4035 = vmatpush1.msra.mxu0 0.0
        %4036 = vmatprep.subr.mxu0 0.0
        %4037 = vmatpush1.msra.mxu0 0.0
        %4038 = vmatprep.subr.mxu0 0.0
        %4039 = vmatpush1.msra.mxu0 0.0
        %4040 = vmatprep.subr.mxu0 0.0
        %4041 = vmatpush1.msra.mxu0 0.0
        %4042 = vmatprep.subr.mxu0 0.0
        %4043 = vmatpush1.msra.mxu0 0.0
        %4044 = vmatprep.subr.mxu0 0.0
        %4045 = vmatpush1.msra.mxu0 0.0
        %4046 = vmatprep.subr.mxu0 0.0
        %4047 = vmatpush1.msra.mxu0 0.0
        %4048 = vmatprep.subr.mxu0 0.0
        %4049 = vmatpush1.msra.mxu0 0.0
        %4050 = vmatprep.subr.mxu0 0.0
        %4051 = vmatpush1.msra.mxu0 0.0
        %4052 = vmatprep.subr.mxu0 0.0
        %4053 = vmatpush1.msra.mxu0 0.0
        %4054 = vmatprep.subr.mxu0 0.0
        %4055 = vmatpush1.msra.mxu0 0.0
        %4056 = vmatprep.subr.mxu0 0.0
        %4057 = vmatpush1.msra.mxu0 0.0
        %4058 = vmatprep.subr.mxu0 0.0
        %4059 = vmatpush1.msra.mxu0 0.0
        %4060 = vmatprep.subr.mxu0 0.0
        %4061 = vmatpush1.msra.mxu0 0.0
        %4062 = vmatprep.subr.mxu0 0.0
        %4063 = vmatpush1.msra.mxu0 0.0
        %4064 = vmatprep.subr.mxu0 0.0
        %4065 = vmatpush1.msra.mxu0 0.0
        %4066 = vmatprep.subr.mxu0 0.0
        %4067 = vmatpush1.msra.mxu0 0.0
        %4068 = vmatprep.subr.mxu0 0.0
        %4069 = vmatpush1.msra.mxu0 0.0
        %4070 = vmatprep.subr.mxu0 0.0
        %4071 = vmatpush1.msra.mxu0 0.0
        %4072 = vmatprep.subr.mxu0 0.0
        %4073 = vmatpush1.msra.mxu0 0.0
        %4074 = vmatprep.subr.mxu0 0.0
        %4075 = vmatpush1.msra.mxu0 0.0
        %4076 = vmatprep.subr.mxu0 0.0
        %4077 = vmatpush1.msra.mxu0 0.0
        %4078 = vmatprep.subr.mxu0 0.0
        %4079 = vmatpush1.msra.mxu0 0.0
        %4080 = vmatprep.subr.mxu0 0.0
        %4081 = vmatpush1.msra.mxu0 0.0
        %4082 = vmatprep.subr.mxu0 0.0
        %4083 = vmatpush1.msra.mxu0 0.0
        %4084 = vmatprep.subr.mxu0 0.0
        %4085 = vmatpush1.msra.mxu0 0.0
        %4086 = vmatprep.subr.mxu0 0.0
        %4087 = vmatpush1.msra.mxu0 0.0
        %4088 = vmatprep.mubr.f32.mxu0 0.0
        %4089 = vmatmul.mubr.f32.gmra.mrb[0].mxu0 %v4022
        %v4090 = vpop.f32.mrb[0].mxu0
        %v4091 = vadd.f32 0.0, %v4090
        %v4092 = vpop.f32.mrb[0].mxu0
        %4093 = vdwg.mxu0
        %v4102 = vsel %vm4008, %v3877, %v3870
        %v4103 = vsel %vm4010, %v3884, %v4102
        %v4104 = vsel %vm4012, %v3891, %v4103
        %v4105 = vsel %vm4014, %v3898, %v4104
        %v4106 = vsel %vm4016, %v3905, %v4105
        %v4107 = vsel %vm4018, %v3912, %v4106
        %v4108 = vsel %vm4020, %v3919, %v4107
        %v4109 = vsel %vm650, %v4108, 0
        %4111 = vmatprep.subr.mxu0 0.0
        %4112 = vmatpush1.msra.mxu0 %v3992
        %4113 = vmatprep.subr.mxu0 0.0
        %4114 = vmatpush1.msra.mxu0 %v3993
        %4115 = vmatprep.subr.mxu0 0.0
        %4116 = vmatpush1.msra.mxu0 %v3994
        %4117 = vmatprep.subr.mxu0 0.0
        %4118 = vmatpush1.msra.mxu0 %v3995
        %4119 = vmatprep.subr.mxu0 0.0
        %4120 = vmatpush1.msra.mxu0 0.0
        %4121 = vmatprep.subr.mxu0 0.0
        %4122 = vmatpush1.msra.mxu0 0.0
        %4123 = vmatprep.subr.mxu0 0.0
        %4124 = vmatpush1.msra.mxu0 0.0
        %4125 = vmatprep.subr.mxu0 0.0
        %4126 = vmatpush1.msra.mxu0 0.0
        %4127 = vmatprep.subr.mxu0 0.0
        %4128 = vmatpush1.msra.mxu0 0.0
        %4129 = vmatprep.subr.mxu0 0.0
        %4130 = vmatpush1.msra.mxu0 0.0
        %4131 = vmatprep.subr.mxu0 0.0
        %4132 = vmatpush1.msra.mxu0 0.0
        %4133 = vmatprep.subr.mxu0 0.0
        %4134 = vmatpush1.msra.mxu0 0.0
        %4135 = vmatprep.subr.mxu0 0.0
        %4136 = vmatpush1.msra.mxu0 0.0
        %4137 = vmatprep.subr.mxu0 0.0
        %4138 = vmatpush1.msra.mxu0 0.0
        %4139 = vmatprep.subr.mxu0 0.0
        %4140 = vmatpush1.msra.mxu0 0.0
        %4141 = vmatprep.subr.mxu0 0.0
        %4142 = vmatpush1.msra.mxu0 0.0
        %4143 = vmatprep.subr.mxu0 0.0
        %4144 = vmatpush1.msra.mxu0 0.0
        %4145 = vmatprep.subr.mxu0 0.0
        %4146 = vmatpush1.msra.mxu0 0.0
        %4147 = vmatprep.subr.mxu0 0.0
        %4148 = vmatpush1.msra.mxu0 0.0
        %4149 = vmatprep.subr.mxu0 0.0
        %4150 = vmatpush1.msra.mxu0 0.0
        %4151 = vmatprep.subr.mxu0 0.0
        %4152 = vmatpush1.msra.mxu0 0.0
        %4153 = vmatprep.subr.mxu0 0.0
        %4154 = vmatpush1.msra.mxu0 0.0
        %4155 = vmatprep.subr.mxu0 0.0
        %4156 = vmatpush1.msra.mxu0 0.0
        %4157 = vmatprep.subr.mxu0 0.0
        %4158 = vmatpush1.msra.mxu0 0.0
        %4159 = vmatprep.subr.mxu0 0.0
        %4160 = vmatpush1.msra.mxu0 0.0
        %4161 = vmatprep.subr.mxu0 0.0
        %4162 = vmatpush1.msra.mxu0 0.0
        %4163 = vmatprep.subr.mxu0 0.0
        %4164 = vmatpush1.msra.mxu0 0.0
        %4165 = vmatprep.subr.mxu0 0.0
        %4166 = vmatpush1.msra.mxu0 0.0
        %4167 = vmatprep.subr.mxu0 0.0
        %4168 = vmatpush1.msra.mxu0 0.0
        %4169 = vmatprep.subr.mxu0 0.0
        %4170 = vmatpush1.msra.mxu0 0.0
        %4171 = vmatprep.subr.mxu0 0.0
        %4172 = vmatpush1.msra.mxu0 0.0
        %4173 = vmatprep.subr.mxu0 0.0
        %4174 = vmatpush1.msra.mxu0 0.0
        %4175 = vmatprep.mubr.f32.mxu0 0.0
        %4176 = vmatmul.mubr.f32.gmra.mrb[0].mxu0 %v4109
        %v4177 = vpop.f32.mrb[0].mxu0
        %v4178 = vadd.f32 %v4091, %v4177
        %v4179 = vpop.f32.mrb[0].mxu0
        %4180 = vdwg.mxu0
        %v4181 = vld [vmem:[%s11] sm:$0x1]
        %v4183 = vlaneseq
        %v4184 = vshrl.u32 %v4183, 7
        %v4185 = vsub.s32 0, %v4184
        %v4186 = vrot.slane %v4181, %v4185
        %v4188 = vadd.f32 %v4178, %v4186
        %v4189 = vmax.f32 %v4188, 0.0
        %v4190 = vld [vmem:[#allocation16] sm:$0xff]
        %v4191 = vld [vmem:[#allocation16 + $0x8] sm:$0xff]
        %v4192 = vld [vmem:[#allocation16 + $0x10] sm:$0xff]
        %v4193 = vld [vmem:[#allocation16 + $0x18] sm:$0xff]
        %v4194 = vld [vmem:[%s13] sm:$0x1]
        %v4196 = vlaneseq
        %v4197 = vshrl.u32 %v4196, 7
        %v4198 = vsub.s32 0, %v4197
        %v4199 = vrot.slane %v4194, %v4198
        %v4202 = vsel %vm650, %v4189, 0
        %4204 = vmatprep.subr.mxu0 0.0
        %4205 = vmatpush1.msra.mxu0 %v4190
        %4206 = vmatprep.subr.mxu0 0.0
        %4207 = vmatpush1.msra.mxu0 %v4191
        %4208 = vmatprep.subr.mxu0 0.0
        %4209 = vmatpush1.msra.mxu0 %v4192
        %4210 = vmatprep.subr.mxu0 0.0
        %4211 = vmatpush1.msra.mxu0 %v4193
        %4212 = vmatprep.subr.mxu0 0.0
        %4213 = vmatpush1.msra.mxu0 0.0
        %4214 = vmatprep.subr.mxu0 0.0
        %4215 = vmatpush1.msra.mxu0 0.0
        %4216 = vmatprep.subr.mxu0 0.0
        %4217 = vmatpush1.msra.mxu0 0.0
        %4218 = vmatprep.subr.mxu0 0.0
        %4219 = vmatpush1.msra.mxu0 0.0
        %4220 = vmatprep.subr.mxu0 0.0
        %4221 = vmatpush1.msra.mxu0 0.0
        %4222 = vmatprep.subr.mxu0 0.0
        %4223 = vmatpush1.msra.mxu0 0.0
        %4224 = vmatprep.subr.mxu0 0.0
        %4225 = vmatpush1.msra.mxu0 0.0
        %4226 = vmatprep.subr.mxu0 0.0
        %4227 = vmatpush1.msra.mxu0 0.0
        %4228 = vmatprep.subr.mxu0 0.0
        %4229 = vmatpush1.msra.mxu0 0.0
        %4230 = vmatprep.subr.mxu0 0.0
        %4231 = vmatpush1.msra.mxu0 0.0
        %4232 = vmatprep.subr.mxu0 0.0
        %4233 = vmatpush1.msra.mxu0 0.0
        %4234 = vmatprep.subr.mxu0 0.0
        %4235 = vmatpush1.msra.mxu0 0.0
        %4236 = vmatprep.subr.mxu0 0.0
        %4237 = vmatpush1.msra.mxu0 0.0
        %4238 = vmatprep.subr.mxu0 0.0
        %4239 = vmatpush1.msra.mxu0 0.0
        %4240 = vmatprep.subr.mxu0 0.0
        %4241 = vmatpush1.msra.mxu0 0.0
        %4242 = vmatprep.subr.mxu0 0.0
        %4243 = vmatpush1.msra.mxu0 0.0
        %4244 = vmatprep.subr.mxu0 0.0
        %4245 = vmatpush1.msra.mxu0 0.0
        %4246 = vmatprep.subr.mxu0 0.0
        %4247 = vmatpush1.msra.mxu0 0.0
        %4248 = vmatprep.subr.mxu0 0.0
        %4249 = vmatpush1.msra.mxu0 0.0
        %4250 = vmatprep.subr.mxu0 0.0
        %4251 = vmatpush1.msra.mxu0 0.0
        %4252 = vmatprep.subr.mxu0 0.0
        %4253 = vmatpush1.msra.mxu0 0.0
        %4254 = vmatprep.subr.mxu0 0.0
        %4255 = vmatpush1.msra.mxu0 0.0
        %4256 = vmatprep.subr.mxu0 0.0
        %4257 = vmatpush1.msra.mxu0 0.0
        %4258 = vmatprep.subr.mxu0 0.0
        %4259 = vmatpush1.msra.mxu0 0.0
        %4260 = vmatprep.subr.mxu0 0.0
        %4261 = vmatpush1.msra.mxu0 0.0
        %4262 = vmatprep.subr.mxu0 0.0
        %4263 = vmatpush1.msra.mxu0 0.0
        %4264 = vmatprep.subr.mxu0 0.0
        %4265 = vmatpush1.msra.mxu0 0.0
        %4266 = vmatprep.subr.mxu0 0.0
        %4267 = vmatpush1.msra.mxu0 0.0
        %4268 = vmatprep.mubr.f32.mxu0 0.0
        %4269 = vmatmul.mubr.f32.gmra.mrb[0].mxu0 %v4202
        %v4270 = vpop.f32.mrb[0].mxu0
        %v4271 = vadd.f32 %v4199, %v4270
        %v4272 = vpop.f32.mrb[0].mxu0
        %4273 = vdwg.mxu0
        %v4274 = vmax.f32 %v4271, 0.0
        %4275 = vst.msk [vmem:[%s623] sm:$0xff] %vm650, %v4274
        %s4276 = sand.u32 %s349, 1
        %s4277 = scalar_lea.sflag [#allocation4], %s4276
        %s4278 = sand.u32 %s349, 1
        %s4279 = smul.addr %s4278, 8
        %s4280 = scalar_lea.vmem [#allocation17], %s4279
        // Predicated region
        $region113: #{tpu_custom_call.1} parent=75 // pred_check
          %p4281 = pneg %p359
        $region114: #{tpu_custom_call.1} parent=75 // pred_check_branch
          %4283 = sbr.rel (%p4281) target = $region116
        $region115: #{tpu_custom_call.1} parent=75 // pred_region
          %s4285 = ssub.s32 128, 128
          %4286 = vsyncadd %s4277, %s4285
          %s4287 = smul.addr %s37, 128
          %s4288 = scalar_lea.hbm %s14, %s4287
          %s4290 = sshll.u32 %s4280, 4
          %s4291 = int_to_ptr.vmem [resolvable:$true] %s4290
          %4293 = dma.vmem_to_hbm [thread:$0]  %s4291, 128, %s4288, %s4277
        $region116: #{tpu_custom_call.1} parent=75 // pred_fallthru
          _
      $region76: #{tpu_custom_call.1} parent=5 // pred_fallthru
        _
      %p4294 = scmp.le.s32.totalorder 2, %s32
      // Predicated region
      $region117: #{tpu_custom_call.1} parent=5 // pred_check
        %p4295 = pneg %p4294
      $region118: #{tpu_custom_call.1} parent=5 // pred_check_branch
        %4297 = sbr.rel (%p4295) target = $region120
      $region119: #{tpu_custom_call.1} parent=5 // pred_region
        %s4298 = ssub.s32 %s32, 2
        // Predicated region
        $region121: #{tpu_custom_call.1} parent=119 // pred_check
          %p4299 = pneg %p365
        $region122: #{tpu_custom_call.1} parent=119 // pred_check_branch
          %4301 = sbr.rel (%p4299) target = $region124
        $region123: #{tpu_custom_call.1} parent=119 // pred_region
          %s4302 = sand.u32 %s350, 1
          %s4303 = scalar_lea.sflag [#allocation4], %s4302
          %s4304 = sand.u32 %s350, 1
          %s4305 = smul.addr %s4304, 8
          %s4306 = scalar_lea.vmem [#allocation17], %s4305
          %4307 = dma.done %s4303, 128
        $region124: #{tpu_custom_call.1} parent=119 // pred_fallthru
          _
      $region120: #{tpu_custom_call.1} parent=5 // pred_fallthru
        _
    $region6: #{tpu_custom_call.1} parent=1 // loop_footer
      %s36 = sadd.s32 1, %s32
    $region7: #{tpu_custom_call.1} parent=1 // loop_footer_branch
      %31 = sbr.rel target = $region3
    $region8: #{tpu_custom_call.1} parent=1 // loop_exit
      _
    %4308 = vsyncpa [#allocation3], 1
    %s4309 = scalar_lea.sflag [#allocation3], 1
    %4310 = vsyncpa %s4309, 1
    %4311 = vsyncpa [#allocation6], 1
    %s4312 = scalar_lea.sflag [#allocation6], 1
    %4313 = vsyncpa %s4312, 1
    %4314 = vsyncpa [#allocation9], 1
    %4315 = vsyncpa [#allocation12], 1
    %4316 = vsyncpa [#allocation15], 1
    %4317 = vsyncpa [#allocation4], 1
    %s4318 = scalar_lea.sflag [#allocation4], 1
    %4319 = vsyncpa %s4318, 1

</llo_original>
